<compile_context>
chip_gen: v7x
topology: tpu7x:2x2x1
jax: 0.10.0
libtpu: 0.0.40
codegen_flags: <defaults>
</compile_context>

<pallas_src>
import math
import functools

import jax
import jax.numpy as jnp
from jax.experimental import pallas as pl
from jax.experimental.pallas import tpu as pltpu

# ----------------------- small, self-consistent config -----------------------
BATCH = 2
NUM_CHANNELS = 4
IMG_SIZE = 16            # == config.resize (image actually fed to forward)
PATCH_SIZE = 8
EMBED_DIM = 32
MLP_SIZE = 64
NUM_HEADS = 4
NUM_LAYERS = 2
NUM_CLASSES = 10
HEAD_DIM = EMBED_DIM // NUM_HEADS
NUM_PATCHES = (IMG_SIZE // PATCH_SIZE) ** 2
SEQ_LEN = NUM_PATCHES + 1
LN_EPS = 1e-5


# ------------------------------ in-kernel math --------------------------------
def _erf(x):
    # Abramowitz & Stegun 7.1.26 rational approximation (max abs err ~1.5e-7).
    # Only exp/abs/mul/add, so it lowers on Mosaic and matches PyTorch's
    # exact-erf GELU to ~f32 precision.
    a1, a2, a3, a4, a5 = 0.254829592, -0.284496736, 1.421413741, -1.453152027, 1.061405429
    p = 0.3275911
    s = jnp.where(x >= 0.0, 1.0, -1.0)
    ax = jnp.abs(x)
    t = 1.0 / (1.0 + p * ax)
    poly = ((((a5 * t + a4) * t + a3) * t + a2) * t + a1) * t
    return s * (1.0 - poly * jnp.exp(-ax * ax))


def _gelu(x):
    return 0.5 * x * (1.0 + _erf(x * 0.7071067811865476))


def _layer_norm(x, w, b):
    mu = jnp.mean(x, axis=-1, keepdims=True)
    c = x - mu
    var = jnp.mean(c * c, axis=-1, keepdims=True)
    return c * jax.lax.rsqrt(var + LN_EPS) * w + b


# ------------------------------ the fused kernel -------------------------------
def _vit_kernel(patches_ref, pw_ref, tab_ref, qkvw_ref, qkvb_ref, outw_ref,
                evec_ref, m1w_ref, m1b_ref, m2w_ref, hln_ref, hwb_ref,
                logits_ref, *, num_heads, num_layers):
    f32 = jnp.float32
    S = patches_ref.shape[1]
    E = pw_ref.shape[1]
    H = num_heads
    HD = E // H
    scale = 1.0 / math.sqrt(HD)

    # --- PatchEmbedding (stride==kernel Conv2d == flatten + matmul) + table ---
    # patches row 0 is zero (cls slot); table row 0 = class_token + pos[0],
    # rows 1.. = conv bias + pos[i].  Embedding dropout is identity in eval.
    h = jnp.dot(patches_ref[0], pw_ref[...],
                preferred_element_type=f32) + tab_ref[...]            # (S, E)

    # --- transformer encoder layers (norm_first=True), unrolled over L --------
    for l in range(num_layers):
        ev = evec_ref[l]                                   # (6, E) packed vectors
        ln1w, ln1b = ev[0:1], ev[1:2]
        outb = ev[2:3]
        ln2w, ln2b = ev[3:4], ev[4:5]
        lin2b = ev[5:6]

        # ----- pre-norm multi-head self-attention, batched over all heads -----
        xn = _layer_norm(h, ln1w, ln1b)                    # (S, E)
        xr = jnp.broadcast_to(xn[None], (H, S, E))         # head-batched view

        q = jnp.einsum('hse,hed->hsd', xr, qkvw_ref[3 * l + 0],
                       preferred_element_type=f32) + qkvb_ref[3 * l + 0]
        k = jnp.einsum('hse,hed->hsd', xr, qkvw_ref[3 * l + 1],
                       preferred_element_type=f32) + qkvb_ref[3 * l + 1]
        v = jnp.einsum('hse,hed->hsd', xr, qkvw_ref[3 * l + 2],
                       preferred_element_type=f32) + qkvb_ref[3 * l + 2]

        s = jnp.einsum('hqd,hkd->hqk', q, k,
                       preferred_element_type=f32) * scale             # (H,S,S)
        s = s - jnp.max(s, axis=-1, keepdims=True)
        p = jnp.exp(s)
        p = p * pl.reciprocal(jnp.sum(p, axis=-1, keepdims=True), approx=True)

        o = jnp.einsum('hqk,hkd->hqd', p, v,
                       preferred_element_type=f32)                     # (H,S,HD)
        # out_proj(concat(heads)) == sum_h head_h @ W_out[h-rows]
        part = jnp.einsum('hsd,hde->hse', o, outw_ref[l],
                          preferred_element_type=f32)                  # (H,S,E)
        attn = part[0]
        for hh in range(1, H):
            attn = attn + part[hh]
        h = h + attn + outb

        # ----- pre-norm MLP with exact-erf GELU --------------------------------
        xn = _layer_norm(h, ln2w, ln2b)
        ff = jnp.dot(xn, m1w_ref[l], preferred_element_type=f32) + m1b_ref[l]
        ff = _gelu(ff)
        ff = jnp.dot(ff, m2w_ref[l], preferred_element_type=f32) + lin2b
        h = h + ff
    # nn.TransformerEncoder(norm=None): no final norm over the stack.

    # --- mlp_head on the class token: LayerNorm -> Linear ----------------------
    cls_n = _layer_norm(h[0:1, :], hln_ref[0:1, :], hln_ref[1:2, :])   # (1, E)
    logits = jnp.dot(cls_n, hwb_ref[0:E, :],
                     preferred_element_type=f32) + hwb_ref[E:E + 1, :]  # (1, C)
    logits_ref[0] = logits


# ------------------------------ parameter init --------------------------------
def init_params(key):
    ks = iter(jax.random.split(key, 24))

    def nrm(shape, scale=0.02):
        return scale * jax.random.normal(next(ks), shape, dtype=jnp.float32)

    L, E, M, C = NUM_LAYERS, EMBED_DIM, MLP_SIZE, NUM_CLASSES
    CPP = NUM_CHANNELS * PATCH_SIZE * PATCH_SIZE
    return {
        # Conv2d weight (E, C, p, p) stored pre-flattened/transposed as (CPP, E)
        "patch_w": nrm((CPP, E)),
        "patch_b": nrm((E,)),
        "class_token": nrm((1, E), 1.0),          # torch.randn
        "pos_emb": nrm((SEQ_LEN, E), 1.0),        # torch.randn
        "ln1_w": 1.0 + nrm((L, E)),
        "ln1_b": nrm((L, E)),
        # in_proj weight stored as (E, 3E): columns ordered [q | k | v]
        "in_proj_w": nrm((L, E, 3 * E)),
        "in_proj_b": nrm((L, 3 * E)),
        "out_proj_w": nrm((L, E, E)),
        "out_proj_b": nrm((L, E)),
        "ln2_w": 1.0 + nrm((L, E)),
        "ln2_b": nrm((L, E)),
        "lin1_w": nrm((L, E, M)),
        "lin1_b": nrm((L, M)),
        "lin2_w": nrm((L, M, E)),
        "lin2_b": nrm((L, E)),
        "head_ln_w": 1.0 + nrm((E,)),
        "head_ln_b": nrm((E,)),
        "head_w": nrm((E, C)),
        "head_b": nrm((C,)),
    }


# ------------------- host-side operand packing / re-layout ---------------------
def _pack_operands(params, patches):
    """Pack 21 natural params into 12 kernel operands with MXU-friendly layouts."""
    B, NP, CPP = patches.shape
    L, E, M, H, HD = NUM_LAYERS, EMBED_DIM, MLP_SIZE, NUM_HEADS, HEAD_DIM

    # zero row 0 per image = cls-token slot; additive table supplies cls/pos/bias
    patches_pad = jnp.pad(patches, ((0, 0), (1, 0), (0, 0)))           # (B, S, CPP)
    table = params["pos_emb"] + jnp.concatenate(
        [params["class_token"],
         jnp.broadcast_to(params["patch_b"][None, :], (NP, E))], axis=0)   # (S, E)

    # attention weights, head-major: q/k/v stacked on the leading axis
    ipw = params["in_proj_w"].reshape(L, E, 3, H, HD)
    qkvw = ipw.transpose(0, 2, 3, 1, 4).reshape(L * 3, H, E, HD)       # (3L,H,E,HD)
    qkvb = params["in_proj_b"].reshape(L * 3, H, 1, HD)                # (3L,H,1,HD)
    outw = params["out_proj_w"].reshape(L, H, HD, E)                   # (L,H,HD,E)

    # all per-layer (1,E)-type vectors in one tensor (fewer prologue DMAs)
    evec = jnp.stack([params["ln1_w"], params["ln1_b"], params["out_proj_b"],
                      params["ln2_w"], params["ln2_b"], params["lin2_b"]],
                     axis=1)                                           # (L, 6, E)

    m1b = params["lin1_b"].reshape(L, 1, M)
    hln = jnp.stack([params["head_ln_w"], params["head_ln_b"]], axis=0)    # (2, E)
    head_wb = jnp.concatenate([params["head_w"],
                               params["head_b"][None, :]], axis=0)     # (E+1, C)

    return (patches_pad, params["patch_w"], table, qkvw, qkvb, outw, evec,
            params["lin1_w"], m1b, params["lin2_w"], hln, head_wb)


def _const_spec(a):
    nd = a.ndim
    return pl.BlockSpec(a.shape, lambda b, nd=nd: (0,) * nd)


# --------------------------------- forward ------------------------------------
def vit_forward(params, x):
    B, C, Himg, Wimg = x.shape
    assert Himg % PATCH_SIZE == 0 and Wimg % PATCH_SIZE == 0, \
        "Input image size must be divisible by patch size"
    Hp, Wp = Himg // PATCH_SIZE, Wimg // PATCH_SIZE
    NP = Hp * Wp
    S = NP + 1
    CPP = C * PATCH_SIZE * PATCH_SIZE

    # Patch extraction is pure data layout; free XLA reshape/transpose on host.
    # Patch vectors ordered (C, ph, pw) to match Conv2d weight layout.
    patches = x.reshape(B, C, Hp, PATCH_SIZE, Wp, PATCH_SIZE)
    patches = patches.transpose(0, 2, 4, 1, 3, 5).reshape(B, NP, CPP)

    ops = _pack_operands(params, patches)
    kernel = functools.partial(_vit_kernel,
                               num_heads=NUM_HEADS, num_layers=NUM_LAYERS)

    in_specs = [pl.BlockSpec((1, S, CPP), lambda b: (b, 0, 0))]   # per-image block
    in_specs += [_const_spec(a) for a in ops[1:]]                 # resident weights

    out = pl.pallas_call(
        kernel,
        out_shape=jax.ShapeDtypeStruct((B, 1, NUM_CLASSES), jnp.float32),
        grid=(B,),                                    # one image per grid step
        in_specs=in_specs,
        out_specs=pl.BlockSpec((1, 1, NUM_CLASSES), lambda b: (b, 0, 0)),
        compiler_params=pltpu.CompilerParams(
            dimension_semantics=("parallel",),        # 2x on v7x (2 TCs/chip)
            vmem_limit_bytes=32 * 1024 * 1024,
        ),
    )(*ops)
    return out[:, 0, :]


# ----------------------------- pure-JAX reference ------------------------------
def vit_reference(params, x):
    B, C, Himg, Wimg = x.shape
    Hp, Wp = Himg // PATCH_SIZE, Wimg // PATCH_SIZE
    NP = Hp * Wp
    S = NP + 1
    hi = jax.lax.Precision.HIGHEST

    patches = x.reshape(B, C, Hp, PATCH_SIZE, Wp, PATCH_SIZE)
    patches = patches.transpose(0, 2, 4, 1, 3, 5).reshape(B, NP, -1)
    emb = jnp.einsum("bpk,ke->bpe", patches, params["patch_w"],
                     precision=hi) + params["patch_b"]
    cls = jnp.broadcast_to(params["class_token"][None], (B, 1, EMBED_DIM))
    h = jnp.concatenate([cls, emb], axis=1) + params["pos_emb"][None]

    def ln(t, w, b):
        mu = t.mean(-1, keepdims=True)
        v = ((t - mu) ** 2).mean(-1, keepdims=True)
        return (t - mu) * jax.lax.rsqrt(v + LN_EPS) * w + b

    for l in range(NUM_LAYERS):
        xn = ln(h, params["ln1_w"][l], params["ln1_b"][l])
        qkv = jnp.einsum("bse,ef->bsf", xn, params["in_proj_w"][l],
                         precision=hi) + params["in_proj_b"][l]
        q, k, v = jnp.split(qkv, 3, axis=-1)

        def heads(t):
            return t.reshape(B, S, NUM_HEADS, HEAD_DIM).transpose(0, 2, 1, 3)

        q, k, v = heads(q), heads(k), heads(v)
        s = jnp.einsum("bhqd,bhkd->bhqk", q, k, precision=hi) / math.sqrt(HEAD_DIM)
        p = jax.nn.softmax(s, axis=-1)
        o = jnp.einsum("bhqk,bhkd->bhqd", p, v, precision=hi)
        o = o.transpose(0, 2, 1, 3).reshape(B, S, EMBED_DIM)
        o = jnp.einsum("bse,ef->bsf", o, params["out_proj_w"][l],
                       precision=hi) + params["out_proj_b"][l]
        h = h + o

        xn = ln(h, params["ln2_w"][l], params["ln2_b"][l])
        ff = jnp.einsum("bse,ef->bsf", xn, params["lin1_w"][l],
                        precision=hi) + params["lin1_b"][l]
        ff = 0.5 * ff * (1.0 + jax.lax.erf(ff / math.sqrt(2.0)))
        ff = jnp.einsum("bsf,fe->bse", ff, params["lin2_w"][l],
                        precision=hi) + params["lin2_b"][l]
        h = h + ff

    cls_tok = h[:, 0]
    cls_n = ln(cls_tok, params["head_ln_w"], params["head_ln_b"])
    return jnp.dot(cls_n, params["head_w"], precision=hi) + params["head_b"]


# ----------------------------------- main --------------------------------------
if __name__ == "__main__":
    key = jax.random.PRNGKey(0)
    pkey, xkey = jax.random.split(key)
    params = init_params(pkey)
    x = jax.random.normal(
        xkey, (BATCH, NUM_CHANNELS, IMG_SIZE, IMG_SIZE), dtype=jnp.float32
    )

    logits = jax.jit(vit_forward)(params, x)
    jax.block_until_ready(logits)

    assert logits.shape == (BATCH, NUM_CLASSES)
    assert bool(jnp.all(jnp.isfinite(logits)))

    ref = jax.jit(vit_reference)(params, x)
    jax.block_until_ready(ref)
    max_err = float(jnp.max(jnp.abs(logits - ref)))
    assert max_err < 1e-3, f"mismatch vs reference: {max_err}"

    print("KERNEL_OK")
</pallas_src>

<mosaic_0001>
module attributes {stable_mosaic.version = 11 : i64} {
  func.func @_vit_kernel(%arg0: i32, %arg1: memref<1x5x256xf32, #tpu.memory_space<vmem>>, %arg2: memref<256x32xf32, #tpu.memory_space<vmem>>, %arg3: memref<5x32xf32, #tpu.memory_space<vmem>>, %arg4: memref<6x4x32x8xf32, #tpu.memory_space<vmem>>, %arg5: memref<6x4x1x8xf32, #tpu.memory_space<vmem>>, %arg6: memref<2x4x8x32xf32, #tpu.memory_space<vmem>>, %arg7: memref<2x6x32xf32, #tpu.memory_space<vmem>>, %arg8: memref<2x32x64xf32, #tpu.memory_space<vmem>>, %arg9: memref<2x1x64xf32, #tpu.memory_space<vmem>>, %arg10: memref<2x64x32xf32, #tpu.memory_space<vmem>>, %arg11: memref<2x32xf32, #tpu.memory_space<vmem>>, %arg12: memref<33x10xf32, #tpu.memory_space<vmem>>, %arg13: memref<1x1x10xf32, #tpu.memory_space<vmem>>) attributes {dimension_semantics = [#tpu.dimension_semantics<parallel>], iteration_bounds = array<i64: 2>, scalar_prefetch = 0 : i64, scratch_operands = 0 : i64, tpu.core_type = #tpu.core_type<tc>, window_params = [{transform_indices = @transform_0, window_bounds = array<i64: 1, 5, 256>}, {pipeline_mode = #tpu.pipeline_mode<synchronous>, transform_indices = @transform_1, window_bounds = array<i64: 256, 32>}, {pipeline_mode = #tpu.pipeline_mode<synchronous>, transform_indices = @transform_2, window_bounds = array<i64: 5, 32>}, {pipeline_mode = #tpu.pipeline_mode<synchronous>, transform_indices = @transform_3, window_bounds = array<i64: 6, 4, 32, 8>}, {pipeline_mode = #tpu.pipeline_mode<synchronous>, transform_indices = @transform_4, window_bounds = array<i64: 6, 4, 1, 8>}, {pipeline_mode = #tpu.pipeline_mode<synchronous>, transform_indices = @transform_5, window_bounds = array<i64: 2, 4, 8, 32>}, {pipeline_mode = #tpu.pipeline_mode<synchronous>, transform_indices = @transform_6, window_bounds = array<i64: 2, 6, 32>}, {pipeline_mode = #tpu.pipeline_mode<synchronous>, transform_indices = @transform_7, window_bounds = array<i64: 2, 32, 64>}, {pipeline_mode = #tpu.pipeline_mode<synchronous>, transform_indices = @transform_8, window_bounds = array<i64: 2, 1, 64>}, {pipeline_mode = #tpu.pipeline_mode<synchronous>, transform_indices = @transform_9, window_bounds = array<i64: 2, 64, 32>}, {pipeline_mode = #tpu.pipeline_mode<synchronous>, transform_indices = @transform_10, window_bounds = array<i64: 2, 32>}, {pipeline_mode = #tpu.pipeline_mode<synchronous>, transform_indices = @transform_11, window_bounds = array<i64: 33, 10>}, {transform_indices = @transform_12, window_bounds = array<i64: 1, 1, 10>}]} {
    %c0 = arith.constant 0 : index
    %c0_0 = arith.constant 0 : index
    %c0_1 = arith.constant 0 : index
    %0 = vector.load %arg1[%c0, %c0_0, %c0_1] : memref<1x5x256xf32, #tpu.memory_space<vmem>>, vector<1x5x256xf32>
    %1 = vector.shape_cast %0 : vector<1x5x256xf32> to vector<5x256xf32>
    %c0_2 = arith.constant 0 : index
    %c0_3 = arith.constant 0 : index
    %2 = vector.load %arg2[%c0_2, %c0_3] : memref<256x32xf32, #tpu.memory_space<vmem>>, vector<256x32xf32>
    %cst = arith.constant dense<0.000000e+00> : vector<5x32xf32>
    %3 = tpu.matmul %1, %2, %cst {dimension_numbers = #tpu.dot_dimension_numbers<[1], [0], [0], [1], [0, 0, 1, 1], [], []>} : vector<5x256xf32>, vector<256x32xf32>, vector<5x32xf32> -> vector<5x32xf32>
    %c0_4 = arith.constant 0 : index
    %c0_5 = arith.constant 0 : index
    %4 = vector.load %arg3[%c0_4, %c0_5] : memref<5x32xf32, #tpu.memory_space<vmem>>, vector<5x32xf32>
    %5 = arith.addf %3, %4 : vector<5x32xf32>
    %c0_6 = arith.constant 0 : index
    %c0_7 = arith.constant 0 : index
    %c0_8 = arith.constant 0 : index
    %6 = vector.load %arg7[%c0_6, %c0_7, %c0_8] : memref<2x6x32xf32, #tpu.memory_space<vmem>>, vector<1x6x32xf32>
    %7 = vector.shape_cast %6 : vector<1x6x32xf32> to vector<6x32xf32>
    %8 = vector.extract_strided_slice %7 {offsets = [0, 0], sizes = [1, 32], strides = [1, 1]} : vector<6x32xf32> to vector<1x32xf32>
    %9 = vector.extract_strided_slice %7 {offsets = [1, 0], sizes = [1, 32], strides = [1, 1]} : vector<6x32xf32> to vector<1x32xf32>
    %10 = vector.extract_strided_slice %7 {offsets = [2, 0], sizes = [1, 32], strides = [1, 1]} : vector<6x32xf32> to vector<1x32xf32>
    %11 = vector.extract_strided_slice %7 {offsets = [3, 0], sizes = [1, 32], strides = [1, 1]} : vector<6x32xf32> to vector<1x32xf32>
    %12 = vector.extract_strided_slice %7 {offsets = [4, 0], sizes = [1, 32], strides = [1, 1]} : vector<6x32xf32> to vector<1x32xf32>
    %13 = vector.extract_strided_slice %7 {offsets = [5, 0], sizes = [1, 32], strides = [1, 1]} : vector<6x32xf32> to vector<1x32xf32>
    %cst_9 = arith.constant dense<0.000000e+00> : vector<5xf32>
    %14 = vector.multi_reduction <add>, %5, %cst_9 [1] : vector<5x32xf32> to vector<5xf32>
    %15 = vector.shape_cast %14 : vector<5xf32> to vector<5x1xf32>
    %cst_10 = arith.constant 3.200000e+01 : f32
    %16 = vector.broadcast %cst_10 : f32 to vector<5x1xf32>
    %17 = arith.divf %15, %16 : vector<5x1xf32>
    %18 = vector.broadcast %17 : vector<5x1xf32> to vector<5x32xf32>
    %19 = arith.subf %5, %18 : vector<5x32xf32>
    %20 = arith.mulf %19, %19 : vector<5x32xf32>
    %cst_11 = arith.constant dense<0.000000e+00> : vector<5xf32>
    %21 = vector.multi_reduction <add>, %20, %cst_11 [1] : vector<5x32xf32> to vector<5xf32>
    %22 = vector.shape_cast %21 : vector<5xf32> to vector<5x1xf32>
    %cst_12 = arith.constant 3.200000e+01 : f32
    %23 = vector.broadcast %cst_12 : f32 to vector<5x1xf32>
    %24 = arith.divf %22, %23 : vector<5x1xf32>
    %cst_13 = arith.constant 9.99999974E-6 : f32
    %25 = vector.broadcast %cst_13 : f32 to vector<5x1xf32>
    %26 = arith.addf %24, %25 : vector<5x1xf32>
    %27 = math.rsqrt %26 : vector<5x1xf32>
    %28 = vector.broadcast %27 : vector<5x1xf32> to vector<5x32xf32>
    %29 = arith.mulf %19, %28 : vector<5x32xf32>
    %30 = vector.broadcast %8 : vector<1x32xf32> to vector<5x32xf32>
    %31 = arith.mulf %29, %30 : vector<5x32xf32>
    %32 = vector.broadcast %9 : vector<1x32xf32> to vector<5x32xf32>
    %33 = arith.addf %31, %32 : vector<5x32xf32>
    %34 = vector.shape_cast %33 : vector<5x32xf32> to vector<1x5x32xf32>
    %35 = vector.shape_cast %34 : vector<1x5x32xf32> to vector<1x5x32xf32>
    %36 = vector.broadcast %35 : vector<1x5x32xf32> to vector<4x5x32xf32>
    %c0_14 = arith.constant 0 : index
    %c0_15 = arith.constant 0 : index
    %c0_16 = arith.constant 0 : index
    %c0_17 = arith.constant 0 : index
    %37 = vector.load %arg4[%c0_14, %c0_15, %c0_16, %c0_17] : memref<6x4x32x8xf32, #tpu.memory_space<vmem>>, vector<1x4x32x8xf32>
    %38 = vector.shape_cast %37 : vector<1x4x32x8xf32> to vector<4x32x8xf32>
    "tpu.trace_start"() <{level = 10 : i32, message = "hse,hed->hsd"}> : () -> ()
    %cst_18 = arith.constant dense<0.000000e+00> : vector<4x5x8xf32>
    %39 = tpu.matmul %36, %38, %cst_18 {dimension_numbers = #tpu.dot_dimension_numbers<[2], [1], [1], [2], [0, 0, 0, 1, 1, 2], [0], [0]>} : vector<4x5x32xf32>, vector<4x32x8xf32>, vector<4x5x8xf32> -> vector<4x5x8xf32>
    "tpu.trace_stop"() : () -> ()
    %c0_19 = arith.constant 0 : index
    %c0_20 = arith.constant 0 : index
    %c0_21 = arith.constant 0 : index
    %c0_22 = arith.constant 0 : index
    %40 = vector.load %arg5[%c0_19, %c0_20, %c0_21, %c0_22] : memref<6x4x1x8xf32, #tpu.memory_space<vmem>>, vector<1x4x1x8xf32>
    %41 = vector.shape_cast %40 : vector<1x4x1x8xf32> to vector<4x1x8xf32>
    %42 = vector.broadcast %41 : vector<4x1x8xf32> to vector<4x5x8xf32>
    %43 = arith.addf %39, %42 : vector<4x5x8xf32>
    %c1 = arith.constant 1 : index
    %c0_23 = arith.constant 0 : index
    %c0_24 = arith.constant 0 : index
    %c0_25 = arith.constant 0 : index
    %44 = vector.load %arg4[%c1, %c0_23, %c0_24, %c0_25] : memref<6x4x32x8xf32, #tpu.memory_space<vmem>>, vector<1x4x32x8xf32>
    %45 = vector.shape_cast %44 : vector<1x4x32x8xf32> to vector<4x32x8xf32>
    "tpu.trace_start"() <{level = 10 : i32, message = "hse,hed->hsd"}> : () -> ()
    %cst_26 = arith.constant dense<0.000000e+00> : vector<4x5x8xf32>
    %46 = tpu.matmul %36, %45, %cst_26 {dimension_numbers = #tpu.dot_dimension_numbers<[2], [1], [1], [2], [0, 0, 0, 1, 1, 2], [0], [0]>} : vector<4x5x32xf32>, vector<4x32x8xf32>, vector<4x5x8xf32> -> vector<4x5x8xf32>
    "tpu.trace_stop"() : () -> ()
    %c1_27 = arith.constant 1 : index
    %c0_28 = arith.constant 0 : index
    %c0_29 = arith.constant 0 : index
    %c0_30 = arith.constant 0 : index
    %47 = vector.load %arg5[%c1_27, %c0_28, %c0_29, %c0_30] : memref<6x4x1x8xf32, #tpu.memory_space<vmem>>, vector<1x4x1x8xf32>
    %48 = vector.shape_cast %47 : vector<1x4x1x8xf32> to vector<4x1x8xf32>
    %49 = vector.broadcast %48 : vector<4x1x8xf32> to vector<4x5x8xf32>
    %50 = arith.addf %46, %49 : vector<4x5x8xf32>
    %c2 = arith.constant 2 : index
    %c0_31 = arith.constant 0 : index
    %c0_32 = arith.constant 0 : index
    %c0_33 = arith.constant 0 : index
    %51 = vector.load %arg4[%c2, %c0_31, %c0_32, %c0_33] : memref<6x4x32x8xf32, #tpu.memory_space<vmem>>, vector<1x4x32x8xf32>
    %52 = vector.shape_cast %51 : vector<1x4x32x8xf32> to vector<4x32x8xf32>
    "tpu.trace_start"() <{level = 10 : i32, message = "hse,hed->hsd"}> : () -> ()
    %cst_34 = arith.constant dense<0.000000e+00> : vector<4x5x8xf32>
    %53 = tpu.matmul %36, %52, %cst_34 {dimension_numbers = #tpu.dot_dimension_numbers<[2], [1], [1], [2], [0, 0, 0, 1, 1, 2], [0], [0]>} : vector<4x5x32xf32>, vector<4x32x8xf32>, vector<4x5x8xf32> -> vector<4x5x8xf32>
    "tpu.trace_stop"() : () -> ()
    %c2_35 = arith.constant 2 : index
    %c0_36 = arith.constant 0 : index
    %c0_37 = arith.constant 0 : index
    %c0_38 = arith.constant 0 : index
    %54 = vector.load %arg5[%c2_35, %c0_36, %c0_37, %c0_38] : memref<6x4x1x8xf32, #tpu.memory_space<vmem>>, vector<1x4x1x8xf32>
    %55 = vector.shape_cast %54 : vector<1x4x1x8xf32> to vector<4x1x8xf32>
    %56 = vector.broadcast %55 : vector<4x1x8xf32> to vector<4x5x8xf32>
    %57 = arith.addf %53, %56 : vector<4x5x8xf32>
    "tpu.trace_start"() <{level = 10 : i32, message = "hqd,hkd->hqk"}> : () -> ()
    %cst_39 = arith.constant dense<0.000000e+00> : vector<4x5x5xf32>
    %58 = tpu.matmul %43, %50, %cst_39 {dimension_numbers = #tpu.dot_dimension_numbers<[2], [2], [1], [1], [0, 0, 0, 1, 1, 1], [0], [0]>} : vector<4x5x8xf32>, vector<4x5x8xf32>, vector<4x5x5xf32> -> vector<4x5x5xf32>
    "tpu.trace_stop"() : () -> ()
    %cst_40 = arith.constant 0.353553385 : f32
    %59 = vector.broadcast %cst_40 : f32 to vector<4x5x5xf32>
    %60 = arith.mulf %58, %59 : vector<4x5x5xf32>
    %cst_41 = arith.constant dense<0xFF800000> : vector<4x5xf32>
    %61 = vector.multi_reduction <maximumf>, %60, %cst_41 [2] : vector<4x5x5xf32> to vector<4x5xf32>
    %62 = vector.shape_cast %61 : vector<4x5xf32> to vector<4x5x1xf32>
    %63 = vector.broadcast %62 : vector<4x5x1xf32> to vector<4x5x5xf32>
    %64 = arith.subf %60, %63 : vector<4x5x5xf32>
    %65 = math.exp %64 : vector<4x5x5xf32>
    %cst_42 = arith.constant dense<0.000000e+00> : vector<4x5xf32>
    %66 = vector.multi_reduction <add>, %65, %cst_42 [2] : vector<4x5x5xf32> to vector<4x5xf32>
    %67 = vector.shape_cast %66 : vector<4x5xf32> to vector<4x5x1xf32>
    %68 = tpu.reciprocal %67 {approx = true} : vector<4x5x1xf32> -> vector<4x5x1xf32>
    %69 = vector.broadcast %68 : vector<4x5x1xf32> to vector<4x5x5xf32>
    %70 = arith.mulf %65, %69 : vector<4x5x5xf32>
    "tpu.trace_start"() <{level = 10 : i32, message = "hqk,hkd->hqd"}> : () -> ()
    %cst_43 = arith.constant dense<0.000000e+00> : vector<4x5x8xf32>
    %71 = tpu.matmul %70, %57, %cst_43 {dimension_numbers = #tpu.dot_dimension_numbers<[2], [1], [1], [2], [0, 0, 0, 1, 1, 2], [0], [0]>} : vector<4x5x5xf32>, vector<4x5x8xf32>, vector<4x5x8xf32> -> vector<4x5x8xf32>
    "tpu.trace_stop"() : () -> ()
    %c0_44 = arith.constant 0 : index
    %c0_45 = arith.constant 0 : index
    %c0_46 = arith.constant 0 : index
    %c0_47 = arith.constant 0 : index
    %72 = vector.load %arg6[%c0_44, %c0_45, %c0_46, %c0_47] : memref<2x4x8x32xf32, #tpu.memory_space<vmem>>, vector<1x4x8x32xf32>
    %73 = vector.shape_cast %72 : vector<1x4x8x32xf32> to vector<4x8x32xf32>
    "tpu.trace_start"() <{level = 10 : i32, message = "hsd,hde->hse"}> : () -> ()
    %cst_48 = arith.constant dense<0.000000e+00> : vector<4x5x32xf32>
    %74 = tpu.matmul %71, %73, %cst_48 {dimension_numbers = #tpu.dot_dimension_numbers<[2], [1], [1], [2], [0, 0, 0, 1, 1, 2], [0], [0]>} : vector<4x5x8xf32>, vector<4x8x32xf32>, vector<4x5x32xf32> -> vector<4x5x32xf32>
    "tpu.trace_stop"() : () -> ()
    %75 = vector.extract_strided_slice %74 {offsets = [0, 0, 0], sizes = [1, 5, 32], strides = [1, 1, 1]} : vector<4x5x32xf32> to vector<1x5x32xf32>
    %76 = vector.shape_cast %75 : vector<1x5x32xf32> to vector<5x32xf32>
    %77 = vector.extract_strided_slice %74 {offsets = [1, 0, 0], sizes = [1, 5, 32], strides = [1, 1, 1]} : vector<4x5x32xf32> to vector<1x5x32xf32>
    %78 = vector.shape_cast %77 : vector<1x5x32xf32> to vector<5x32xf32>
    %79 = arith.addf %76, %78 : vector<5x32xf32>
    %80 = vector.extract_strided_slice %74 {offsets = [2, 0, 0], sizes = [1, 5, 32], strides = [1, 1, 1]} : vector<4x5x32xf32> to vector<1x5x32xf32>
    %81 = vector.shape_cast %80 : vector<1x5x32xf32> to vector<5x32xf32>
    %82 = arith.addf %79, %81 : vector<5x32xf32>
    %83 = vector.extract_strided_slice %74 {offsets = [3, 0, 0], sizes = [1, 5, 32], strides = [1, 1, 1]} : vector<4x5x32xf32> to vector<1x5x32xf32>
    %84 = vector.shape_cast %83 : vector<1x5x32xf32> to vector<5x32xf32>
    %85 = arith.addf %82, %84 : vector<5x32xf32>
    %86 = arith.addf %5, %85 : vector<5x32xf32>
    %87 = vector.broadcast %10 : vector<1x32xf32> to vector<5x32xf32>
    %88 = arith.addf %86, %87 : vector<5x32xf32>
    %cst_49 = arith.constant dense<0.000000e+00> : vector<5xf32>
    %89 = vector.multi_reduction <add>, %88, %cst_49 [1] : vector<5x32xf32> to vector<5xf32>
    %90 = vector.shape_cast %89 : vector<5xf32> to vector<5x1xf32>
    %cst_50 = arith.constant 3.200000e+01 : f32
    %91 = vector.broadcast %cst_50 : f32 to vector<5x1xf32>
    %92 = arith.divf %90, %91 : vector<5x1xf32>
    %93 = vector.broadcast %92 : vector<5x1xf32> to vector<5x32xf32>
    %94 = arith.subf %88, %93 : vector<5x32xf32>
    %95 = arith.mulf %94, %94 : vector<5x32xf32>
    %cst_51 = arith.constant dense<0.000000e+00> : vector<5xf32>
    %96 = vector.multi_reduction <add>, %95, %cst_51 [1] : vector<5x32xf32> to vector<5xf32>
    %97 = vector.shape_cast %96 : vector<5xf32> to vector<5x1xf32>
    %cst_52 = arith.constant 3.200000e+01 : f32
    %98 = vector.broadcast %cst_52 : f32 to vector<5x1xf32>
    %99 = arith.divf %97, %98 : vector<5x1xf32>
    %cst_53 = arith.constant 9.99999974E-6 : f32
    %100 = vector.broadcast %cst_53 : f32 to vector<5x1xf32>
    %101 = arith.addf %99, %100 : vector<5x1xf32>
    %102 = math.rsqrt %101 : vector<5x1xf32>
    %103 = vector.broadcast %102 : vector<5x1xf32> to vector<5x32xf32>
    %104 = arith.mulf %94, %103 : vector<5x32xf32>
    %105 = vector.broadcast %11 : vector<1x32xf32> to vector<5x32xf32>
    %106 = arith.mulf %104, %105 : vector<5x32xf32>
    %107 = vector.broadcast %12 : vector<1x32xf32> to vector<5x32xf32>
    %108 = arith.addf %106, %107 : vector<5x32xf32>
    %c0_54 = arith.constant 0 : index
    %c0_55 = arith.constant 0 : index
    %c0_56 = arith.constant 0 : index
    %109 = vector.load %arg8[%c0_54, %c0_55, %c0_56] : memref<2x32x64xf32, #tpu.memory_space<vmem>>, vector<1x32x64xf32>
    %110 = vector.shape_cast %109 : vector<1x32x64xf32> to vector<32x64xf32>
    %cst_57 = arith.constant dense<0.000000e+00> : vector<5x64xf32>
    %111 = tpu.matmul %108, %110, %cst_57 {dimension_numbers = #tpu.dot_dimension_numbers<[1], [0], [0], [1], [0, 0, 1, 1], [], []>} : vector<5x32xf32>, vector<32x64xf32>, vector<5x64xf32> -> vector<5x64xf32>
    %c0_58 = arith.constant 0 : index
    %c0_59 = arith.constant 0 : index
    %c0_60 = arith.constant 0 : index
    %112 = vector.load %arg9[%c0_58, %c0_59, %c0_60] : memref<2x1x64xf32, #tpu.memory_space<vmem>>, vector<1x1x64xf32>
    %113 = vector.shape_cast %112 : vector<1x1x64xf32> to vector<1x64xf32>
    %114 = vector.broadcast %113 : vector<1x64xf32> to vector<5x64xf32>
    %115 = arith.addf %111, %114 : vector<5x64xf32>
    %cst_61 = arith.constant 5.000000e-01 : f32
    %116 = vector.broadcast %cst_61 : f32 to vector<5x64xf32>
    %117 = arith.mulf %116, %115 : vector<5x64xf32>
    %cst_62 = arith.constant 0.707106769 : f32
    %118 = vector.broadcast %cst_62 : f32 to vector<5x64xf32>
    %119 = arith.mulf %115, %118 : vector<5x64xf32>
    %cst_63 = arith.constant 0.000000e+00 : f32
    %120 = vector.broadcast %cst_63 : f32 to vector<5x64xf32>
    %121 = arith.cmpf oge, %119, %120 : vector<5x64xf32>
    %cst_64 = arith.constant 1.000000e+00 : f32
    %cst_65 = arith.constant -1.000000e+00 : f32
    %122 = vector.broadcast %cst_64 : f32 to vector<5x64xf32>
    %123 = vector.broadcast %cst_65 : f32 to vector<5x64xf32>
    %124 = arith.select %121, %122, %123 : vector<5x64xi1>, vector<5x64xf32>
    %125 = math.absf %119 : vector<5x64xf32>
    %cst_66 = arith.constant 0.327591091 : f32
    %126 = vector.broadcast %cst_66 : f32 to vector<5x64xf32>
    %127 = arith.mulf %126, %125 : vector<5x64xf32>
    %cst_67 = arith.constant 1.000000e+00 : f32
    %128 = vector.broadcast %cst_67 : f32 to vector<5x64xf32>
    %129 = arith.addf %128, %127 : vector<5x64xf32>
    %cst_68 = arith.constant 1.000000e+00 : f32
    %130 = vector.broadcast %cst_68 : f32 to vector<5x64xf32>
    %131 = arith.divf %130, %129 : vector<5x64xf32>
    %cst_69 = arith.constant 1.06140542 : f32
    %132 = vector.broadcast %cst_69 : f32 to vector<5x64xf32>
    %133 = arith.mulf %132, %131 : vector<5x64xf32>
    %cst_70 = arith.constant -1.45315206 : f32
    %134 = vector.broadcast %cst_70 : f32 to vector<5x64xf32>
    %135 = arith.addf %133, %134 : vector<5x64xf32>
    %136 = arith.mulf %135, %131 : vector<5x64xf32>
    %cst_71 = arith.constant 1.42141378 : f32
    %137 = vector.broadcast %cst_71 : f32 to vector<5x64xf32>
    %138 = arith.addf %136, %137 : vector<5x64xf32>
    %139 = arith.mulf %138, %131 : vector<5x64xf32>
    %cst_72 = arith.constant -0.284496725 : f32
    %140 = vector.broadcast %cst_72 : f32 to vector<5x64xf32>
    %141 = arith.addf %139, %140 : vector<5x64xf32>
    %142 = arith.mulf %141, %131 : vector<5x64xf32>
    %cst_73 = arith.constant 0.254829586 : f32
    %143 = vector.broadcast %cst_73 : f32 to vector<5x64xf32>
    %144 = arith.addf %142, %143 : vector<5x64xf32>
    %145 = arith.mulf %144, %131 : vector<5x64xf32>
    %cst_74 = arith.constant 0.000000e+00 : f32
    %146 = vector.broadcast %cst_74 : f32 to vector<5x64xf32>
    %147 = arith.subf %146, %125 : vector<5x64xf32>
    %148 = arith.mulf %147, %125 : vector<5x64xf32>
    %149 = math.exp %148 : vector<5x64xf32>
    %150 = arith.mulf %145, %149 : vector<5x64xf32>
    %cst_75 = arith.constant 1.000000e+00 : f32
    %151 = vector.broadcast %cst_75 : f32 to vector<5x64xf32>
    %152 = arith.subf %151, %150 : vector<5x64xf32>
    %153 = arith.mulf %124, %152 : vector<5x64xf32>
    %cst_76 = arith.constant 1.000000e+00 : f32
    %154 = vector.broadcast %cst_76 : f32 to vector<5x64xf32>
    %155 = arith.addf %154, %153 : vector<5x64xf32>
    %156 = arith.mulf %117, %155 : vector<5x64xf32>
    %c0_77 = arith.constant 0 : index
    %c0_78 = arith.constant 0 : index
    %c0_79 = arith.constant 0 : index
    %157 = vector.load %arg10[%c0_77, %c0_78, %c0_79] : memref<2x64x32xf32, #tpu.memory_space<vmem>>, vector<1x64x32xf32>
    %158 = vector.shape_cast %157 : vector<1x64x32xf32> to vector<64x32xf32>
    %cst_80 = arith.constant dense<0.000000e+00> : vector<5x32xf32>
    %159 = tpu.matmul %156, %158, %cst_80 {dimension_numbers = #tpu.dot_dimension_numbers<[1], [0], [0], [1], [0, 0, 1, 1], [], []>} : vector<5x64xf32>, vector<64x32xf32>, vector<5x32xf32> -> vector<5x32xf32>
    %160 = vector.broadcast %13 : vector<1x32xf32> to vector<5x32xf32>
    %161 = arith.addf %159, %160 : vector<5x32xf32>
    %162 = arith.addf %88, %161 : vector<5x32xf32>
    %c1_81 = arith.constant 1 : index
    %c0_82 = arith.constant 0 : index
    %c0_83 = arith.constant 0 : index
    %163 = vector.load %arg7[%c1_81, %c0_82, %c0_83] : memref<2x6x32xf32, #tpu.memory_space<vmem>>, vector<1x6x32xf32>
    %164 = vector.shape_cast %163 : vector<1x6x32xf32> to vector<6x32xf32>
    %165 = vector.extract_strided_slice %164 {offsets = [0, 0], sizes = [1, 32], strides = [1, 1]} : vector<6x32xf32> to vector<1x32xf32>
    %166 = vector.extract_strided_slice %164 {offsets = [1, 0], sizes = [1, 32], strides = [1, 1]} : vector<6x32xf32> to vector<1x32xf32>
    %167 = vector.extract_strided_slice %164 {offsets = [2, 0], sizes = [1, 32], strides = [1, 1]} : vector<6x32xf32> to vector<1x32xf32>
    %168 = vector.extract_strided_slice %164 {offsets = [3, 0], sizes = [1, 32], strides = [1, 1]} : vector<6x32xf32> to vector<1x32xf32>
    %169 = vector.extract_strided_slice %164 {offsets = [4, 0], sizes = [1, 32], strides = [1, 1]} : vector<6x32xf32> to vector<1x32xf32>
    %170 = vector.extract_strided_slice %164 {offsets = [5, 0], sizes = [1, 32], strides = [1, 1]} : vector<6x32xf32> to vector<1x32xf32>
    %cst_84 = arith.constant dense<0.000000e+00> : vector<5xf32>
    %171 = vector.multi_reduction <add>, %162, %cst_84 [1] : vector<5x32xf32> to vector<5xf32>
    %172 = vector.shape_cast %171 : vector<5xf32> to vector<5x1xf32>
    %cst_85 = arith.constant 3.200000e+01 : f32
    %173 = vector.broadcast %cst_85 : f32 to vector<5x1xf32>
    %174 = arith.divf %172, %173 : vector<5x1xf32>
    %175 = vector.broadcast %174 : vector<5x1xf32> to vector<5x32xf32>
    %176 = arith.subf %162, %175 : vector<5x32xf32>
    %177 = arith.mulf %176, %176 : vector<5x32xf32>
    %cst_86 = arith.constant dense<0.000000e+00> : vector<5xf32>
    %178 = vector.multi_reduction <add>, %177, %cst_86 [1] : vector<5x32xf32> to vector<5xf32>
    %179 = vector.shape_cast %178 : vector<5xf32> to vector<5x1xf32>
    %cst_87 = arith.constant 3.200000e+01 : f32
    %180 = vector.broadcast %cst_87 : f32 to vector<5x1xf32>
    %181 = arith.divf %179, %180 : vector<5x1xf32>
    %cst_88 = arith.constant 9.99999974E-6 : f32
    %182 = vector.broadcast %cst_88 : f32 to vector<5x1xf32>
    %183 = arith.addf %181, %182 : vector<5x1xf32>
    %184 = math.rsqrt %183 : vector<5x1xf32>
    %185 = vector.broadcast %184 : vector<5x1xf32> to vector<5x32xf32>
    %186 = arith.mulf %176, %185 : vector<5x32xf32>
    %187 = vector.broadcast %165 : vector<1x32xf32> to vector<5x32xf32>
    %188 = arith.mulf %186, %187 : vector<5x32xf32>
    %189 = vector.broadcast %166 : vector<1x32xf32> to vector<5x32xf32>
    %190 = arith.addf %188, %189 : vector<5x32xf32>
    %191 = vector.shape_cast %190 : vector<5x32xf32> to vector<1x5x32xf32>
    %192 = vector.shape_cast %191 : vector<1x5x32xf32> to vector<1x5x32xf32>
    %193 = vector.broadcast %192 : vector<1x5x32xf32> to vector<4x5x32xf32>
    %c3 = arith.constant 3 : index
    %c0_89 = arith.constant 0 : index
    %c0_90 = arith.constant 0 : index
    %c0_91 = arith.constant 0 : index
    %194 = vector.load %arg4[%c3, %c0_89, %c0_90, %c0_91] : memref<6x4x32x8xf32, #tpu.memory_space<vmem>>, vector<1x4x32x8xf32>
    %195 = vector.shape_cast %194 : vector<1x4x32x8xf32> to vector<4x32x8xf32>
    "tpu.trace_start"() <{level = 10 : i32, message = "hse,hed->hsd"}> : () -> ()
    %cst_92 = arith.constant dense<0.000000e+00> : vector<4x5x8xf32>
    %196 = tpu.matmul %193, %195, %cst_92 {dimension_numbers = #tpu.dot_dimension_numbers<[2], [1], [1], [2], [0, 0, 0, 1, 1, 2], [0], [0]>} : vector<4x5x32xf32>, vector<4x32x8xf32>, vector<4x5x8xf32> -> vector<4x5x8xf32>
    "tpu.trace_stop"() : () -> ()
    %c3_93 = arith.constant 3 : index
    %c0_94 = arith.constant 0 : index
    %c0_95 = arith.constant 0 : index
    %c0_96 = arith.constant 0 : index
    %197 = vector.load %arg5[%c3_93, %c0_94, %c0_95, %c0_96] : memref<6x4x1x8xf32, #tpu.memory_space<vmem>>, vector<1x4x1x8xf32>
    %198 = vector.shape_cast %197 : vector<1x4x1x8xf32> to vector<4x1x8xf32>
    %199 = vector.broadcast %198 : vector<4x1x8xf32> to vector<4x5x8xf32>
    %200 = arith.addf %196, %199 : vector<4x5x8xf32>
    %c4 = arith.constant 4 : index
    %c0_97 = arith.constant 0 : index
    %c0_98 = arith.constant 0 : index
    %c0_99 = arith.constant 0 : index
    %201 = vector.load %arg4[%c4, %c0_97, %c0_98, %c0_99] : memref<6x4x32x8xf32, #tpu.memory_space<vmem>>, vector<1x4x32x8xf32>
    %202 = vector.shape_cast %201 : vector<1x4x32x8xf32> to vector<4x32x8xf32>
    "tpu.trace_start"() <{level = 10 : i32, message = "hse,hed->hsd"}> : () -> ()
    %cst_100 = arith.constant dense<0.000000e+00> : vector<4x5x8xf32>
    %203 = tpu.matmul %193, %202, %cst_100 {dimension_numbers = #tpu.dot_dimension_numbers<[2], [1], [1], [2], [0, 0, 0, 1, 1, 2], [0], [0]>} : vector<4x5x32xf32>, vector<4x32x8xf32>, vector<4x5x8xf32> -> vector<4x5x8xf32>
    "tpu.trace_stop"() : () -> ()
    %c4_101 = arith.constant 4 : index
    %c0_102 = arith.constant 0 : index
    %c0_103 = arith.constant 0 : index
    %c0_104 = arith.constant 0 : index
    %204 = vector.load %arg5[%c4_101, %c0_102, %c0_103, %c0_104] : memref<6x4x1x8xf32, #tpu.memory_space<vmem>>, vector<1x4x1x8xf32>
    %205 = vector.shape_cast %204 : vector<1x4x1x8xf32> to vector<4x1x8xf32>
    %206 = vector.broadcast %205 : vector<4x1x8xf32> to vector<4x5x8xf32>
    %207 = arith.addf %203, %206 : vector<4x5x8xf32>
    %c5 = arith.constant 5 : index
    %c0_105 = arith.constant 0 : index
    %c0_106 = arith.constant 0 : index
    %c0_107 = arith.constant 0 : index
    %208 = vector.load %arg4[%c5, %c0_105, %c0_106, %c0_107] : memref<6x4x32x8xf32, #tpu.memory_space<vmem>>, vector<1x4x32x8xf32>
    %209 = vector.shape_cast %208 : vector<1x4x32x8xf32> to vector<4x32x8xf32>
    "tpu.trace_start"() <{level = 10 : i32, message = "hse,hed->hsd"}> : () -> ()
    %cst_108 = arith.constant dense<0.000000e+00> : vector<4x5x8xf32>
    %210 = tpu.matmul %193, %209, %cst_108 {dimension_numbers = #tpu.dot_dimension_numbers<[2], [1], [1], [2], [0, 0, 0, 1, 1, 2], [0], [0]>} : vector<4x5x32xf32>, vector<4x32x8xf32>, vector<4x5x8xf32> -> vector<4x5x8xf32>
    "tpu.trace_stop"() : () -> ()
    %c5_109 = arith.constant 5 : index
    %c0_110 = arith.constant 0 : index
    %c0_111 = arith.constant 0 : index
    %c0_112 = arith.constant 0 : index
    %211 = vector.load %arg5[%c5_109, %c0_110, %c0_111, %c0_112] : memref<6x4x1x8xf32, #tpu.memory_space<vmem>>, vector<1x4x1x8xf32>
    %212 = vector.shape_cast %211 : vector<1x4x1x8xf32> to vector<4x1x8xf32>
    %213 = vector.broadcast %212 : vector<4x1x8xf32> to vector<4x5x8xf32>
    %214 = arith.addf %210, %213 : vector<4x5x8xf32>
    "tpu.trace_start"() <{level = 10 : i32, message = "hqd,hkd->hqk"}> : () -> ()
    %cst_113 = arith.constant dense<0.000000e+00> : vector<4x5x5xf32>
    %215 = tpu.matmul %200, %207, %cst_113 {dimension_numbers = #tpu.dot_dimension_numbers<[2], [2], [1], [1], [0, 0, 0, 1, 1, 1], [0], [0]>} : vector<4x5x8xf32>, vector<4x5x8xf32>, vector<4x5x5xf32> -> vector<4x5x5xf32>
    "tpu.trace_stop"() : () -> ()
    %cst_114 = arith.constant 0.353553385 : f32
    %216 = vector.broadcast %cst_114 : f32 to vector<4x5x5xf32>
    %217 = arith.mulf %215, %216 : vector<4x5x5xf32>
    %cst_115 = arith.constant dense<0xFF800000> : vector<4x5xf32>
    %218 = vector.multi_reduction <maximumf>, %217, %cst_115 [2] : vector<4x5x5xf32> to vector<4x5xf32>
    %219 = vector.shape_cast %218 : vector<4x5xf32> to vector<4x5x1xf32>
    %220 = vector.broadcast %219 : vector<4x5x1xf32> to vector<4x5x5xf32>
    %221 = arith.subf %217, %220 : vector<4x5x5xf32>
    %222 = math.exp %221 : vector<4x5x5xf32>
    %cst_116 = arith.constant dense<0.000000e+00> : vector<4x5xf32>
    %223 = vector.multi_reduction <add>, %222, %cst_116 [2] : vector<4x5x5xf32> to vector<4x5xf32>
    %224 = vector.shape_cast %223 : vector<4x5xf32> to vector<4x5x1xf32>
    %225 = tpu.reciprocal %224 {approx = true} : vector<4x5x1xf32> -> vector<4x5x1xf32>
    %226 = vector.broadcast %225 : vector<4x5x1xf32> to vector<4x5x5xf32>
    %227 = arith.mulf %222, %226 : vector<4x5x5xf32>
    "tpu.trace_start"() <{level = 10 : i32, message = "hqk,hkd->hqd"}> : () -> ()
    %cst_117 = arith.constant dense<0.000000e+00> : vector<4x5x8xf32>
    %228 = tpu.matmul %227, %214, %cst_117 {dimension_numbers = #tpu.dot_dimension_numbers<[2], [1], [1], [2], [0, 0, 0, 1, 1, 2], [0], [0]>} : vector<4x5x5xf32>, vector<4x5x8xf32>, vector<4x5x8xf32> -> vector<4x5x8xf32>
    "tpu.trace_stop"() : () -> ()
    %c1_118 = arith.constant 1 : index
    %c0_119 = arith.constant 0 : index
    %c0_120 = arith.constant 0 : index
    %c0_121 = arith.constant 0 : index
    %229 = vector.load %arg6[%c1_118, %c0_119, %c0_120, %c0_121] : memref<2x4x8x32xf32, #tpu.memory_space<vmem>>, vector<1x4x8x32xf32>
    %230 = vector.shape_cast %229 : vector<1x4x8x32xf32> to vector<4x8x32xf32>
    "tpu.trace_start"() <{level = 10 : i32, message = "hsd,hde->hse"}> : () -> ()
    %cst_122 = arith.constant dense<0.000000e+00> : vector<4x5x32xf32>
    %231 = tpu.matmul %228, %230, %cst_122 {dimension_numbers = #tpu.dot_dimension_numbers<[2], [1], [1], [2], [0, 0, 0, 1, 1, 2], [0], [0]>} : vector<4x5x8xf32>, vector<4x8x32xf32>, vector<4x5x32xf32> -> vector<4x5x32xf32>
    "tpu.trace_stop"() : () -> ()
    %232 = vector.extract_strided_slice %231 {offsets = [0, 0, 0], sizes = [1, 5, 32], strides = [1, 1, 1]} : vector<4x5x32xf32> to vector<1x5x32xf32>
    %233 = vector.shape_cast %232 : vector<1x5x32xf32> to vector<5x32xf32>
    %234 = vector.extract_strided_slice %231 {offsets = [1, 0, 0], sizes = [1, 5, 32], strides = [1, 1, 1]} : vector<4x5x32xf32> to vector<1x5x32xf32>
    %235 = vector.shape_cast %234 : vector<1x5x32xf32> to vector<5x32xf32>
    %236 = arith.addf %233, %235 : vector<5x32xf32>
    %237 = vector.extract_strided_slice %231 {offsets = [2, 0, 0], sizes = [1, 5, 32], strides = [1, 1, 1]} : vector<4x5x32xf32> to vector<1x5x32xf32>
    %238 = vector.shape_cast %237 : vector<1x5x32xf32> to vector<5x32xf32>
    %239 = arith.addf %236, %238 : vector<5x32xf32>
    %240 = vector.extract_strided_slice %231 {offsets = [3, 0, 0], sizes = [1, 5, 32], strides = [1, 1, 1]} : vector<4x5x32xf32> to vector<1x5x32xf32>
    %241 = vector.shape_cast %240 : vector<1x5x32xf32> to vector<5x32xf32>
    %242 = arith.addf %239, %241 : vector<5x32xf32>
    %243 = arith.addf %162, %242 : vector<5x32xf32>
    %244 = vector.broadcast %167 : vector<1x32xf32> to vector<5x32xf32>
    %245 = arith.addf %243, %244 : vector<5x32xf32>
    %cst_123 = arith.constant dense<0.000000e+00> : vector<5xf32>
    %246 = vector.multi_reduction <add>, %245, %cst_123 [1] : vector<5x32xf32> to vector<5xf32>
    %247 = vector.shape_cast %246 : vector<5xf32> to vector<5x1xf32>
    %cst_124 = arith.constant 3.200000e+01 : f32
    %248 = vector.broadcast %cst_124 : f32 to vector<5x1xf32>
    %249 = arith.divf %247, %248 : vector<5x1xf32>
    %250 = vector.broadcast %249 : vector<5x1xf32> to vector<5x32xf32>
    %251 = arith.subf %245, %250 : vector<5x32xf32>
    %252 = arith.mulf %251, %251 : vector<5x32xf32>
    %cst_125 = arith.constant dense<0.000000e+00> : vector<5xf32>
    %253 = vector.multi_reduction <add>, %252, %cst_125 [1] : vector<5x32xf32> to vector<5xf32>
    %254 = vector.shape_cast %253 : vector<5xf32> to vector<5x1xf32>
    %cst_126 = arith.constant 3.200000e+01 : f32
    %255 = vector.broadcast %cst_126 : f32 to vector<5x1xf32>
    %256 = arith.divf %254, %255 : vector<5x1xf32>
    %cst_127 = arith.constant 9.99999974E-6 : f32
    %257 = vector.broadcast %cst_127 : f32 to vector<5x1xf32>
    %258 = arith.addf %256, %257 : vector<5x1xf32>
    %259 = math.rsqrt %258 : vector<5x1xf32>
    %260 = vector.broadcast %259 : vector<5x1xf32> to vector<5x32xf32>
    %261 = arith.mulf %251, %260 : vector<5x32xf32>
    %262 = vector.broadcast %168 : vector<1x32xf32> to vector<5x32xf32>
    %263 = arith.mulf %261, %262 : vector<5x32xf32>
    %264 = vector.broadcast %169 : vector<1x32xf32> to vector<5x32xf32>
    %265 = arith.addf %263, %264 : vector<5x32xf32>
    %c1_128 = arith.constant 1 : index
    %c0_129 = arith.constant 0 : index
    %c0_130 = arith.constant 0 : index
    %266 = vector.load %arg8[%c1_128, %c0_129, %c0_130] : memref<2x32x64xf32, #tpu.memory_space<vmem>>, vector<1x32x64xf32>
    %267 = vector.shape_cast %266 : vector<1x32x64xf32> to vector<32x64xf32>
    %cst_131 = arith.constant dense<0.000000e+00> : vector<5x64xf32>
    %268 = tpu.matmul %265, %267, %cst_131 {dimension_numbers = #tpu.dot_dimension_numbers<[1], [0], [0], [1], [0, 0, 1, 1], [], []>} : vector<5x32xf32>, vector<32x64xf32>, vector<5x64xf32> -> vector<5x64xf32>
    %c1_132 = arith.constant 1 : index
    %c0_133 = arith.constant 0 : index
    %c0_134 = arith.constant 0 : index
    %269 = vector.load %arg9[%c1_132, %c0_133, %c0_134] : memref<2x1x64xf32, #tpu.memory_space<vmem>>, vector<1x1x64xf32>
    %270 = vector.shape_cast %269 : vector<1x1x64xf32> to vector<1x64xf32>
    %271 = vector.broadcast %270 : vector<1x64xf32> to vector<5x64xf32>
    %272 = arith.addf %268, %271 : vector<5x64xf32>
    %cst_135 = arith.constant 5.000000e-01 : f32
    %273 = vector.broadcast %cst_135 : f32 to vector<5x64xf32>
    %274 = arith.mulf %273, %272 : vector<5x64xf32>
    %cst_136 = arith.constant 0.707106769 : f32
    %275 = vector.broadcast %cst_136 : f32 to vector<5x64xf32>
    %276 = arith.mulf %272, %275 : vector<5x64xf32>
    %cst_137 = arith.constant 0.000000e+00 : f32
    %277 = vector.broadcast %cst_137 : f32 to vector<5x64xf32>
    %278 = arith.cmpf oge, %276, %277 : vector<5x64xf32>
    %cst_138 = arith.constant 1.000000e+00 : f32
    %cst_139 = arith.constant -1.000000e+00 : f32
    %279 = vector.broadcast %cst_138 : f32 to vector<5x64xf32>
    %280 = vector.broadcast %cst_139 : f32 to vector<5x64xf32>
    %281 = arith.select %278, %279, %280 : vector<5x64xi1>, vector<5x64xf32>
    %282 = math.absf %276 : vector<5x64xf32>
    %cst_140 = arith.constant 0.327591091 : f32
    %283 = vector.broadcast %cst_140 : f32 to vector<5x64xf32>
    %284 = arith.mulf %283, %282 : vector<5x64xf32>
    %cst_141 = arith.constant 1.000000e+00 : f32
    %285 = vector.broadcast %cst_141 : f32 to vector<5x64xf32>
    %286 = arith.addf %285, %284 : vector<5x64xf32>
    %cst_142 = arith.constant 1.000000e+00 : f32
    %287 = vector.broadcast %cst_142 : f32 to vector<5x64xf32>
    %288 = arith.divf %287, %286 : vector<5x64xf32>
    %cst_143 = arith.constant 1.06140542 : f32
    %289 = vector.broadcast %cst_143 : f32 to vector<5x64xf32>
    %290 = arith.mulf %289, %288 : vector<5x64xf32>
    %cst_144 = arith.constant -1.45315206 : f32
    %291 = vector.broadcast %cst_144 : f32 to vector<5x64xf32>
    %292 = arith.addf %290, %291 : vector<5x64xf32>
    %293 = arith.mulf %292, %288 : vector<5x64xf32>
    %cst_145 = arith.constant 1.42141378 : f32
    %294 = vector.broadcast %cst_145 : f32 to vector<5x64xf32>
    %295 = arith.addf %293, %294 : vector<5x64xf32>
    %296 = arith.mulf %295, %288 : vector<5x64xf32>
    %cst_146 = arith.constant -0.284496725 : f32
    %297 = vector.broadcast %cst_146 : f32 to vector<5x64xf32>
    %298 = arith.addf %296, %297 : vector<5x64xf32>
    %299 = arith.mulf %298, %288 : vector<5x64xf32>
    %cst_147 = arith.constant 0.254829586 : f32
    %300 = vector.broadcast %cst_147 : f32 to vector<5x64xf32>
    %301 = arith.addf %299, %300 : vector<5x64xf32>
    %302 = arith.mulf %301, %288 : vector<5x64xf32>
    %cst_148 = arith.constant 0.000000e+00 : f32
    %303 = vector.broadcast %cst_148 : f32 to vector<5x64xf32>
    %304 = arith.subf %303, %282 : vector<5x64xf32>
    %305 = arith.mulf %304, %282 : vector<5x64xf32>
    %306 = math.exp %305 : vector<5x64xf32>
    %307 = arith.mulf %302, %306 : vector<5x64xf32>
    %cst_149 = arith.constant 1.000000e+00 : f32
    %308 = vector.broadcast %cst_149 : f32 to vector<5x64xf32>
    %309 = arith.subf %308, %307 : vector<5x64xf32>
    %310 = arith.mulf %281, %309 : vector<5x64xf32>
    %cst_150 = arith.constant 1.000000e+00 : f32
    %311 = vector.broadcast %cst_150 : f32 to vector<5x64xf32>
    %312 = arith.addf %311, %310 : vector<5x64xf32>
    %313 = arith.mulf %274, %312 : vector<5x64xf32>
    %c1_151 = arith.constant 1 : index
    %c0_152 = arith.constant 0 : index
    %c0_153 = arith.constant 0 : index
    %314 = vector.load %arg10[%c1_151, %c0_152, %c0_153] : memref<2x64x32xf32, #tpu.memory_space<vmem>>, vector<1x64x32xf32>
    %315 = vector.shape_cast %314 : vector<1x64x32xf32> to vector<64x32xf32>
    %cst_154 = arith.constant dense<0.000000e+00> : vector<5x32xf32>
    %316 = tpu.matmul %313, %315, %cst_154 {dimension_numbers = #tpu.dot_dimension_numbers<[1], [0], [0], [1], [0, 0, 1, 1], [], []>} : vector<5x64xf32>, vector<64x32xf32>, vector<5x32xf32> -> vector<5x32xf32>
    %317 = vector.broadcast %170 : vector<1x32xf32> to vector<5x32xf32>
    %318 = arith.addf %316, %317 : vector<5x32xf32>
    %319 = arith.addf %245, %318 : vector<5x32xf32>
    %320 = vector.extract_strided_slice %319 {offsets = [0, 0], sizes = [1, 32], strides = [1, 1]} : vector<5x32xf32> to vector<1x32xf32>
    %c0_155 = arith.constant 0 : index
    %c0_156 = arith.constant 0 : index
    %321 = vector.load %arg11[%c0_155, %c0_156] : memref<2x32xf32, #tpu.memory_space<vmem>>, vector<1x32xf32>
    %c1_157 = arith.constant 1 : index
    %c0_158 = arith.constant 0 : index
    %322 = vector.load %arg11[%c1_157, %c0_158] : memref<2x32xf32, #tpu.memory_space<vmem>>, vector<1x32xf32>
    %cst_159 = arith.constant dense<0.000000e+00> : vector<1xf32>
    %323 = vector.multi_reduction <add>, %320, %cst_159 [1] : vector<1x32xf32> to vector<1xf32>
    %324 = vector.shape_cast %323 : vector<1xf32> to vector<1x1xf32>
    %cst_160 = arith.constant 3.200000e+01 : f32
    %325 = vector.broadcast %cst_160 : f32 to vector<1x1xf32>
    %326 = arith.divf %324, %325 : vector<1x1xf32>
    %327 = vector.broadcast %326 : vector<1x1xf32> to vector<1x32xf32>
    %328 = arith.subf %320, %327 : vector<1x32xf32>
    %329 = arith.mulf %328, %328 : vector<1x32xf32>
    %cst_161 = arith.constant dense<0.000000e+00> : vector<1xf32>
    %330 = vector.multi_reduction <add>, %329, %cst_161 [1] : vector<1x32xf32> to vector<1xf32>
    %331 = vector.shape_cast %330 : vector<1xf32> to vector<1x1xf32>
    %cst_162 = arith.constant 3.200000e+01 : f32
    %332 = vector.broadcast %cst_162 : f32 to vector<1x1xf32>
    %333 = arith.divf %331, %332 : vector<1x1xf32>
    %cst_163 = arith.constant 9.99999974E-6 : f32
    %334 = vector.broadcast %cst_163 : f32 to vector<1x1xf32>
    %335 = arith.addf %333, %334 : vector<1x1xf32>
    %336 = math.rsqrt %335 : vector<1x1xf32>
    %337 = vector.broadcast %336 : vector<1x1xf32> to vector<1x32xf32>
    %338 = arith.mulf %328, %337 : vector<1x32xf32>
    %339 = arith.mulf %338, %321 : vector<1x32xf32>
    %340 = arith.addf %339, %322 : vector<1x32xf32>
    %c0_164 = arith.constant 0 : index
    %c0_165 = arith.constant 0 : index
    %341 = vector.load %arg12[%c0_164, %c0_165] : memref<33x10xf32, #tpu.memory_space<vmem>>, vector<32x10xf32>
    %cst_166 = arith.constant dense<0.000000e+00> : vector<1x10xf32>
    %342 = tpu.matmul %340, %341, %cst_166 {dimension_numbers = #tpu.dot_dimension_numbers<[1], [0], [0], [1], [0, 0, 1, 1], [], []>} : vector<1x32xf32>, vector<32x10xf32>, vector<1x10xf32> -> vector<1x10xf32>
    %c32 = arith.constant 32 : index
    %c0_167 = arith.constant 0 : index
    %343 = vector.load %arg12[%c32, %c0_167] : memref<33x10xf32, #tpu.memory_space<vmem>>, vector<1x10xf32>
    %344 = arith.addf %342, %343 : vector<1x10xf32>
    %c0_168 = arith.constant 0 : index
    %c0_169 = arith.constant 0 : index
    %c0_170 = arith.constant 0 : index
    %345 = vector.load %arg13[%c0_168, %c0_169, %c0_170] : memref<1x1x10xf32, #tpu.memory_space<vmem>>, vector<1x1x10xf32>
    %346 = vector.shape_cast %345 : vector<1x1x10xf32> to vector<1x10xf32>
    %347 = vector.shape_cast %344 : vector<1x10xf32> to vector<1x1x10xf32>
    tpu.vector_store %arg13[%c0_168, %c0_169, %c0_170], %347 {strides = array<i32>} : memref<1x1x10xf32, #tpu.memory_space<vmem>>, vector<1x1x10xf32>,
    return
  }
  func.func @transform_0(%arg0: i32) -> (i32, i32, i32) {
    %c0_i32 = arith.constant 0 : i32
    %c0_i32_0 = arith.constant 0 : i32
    %c0_i32_1 = arith.constant 0 : i32
    return %arg0, %c0_i32, %c0_i32_0 : i32, i32, i32
  }
  func.func @transform_1(%arg0: i32) -> (i32, i32) {
    %c0_i32 = arith.constant 0 : i32
    %c0_i32_0 = arith.constant 0 : i32
    %c0_i32_1 = arith.constant 0 : i32
    return %c0_i32, %c0_i32_0 : i32, i32
  }
  func.func @transform_2(%arg0: i32) -> (i32, i32) {
    %c0_i32 = arith.constant 0 : i32
    %c0_i32_0 = arith.constant 0 : i32
    %c0_i32_1 = arith.constant 0 : i32
    return %c0_i32, %c0_i32_0 : i32, i32
  }
  func.func @transform_3(%arg0: i32) -> (i32, i32, i32, i32) {
    %c0_i32 = arith.constant 0 : i32
    %c0_i32_0 = arith.constant 0 : i32
    %c0_i32_1 = arith.constant 0 : i32
    %c0_i32_2 = arith.constant 0 : i32
    %c0_i32_3 = arith.constant 0 : i32
    return %c0_i32, %c0_i32_0, %c0_i32_1, %c0_i32_2 : i32, i32, i32, i32
  }
  func.func @transform_4(%arg0: i32) -> (i32, i32, i32, i32) {
    %c0_i32 = arith.constant 0 : i32
    %c0_i32_0 = arith.constant 0 : i32
    %c0_i32_1 = arith.constant 0 : i32
    %c0_i32_2 = arith.constant 0 : i32
    %c0_i32_3 = arith.constant 0 : i32
    return %c0_i32, %c0_i32_0, %c0_i32_1, %c0_i32_2 : i32, i32, i32, i32
  }
  func.func @transform_5(%arg0: i32) -> (i32, i32, i32, i32) {
    %c0_i32 = arith.constant 0 : i32
    %c0_i32_0 = arith.constant 0 : i32
    %c0_i32_1 = arith.constant 0 : i32
    %c0_i32_2 = arith.constant 0 : i32
    %c0_i32_3 = arith.constant 0 : i32
    return %c0_i32, %c0_i32_0, %c0_i32_1, %c0_i32_2 : i32, i32, i32, i32
  }
  func.func @transform_6(%arg0: i32) -> (i32, i32, i32) {
    %c0_i32 = arith.constant 0 : i32
    %c0_i32_0 = arith.constant 0 : i32
    %c0_i32_1 = arith.constant 0 : i32
    %c0_i32_2 = arith.constant 0 : i32
    return %c0_i32, %c0_i32_0, %c0_i32_1 : i32, i32, i32
  }
  func.func @transform_7(%arg0: i32) -> (i32, i32, i32) {
    %c0_i32 = arith.constant 0 : i32
    %c0_i32_0 = arith.constant 0 : i32
    %c0_i32_1 = arith.constant 0 : i32
    %c0_i32_2 = arith.constant 0 : i32
    return %c0_i32, %c0_i32_0, %c0_i32_1 : i32, i32, i32
  }
  func.func @transform_8(%arg0: i32) -> (i32, i32, i32) {
    %c0_i32 = arith.constant 0 : i32
    %c0_i32_0 = arith.constant 0 : i32
    %c0_i32_1 = arith.constant 0 : i32
    %c0_i32_2 = arith.constant 0 : i32
    return %c0_i32, %c0_i32_0, %c0_i32_1 : i32, i32, i32
  }
  func.func @transform_9(%arg0: i32) -> (i32, i32, i32) {
    %c0_i32 = arith.constant 0 : i32
    %c0_i32_0 = arith.constant 0 : i32
    %c0_i32_1 = arith.constant 0 : i32
    %c0_i32_2 = arith.constant 0 : i32
    return %c0_i32, %c0_i32_0, %c0_i32_1 : i32, i32, i32
  }
  func.func @transform_10(%arg0: i32) -> (i32, i32) {
    %c0_i32 = arith.constant 0 : i32
    %c0_i32_0 = arith.constant 0 : i32
    %c0_i32_1 = arith.constant 0 : i32
    return %c0_i32, %c0_i32_0 : i32, i32
  }
  func.func @transform_11(%arg0: i32) -> (i32, i32) {
    %c0_i32 = arith.constant 0 : i32
    %c0_i32_0 = arith.constant 0 : i32
    %c0_i32_1 = arith.constant 0 : i32
    return %c0_i32, %c0_i32_0 : i32, i32
  }
  func.func @transform_12(%arg0: i32) -> (i32, i32, i32) {
    %c0_i32 = arith.constant 0 : i32
    %c0_i32_0 = arith.constant 0 : i32
    %c0_i32_1 = arith.constant 0 : i32
    return %arg0, %c0_i32, %c0_i32_0 : i32, i32, i32
  }
}

</mosaic_0001>

<llo_original>
// kernel: vit_forward.1
$region0: #{vit_forward.1}
  #allocation0 [shape = 'u32[]', space=smem, size = 0x4, offset = 0x4, fixed_abs, tag = 'smem constant byte address 0x4 - core index']
  #allocation1 [shape = 'u32[144,128]{1,0:T(1,128)}', space=vmem, size = 0x12000, scoped, tag = 'internal scratch']
  %s0 = inlined_call_operand.vmem [shape: f32[2,5,256], index: 0, kind: input, shape index: {}]
  %s1 = inlined_call_operand.vmem [shape: f32[256,32], index: 1, kind: input, shape index: {}]
  %s2 = inlined_call_operand.vmem [shape: f32[5,32], index: 2, kind: input, shape index: {}]
  %s3 = inlined_call_operand.vmem [shape: f32[6,4,32,8], index: 3, kind: input, shape index: {}]
  %s4 = inlined_call_operand.vmem [shape: f32[6,4,1,8], index: 4, kind: input, shape index: {}]
  %s5 = inlined_call_operand.vmem [shape: f32[2,4,8,32], index: 5, kind: input, shape index: {}]
  %s6 = inlined_call_operand.vmem [shape: f32[2,6,32], index: 6, kind: input, shape index: {}]
  %s7 = inlined_call_operand.vmem [shape: f32[2,32,64], index: 7, kind: input, shape index: {}]
  %s8 = inlined_call_operand.vmem [shape: f32[2,1,64], index: 8, kind: input, shape index: {}]
  %s9 = inlined_call_operand.vmem [shape: f32[2,64,32], index: 9, kind: input, shape index: {}]
  %s10 = inlined_call_operand.vmem [shape: f32[2,32], index: 10, kind: input, shape index: {}]
  %s11 = inlined_call_operand.vmem [shape: f32[33,10], index: 11, kind: input, shape index: {}]
  %s12 = inlined_call_operand.hbm [shape: f32[2,1,10], index: 12, kind: output, shape index: {}]
  %s13 = sld [smem:[#allocation0]]
  $region81: #{vit_forward.1} parent=0
    _
  %s15 = ssub.s32 1, %s13
  %s16 = scalar_select 0, %s15, %s13
  $region1: #{vit_forward.1} parent=0
    #allocation2 [shape = 'u8[1024]{0}', space=vmem, size = 0x400, scoped, tag = 'output window, operand 0']
    #allocation3 [shape = 's32[2]{0}', space=sflag, size = 0x8, scoped, tag = 'scoped memory for vit_forward.1']
    %17 = vsyncpa [#allocation3], 0
    %s18 = scalar_lea.sflag [#allocation3], 1
    %19 = vsyncpa %s18, 0
    loop: start=0, step=1, limit=4
    $region2: #{vit_forward.1} parent=1 // loop_pre_header
      _
    $region3: #{vit_forward.1} parent=1 // loop_header
      %s21 = sphi 0, %s25
      %p22 = scmp.ge.s32.totalorder %s21, 4
      %s31 = sphi 0, %s33
      %s34 = sphi 0, %s31
      %s35 = sphi 0, %s34
      %s51 = sphi 0, %s35
      %s55 = sphi 0, %s55
      %s57 = sphi 0, %s55
      %s58 = sphi 0, %s57
      %s72 = sphi 0, %s58
      %s76 = sphi 0, %s76
      %s78 = sphi 0, %s76
      %s79 = sphi 0, %s78
      %s93 = sphi 0, %s79
      %s97 = sphi 0, %s97
      %s99 = sphi 0, %s97
      %s100 = sphi 0, %s99
      %s114 = sphi 0, %s100
      %s118 = sphi 0, %s118
      %s120 = sphi 0, %s118
      %s121 = sphi 0, %s120
      %s135 = sphi 0, %s121
      %s139 = sphi 0, %s139
      %s141 = sphi 0, %s139
      %s142 = sphi 0, %s141
      %s156 = sphi 0, %s142
      %s160 = sphi 0, %s160
      %s162 = sphi 0, %s160
      %s163 = sphi 0, %s162
      %s177 = sphi 0, %s163
      %s181 = sphi 0, %s181
      %s183 = sphi 0, %s181
      %s184 = sphi 0, %s183
      %s198 = sphi 0, %s184
      %s202 = sphi 0, %s202
      %s204 = sphi 0, %s202
      %s205 = sphi 0, %s204
      %s219 = sphi 0, %s205
      %s223 = sphi 0, %s223
      %s225 = sphi 0, %s223
      %s226 = sphi 0, %s225
      %s240 = sphi 0, %s226
      %s244 = sphi 0, %s244
      %s246 = sphi 0, %s244
      %s247 = sphi 0, %s246
      %s261 = sphi 0, %s247
      %s265 = sphi 0, %s265
      %s267 = sphi 0, %s265
      %s268 = sphi 0, %s267
      %s282 = sphi 0, %s268
      %s288 = sphi 0, %s290
      %s291 = sphi 0, %s288
      %s292 = sphi 0, %s291
      %s308 = sphi 0, %s292
    $region4: #{vit_forward.1} parent=1 // loop_header_branch
      %24 = sbr.rel (%p22) target = $region8
    $region5: #{vit_forward.1} parent=1 // loop_body
      %s26 = ssub.s32 %s21, 1
      %s27 = ssub.s32 %s21, 2
      %s28 = sadd.s32 %s21, 1
      %s29 = ssub.s32 %s21, %s28
      %p30 = scmp.eq.s32.totalorder %s29, 0
      %s32 = sadd.s32 %s31, 1
      %s33 = scalar_select %p30, %s31, %s32
      %p36 = pneg %p30
      %p37 = scmp.eq.s32.totalorder %s21, 1
      %p38 = por %p36, %p37
      %p39 = scmp.ne.s32.totalorder %s31, %s34
      %p40 = scmp.eq.s32.totalorder %s21, 0
      %p41 = por %p39, %p40
      %p42 = scmp.ne.s32.totalorder %s31, %s34
      %p43 = scmp.eq.s32.totalorder %s26, 1
      %p44 = por %p42, %p43
      %p45 = scmp.ne.s32.totalorder %s34, %s35
      %p46 = scmp.eq.s32.totalorder %s26, 0
      %p47 = por %p45, %p46
      %p48 = scmp.ne.s32.totalorder %s34, %s35
      %p49 = scmp.eq.s32.totalorder %s27, 1
      %p50 = por %p48, %p49
      %p52 = scmp.ne.s32.totalorder %s35, %s51
      %p53 = scmp.eq.s32.totalorder %s27, 0
      %p54 = por %p52, %p53
      %s56 = sadd.s32 %s55, 1
      %p59 = scmp.eq.s32.totalorder %s21, 1
      %p60 = scmp.ne.s32.totalorder %s55, %s57
      %p61 = scmp.eq.s32.totalorder %s21, 0
      %p62 = por %p60, %p61
      %p63 = scmp.ne.s32.totalorder %s55, %s57
      %p64 = scmp.eq.s32.totalorder %s26, 1
      %p65 = por %p63, %p64
      %p66 = scmp.ne.s32.totalorder %s57, %s58
      %p67 = scmp.eq.s32.totalorder %s26, 0
      %p68 = por %p66, %p67
      %p69 = scmp.ne.s32.totalorder %s57, %s58
      %p70 = scmp.eq.s32.totalorder %s27, 1
      %p71 = por %p69, %p70
      %p73 = scmp.ne.s32.totalorder %s58, %s72
      %p74 = scmp.eq.s32.totalorder %s27, 0
      %p75 = por %p73, %p74
      %s77 = sadd.s32 %s76, 1
      %p80 = scmp.eq.s32.totalorder %s21, 1
      %p81 = scmp.ne.s32.totalorder %s76, %s78
      %p82 = scmp.eq.s32.totalorder %s21, 0
      %p83 = por %p81, %p82
      %p84 = scmp.ne.s32.totalorder %s76, %s78
      %p85 = scmp.eq.s32.totalorder %s26, 1
      %p86 = por %p84, %p85
      %p87 = scmp.ne.s32.totalorder %s78, %s79
      %p88 = scmp.eq.s32.totalorder %s26, 0
      %p89 = por %p87, %p88
      %p90 = scmp.ne.s32.totalorder %s78, %s79
      %p91 = scmp.eq.s32.totalorder %s27, 1
      %p92 = por %p90, %p91
      %p94 = scmp.ne.s32.totalorder %s79, %s93
      %p95 = scmp.eq.s32.totalorder %s27, 0
      %p96 = por %p94, %p95
      %s98 = sadd.s32 %s97, 1
      %p101 = scmp.eq.s32.totalorder %s21, 1
      %p102 = scmp.ne.s32.totalorder %s97, %s99
      %p103 = scmp.eq.s32.totalorder %s21, 0
      %p104 = por %p102, %p103
      %p105 = scmp.ne.s32.totalorder %s97, %s99
      %p106 = scmp.eq.s32.totalorder %s26, 1
      %p107 = por %p105, %p106
      %p108 = scmp.ne.s32.totalorder %s99, %s100
      %p109 = scmp.eq.s32.totalorder %s26, 0
      %p110 = por %p108, %p109
      %p111 = scmp.ne.s32.totalorder %s99, %s100
      %p112 = scmp.eq.s32.totalorder %s27, 1
      %p113 = por %p111, %p112
      %p115 = scmp.ne.s32.totalorder %s100, %s114
      %p116 = scmp.eq.s32.totalorder %s27, 0
      %p117 = por %p115, %p116
      %s119 = sadd.s32 %s118, 1
      %p122 = scmp.eq.s32.totalorder %s21, 1
      %p123 = scmp.ne.s32.totalorder %s118, %s120
      %p124 = scmp.eq.s32.totalorder %s21, 0
      %p125 = por %p123, %p124
      %p126 = scmp.ne.s32.totalorder %s118, %s120
      %p127 = scmp.eq.s32.totalorder %s26, 1
      %p128 = por %p126, %p127
      %p129 = scmp.ne.s32.totalorder %s120, %s121
      %p130 = scmp.eq.s32.totalorder %s26, 0
      %p131 = por %p129, %p130
      %p132 = scmp.ne.s32.totalorder %s120, %s121
      %p133 = scmp.eq.s32.totalorder %s27, 1
      %p134 = por %p132, %p133
      %p136 = scmp.ne.s32.totalorder %s121, %s135
      %p137 = scmp.eq.s32.totalorder %s27, 0
      %p138 = por %p136, %p137
      %s140 = sadd.s32 %s139, 1
      %p143 = scmp.eq.s32.totalorder %s21, 1
      %p144 = scmp.ne.s32.totalorder %s139, %s141
      %p145 = scmp.eq.s32.totalorder %s21, 0
      %p146 = por %p144, %p145
      %p147 = scmp.ne.s32.totalorder %s139, %s141
      %p148 = scmp.eq.s32.totalorder %s26, 1
      %p149 = por %p147, %p148
      %p150 = scmp.ne.s32.totalorder %s141, %s142
      %p151 = scmp.eq.s32.totalorder %s26, 0
      %p152 = por %p150, %p151
      %p153 = scmp.ne.s32.totalorder %s141, %s142
      %p154 = scmp.eq.s32.totalorder %s27, 1
      %p155 = por %p153, %p154
      %p157 = scmp.ne.s32.totalorder %s142, %s156
      %p158 = scmp.eq.s32.totalorder %s27, 0
      %p159 = por %p157, %p158
      %s161 = sadd.s32 %s160, 1
      %p164 = scmp.eq.s32.totalorder %s21, 1
      %p165 = scmp.ne.s32.totalorder %s160, %s162
      %p166 = scmp.eq.s32.totalorder %s21, 0
      %p167 = por %p165, %p166
      %p168 = scmp.ne.s32.totalorder %s160, %s162
      %p169 = scmp.eq.s32.totalorder %s26, 1
      %p170 = por %p168, %p169
      %p171 = scmp.ne.s32.totalorder %s162, %s163
      %p172 = scmp.eq.s32.totalorder %s26, 0
      %p173 = por %p171, %p172
      %p174 = scmp.ne.s32.totalorder %s162, %s163
      %p175 = scmp.eq.s32.totalorder %s27, 1
      %p176 = por %p174, %p175
      %p178 = scmp.ne.s32.totalorder %s163, %s177
      %p179 = scmp.eq.s32.totalorder %s27, 0
      %p180 = por %p178, %p179
      %s182 = sadd.s32 %s181, 1
      %p185 = scmp.eq.s32.totalorder %s21, 1
      %p186 = scmp.ne.s32.totalorder %s181, %s183
      %p187 = scmp.eq.s32.totalorder %s21, 0
      %p188 = por %p186, %p187
      %p189 = scmp.ne.s32.totalorder %s181, %s183
      %p190 = scmp.eq.s32.totalorder %s26, 1
      %p191 = por %p189, %p190
      %p192 = scmp.ne.s32.totalorder %s183, %s184
      %p193 = scmp.eq.s32.totalorder %s26, 0
      %p194 = por %p192, %p193
      %p195 = scmp.ne.s32.totalorder %s183, %s184
      %p196 = scmp.eq.s32.totalorder %s27, 1
      %p197 = por %p195, %p196
      %p199 = scmp.ne.s32.totalorder %s184, %s198
      %p200 = scmp.eq.s32.totalorder %s27, 0
      %p201 = por %p199, %p200
      %s203 = sadd.s32 %s202, 1
      %p206 = scmp.eq.s32.totalorder %s21, 1
      %p207 = scmp.ne.s32.totalorder %s202, %s204
      %p208 = scmp.eq.s32.totalorder %s21, 0
      %p209 = por %p207, %p208
      %p210 = scmp.ne.s32.totalorder %s202, %s204
      %p211 = scmp.eq.s32.totalorder %s26, 1
      %p212 = por %p210, %p211
      %p213 = scmp.ne.s32.totalorder %s204, %s205
      %p214 = scmp.eq.s32.totalorder %s26, 0
      %p215 = por %p213, %p214
      %p216 = scmp.ne.s32.totalorder %s204, %s205
      %p217 = scmp.eq.s32.totalorder %s27, 1
      %p218 = por %p216, %p217
      %p220 = scmp.ne.s32.totalorder %s205, %s219
      %p221 = scmp.eq.s32.totalorder %s27, 0
      %p222 = por %p220, %p221
      %s224 = sadd.s32 %s223, 1
      %p227 = scmp.eq.s32.totalorder %s21, 1
      %p228 = scmp.ne.s32.totalorder %s223, %s225
      %p229 = scmp.eq.s32.totalorder %s21, 0
      %p230 = por %p228, %p229
      %p231 = scmp.ne.s32.totalorder %s223, %s225
      %p232 = scmp.eq.s32.totalorder %s26, 1
      %p233 = por %p231, %p232
      %p234 = scmp.ne.s32.totalorder %s225, %s226
      %p235 = scmp.eq.s32.totalorder %s26, 0
      %p236 = por %p234, %p235
      %p237 = scmp.ne.s32.totalorder %s225, %s226
      %p238 = scmp.eq.s32.totalorder %s27, 1
      %p239 = por %p237, %p238
      %p241 = scmp.ne.s32.totalorder %s226, %s240
      %p242 = scmp.eq.s32.totalorder %s27, 0
      %p243 = por %p241, %p242
      %s245 = sadd.s32 %s244, 1
      %p248 = scmp.eq.s32.totalorder %s21, 1
      %p249 = scmp.ne.s32.totalorder %s244, %s246
      %p250 = scmp.eq.s32.totalorder %s21, 0
      %p251 = por %p249, %p250
      %p252 = scmp.ne.s32.totalorder %s244, %s246
      %p253 = scmp.eq.s32.totalorder %s26, 1
      %p254 = por %p252, %p253
      %p255 = scmp.ne.s32.totalorder %s246, %s247
      %p256 = scmp.eq.s32.totalorder %s26, 0
      %p257 = por %p255, %p256
      %p258 = scmp.ne.s32.totalorder %s246, %s247
      %p259 = scmp.eq.s32.totalorder %s27, 1
      %p260 = por %p258, %p259
      %p262 = scmp.ne.s32.totalorder %s247, %s261
      %p263 = scmp.eq.s32.totalorder %s27, 0
      %p264 = por %p262, %p263
      %s266 = sadd.s32 %s265, 1
      %p269 = scmp.eq.s32.totalorder %s21, 1
      %p270 = scmp.ne.s32.totalorder %s265, %s267
      %p271 = scmp.eq.s32.totalorder %s21, 0
      %p272 = por %p270, %p271
      %p273 = scmp.ne.s32.totalorder %s265, %s267
      %p274 = scmp.eq.s32.totalorder %s26, 1
      %p275 = por %p273, %p274
      %p276 = scmp.ne.s32.totalorder %s267, %s268
      %p277 = scmp.eq.s32.totalorder %s26, 0
      %p278 = por %p276, %p277
      %p279 = scmp.ne.s32.totalorder %s267, %s268
      %p280 = scmp.eq.s32.totalorder %s27, 1
      %p281 = por %p279, %p280
      %p283 = scmp.ne.s32.totalorder %s268, %s282
      %p284 = scmp.eq.s32.totalorder %s27, 0
      %p285 = por %p283, %p284
      %s286 = ssub.s32 %s21, %s28
      %p287 = scmp.eq.s32.totalorder %s286, 0
      %s289 = sadd.s32 %s288, 1
      %s290 = scalar_select %p287, %s288, %s289
      %p293 = pneg %p287
      %p294 = scmp.eq.s32.totalorder %s21, 1
      %p295 = por %p293, %p294
      %p296 = scmp.ne.s32.totalorder %s288, %s291
      %p297 = scmp.eq.s32.totalorder %s21, 0
      %p298 = por %p296, %p297
      %p299 = scmp.ne.s32.totalorder %s288, %s291
      %p300 = scmp.eq.s32.totalorder %s26, 1
      %p301 = por %p299, %p300
      %p302 = scmp.ne.s32.totalorder %s291, %s292
      %p303 = scmp.eq.s32.totalorder %s26, 0
      %p304 = por %p302, %p303
      %p305 = scmp.ne.s32.totalorder %s291, %s292
      %p306 = scmp.eq.s32.totalorder %s27, 1
      %p307 = por %p305, %p306
      %p309 = scmp.ne.s32.totalorder %s292, %s308
      %p310 = scmp.eq.s32.totalorder %s27, 0
      %p311 = por %p309, %p310
      %p312 = scmp.le.s32.totalorder 1, %s21
      %p313 = scmp.lt.s32.totalorder %s21, 3
      %p314 = pnand %p312, %p313
      %p315 = pneg %p314
      // Predicated region
      $region9: #{vit_forward.1} parent=5 // pred_check
        _
      $region10: #{vit_forward.1} parent=5 // pred_check_branch
        %317 = sbr.rel (%p314) target = $region12
      $region11: #{vit_forward.1} parent=5 // pred_region
        %s318 = ssub.s32 %s21, 1
        // Predicated region
        $region13: #{vit_forward.1} parent=11 // pred_check
          %p319 = pneg %p68
        $region14: #{vit_forward.1} parent=11 // pred_check_branch
          %321 = sbr.rel (%p319) target = $region16
        $region15: #{vit_forward.1} parent=11 // pred_region
          _
        $region16: #{vit_forward.1} parent=11 // pred_fallthru
          _
        // Predicated region
        $region17: #{vit_forward.1} parent=11 // pred_check
          %p322 = pneg %p89
        $region18: #{vit_forward.1} parent=11 // pred_check_branch
          %324 = sbr.rel (%p322) target = $region20
        $region19: #{vit_forward.1} parent=11 // pred_region
          _
        $region20: #{vit_forward.1} parent=11 // pred_fallthru
          _
        // Predicated region
        $region21: #{vit_forward.1} parent=11 // pred_check
          %p325 = pneg %p110
        $region22: #{vit_forward.1} parent=11 // pred_check_branch
          %327 = sbr.rel (%p325) target = $region24
        $region23: #{vit_forward.1} parent=11 // pred_region
          _
        $region24: #{vit_forward.1} parent=11 // pred_fallthru
          _
        // Predicated region
        $region25: #{vit_forward.1} parent=11 // pred_check
          %p328 = pneg %p131
        $region26: #{vit_forward.1} parent=11 // pred_check_branch
          %330 = sbr.rel (%p328) target = $region28
        $region27: #{vit_forward.1} parent=11 // pred_region
          _
        $region28: #{vit_forward.1} parent=11 // pred_fallthru
          _
        // Predicated region
        $region29: #{vit_forward.1} parent=11 // pred_check
          %p331 = pneg %p152
        $region30: #{vit_forward.1} parent=11 // pred_check_branch
          %333 = sbr.rel (%p331) target = $region32
        $region31: #{vit_forward.1} parent=11 // pred_region
          _
        $region32: #{vit_forward.1} parent=11 // pred_fallthru
          _
        // Predicated region
        $region33: #{vit_forward.1} parent=11 // pred_check
          %p334 = pneg %p173
        $region34: #{vit_forward.1} parent=11 // pred_check_branch
          %336 = sbr.rel (%p334) target = $region36
        $region35: #{vit_forward.1} parent=11 // pred_region
          _
        $region36: #{vit_forward.1} parent=11 // pred_fallthru
          _
        // Predicated region
        $region37: #{vit_forward.1} parent=11 // pred_check
          %p337 = pneg %p194
        $region38: #{vit_forward.1} parent=11 // pred_check_branch
          %339 = sbr.rel (%p337) target = $region40
        $region39: #{vit_forward.1} parent=11 // pred_region
          _
        $region40: #{vit_forward.1} parent=11 // pred_fallthru
          _
        // Predicated region
        $region41: #{vit_forward.1} parent=11 // pred_check
          %p340 = pneg %p215
        $region42: #{vit_forward.1} parent=11 // pred_check_branch
          %342 = sbr.rel (%p340) target = $region44
        $region43: #{vit_forward.1} parent=11 // pred_region
          _
        $region44: #{vit_forward.1} parent=11 // pred_fallthru
          _
        // Predicated region
        $region45: #{vit_forward.1} parent=11 // pred_check
          %p343 = pneg %p236
        $region46: #{vit_forward.1} parent=11 // pred_check_branch
          %345 = sbr.rel (%p343) target = $region48
        $region47: #{vit_forward.1} parent=11 // pred_region
          _
        $region48: #{vit_forward.1} parent=11 // pred_fallthru
          _
        // Predicated region
        $region49: #{vit_forward.1} parent=11 // pred_check
          %p346 = pneg %p257
        $region50: #{vit_forward.1} parent=11 // pred_check_branch
          %348 = sbr.rel (%p346) target = $region52
        $region51: #{vit_forward.1} parent=11 // pred_region
          _
        $region52: #{vit_forward.1} parent=11 // pred_fallthru
          _
        // Predicated region
        $region53: #{vit_forward.1} parent=11 // pred_check
          %p349 = pneg %p278
        $region54: #{vit_forward.1} parent=11 // pred_check_branch
          %351 = sbr.rel (%p349) target = $region56
        $region55: #{vit_forward.1} parent=11 // pred_region
          _
        $region56: #{vit_forward.1} parent=11 // pred_fallthru
          _
      $region12: #{vit_forward.1} parent=5 // pred_fallthru
        _
      %p352 = scmp.lt.s32.totalorder %s21, 2
      // Predicated region
      $region57: #{vit_forward.1} parent=5 // pred_check
        %p353 = pneg %p352
      $region58: #{vit_forward.1} parent=5 // pred_check_branch
        %355 = sbr.rel (%p353) target = $region60
      $region59: #{vit_forward.1} parent=5 // pred_region
        // Predicated region
        $region61: #{vit_forward.1} parent=59 // pred_check
          %p356 = pneg %p41
        $region62: #{vit_forward.1} parent=59 // pred_check_branch
          %358 = sbr.rel (%p356) target = $region64
        $region63: #{vit_forward.1} parent=59 // pred_region
          %p359 = scmp.lt.s32.totalorder %s21, 1
          %s360 = scalar_select %p359, %s21, 1
          %s361 = smul.addr %s360, 2
          %s362 = smul.addr %s361, 8
          %s363 = scalar_lea.vmem %s0, %s362
        $region64: #{vit_forward.1} parent=59 // pred_fallthru
          _
      $region60: #{vit_forward.1} parent=5 // pred_fallthru
        _
      %p364 = scmp.le.s32.totalorder 1, %s21
      %p365 = scmp.lt.s32.totalorder %s21, 3
      %p366 = pnand %p364, %p365
      %p367 = pneg %p366
      // Predicated region
      $region65: #{vit_forward.1} parent=5 // pred_check
        _
      $region66: #{vit_forward.1} parent=5 // pred_check_branch
        %369 = sbr.rel (%p366) target = $region68
      $region67: #{vit_forward.1} parent=5 // pred_region
        %s370 = ssub.s32 %s21, 1
        %p371 = scmp.lt.s32.totalorder %s26, 1
        %s372 = scalar_select %p371, %s26, 1
        %s373 = smul.addr %s372, 2
        %s374 = smul.addr %s373, 8
        %s375 = scalar_lea.vmem %s0, %s374
        %p376 = pneg %p47
        %p377 = pneg %p44
        %p378 = pneg %p68
        %p379 = pneg %p65
        %p380 = pneg %p89
        %p381 = pneg %p86
        %p382 = pneg %p110
        %p383 = pneg %p107
        %p384 = pneg %p131
        %p385 = pneg %p128
        %p386 = pneg %p152
        %p387 = pneg %p149
        %p388 = pneg %p173
        %p389 = pneg %p170
        %p390 = pneg %p194
        %p391 = pneg %p191
        %p392 = pneg %p215
        %p393 = pneg %p212
        %p394 = pneg %p236
        %p395 = pneg %p233
        %p396 = pneg %p257
        %p397 = pneg %p254
        %p398 = pneg %p278
        %p399 = pneg %p275
        %p400 = pneg %p304
        %p401 = pneg %p301
        %s402 = sand.u32 %s291, 1
        %s403 = scalar_lea.sflag [#allocation3], %s402
        %s404 = sand.u32 %s291, 1
        %s405 = scalar_lea.vmem [#allocation2], %s404
        %p406 = scmp.lt.s32.totalorder %s26, 1
        %s407 = scalar_select %p406, %s26, 1
        %s408 = smul.addr %s407, 2
        %s409 = smul.addr %s408, 8
        %s410 = scalar_lea.vmem %s0, %s409
        %v411 = vld [vmem:[%s410] sm:$0x1f]
        %v412 = vld [vmem:[%s410 + $0x8] sm:$0x1f]
        %v413 = vld [vmem:[%s1] sm:$0xff]
        %v414 = vld [vmem:[%s1 + $0x8] sm:$0xff]
        %v415 = vld [vmem:[%s1 + $0x10] sm:$0xff]
        %v416 = vld [vmem:[%s1 + $0x18] sm:$0xff]
        %v417 = vld [vmem:[%s1 + $0x20] sm:$0xff]
        %v418 = vld [vmem:[%s1 + $0x28] sm:$0xff]
        %v419 = vld [vmem:[%s1 + $0x30] sm:$0xff]
        %v420 = vld [vmem:[%s1 + $0x38] sm:$0xff]
        %v421 = vld [vmem:[%s1 + $0x40] sm:$0xff]
        %v422 = vld [vmem:[%s1 + $0x48] sm:$0xff]
        %v423 = vld [vmem:[%s1 + $0x50] sm:$0xff]
        %v424 = vld [vmem:[%s1 + $0x58] sm:$0xff]
        %v425 = vld [vmem:[%s1 + $0x60] sm:$0xff]
        %v426 = vld [vmem:[%s1 + $0x68] sm:$0xff]
        %v427 = vld [vmem:[%s1 + $0x70] sm:$0xff]
        %v428 = vld [vmem:[%s1 + $0x78] sm:$0xff]
        %v429 = vld [vmem:[%s1 + $0x80] sm:$0xff]
        %v430 = vld [vmem:[%s1 + $0x88] sm:$0xff]
        %v431 = vld [vmem:[%s1 + $0x90] sm:$0xff]
        %v432 = vld [vmem:[%s1 + $0x98] sm:$0xff]
        %v433 = vld [vmem:[%s1 + $0xa0] sm:$0xff]
        %v434 = vld [vmem:[%s1 + $0xa8] sm:$0xff]
        %v435 = vld [vmem:[%s1 + $0xb0] sm:$0xff]
        %v436 = vld [vmem:[%s1 + $0xb8] sm:$0xff]
        %v437 = vld [vmem:[%s1 + $0xc0] sm:$0xff]
        %v438 = vld [vmem:[%s1 + $0xc8] sm:$0xff]
        %v439 = vld [vmem:[%s1 + $0xd0] sm:$0xff]
        %v440 = vld [vmem:[%s1 + $0xd8] sm:$0xff]
        %v441 = vld [vmem:[%s1 + $0xe0] sm:$0xff]
        %v442 = vld [vmem:[%s1 + $0xe8] sm:$0xff]
        %v443 = vld [vmem:[%s1 + $0xf0] sm:$0xff]
        %v444 = vld [vmem:[%s1 + $0xf8] sm:$0xff]
        %v445 = vld [vmem:[%s2] sm:$0x1f]
        %446 = vmatprep.subr.mxu0 0.0
        %447 = vmatpush1.msra.mxu0 %v413
        %448 = vmatprep.subr.mxu0 0.0
        %449 = vmatpush1.msra.mxu0 %v414
        %450 = vmatprep.subr.mxu0 0.0
        %451 = vmatpush1.msra.mxu0 %v415
        %452 = vmatprep.subr.mxu0 0.0
        %453 = vmatpush1.msra.mxu0 %v416
        %454 = vmatprep.subr.mxu0 0.0
        %455 = vmatpush1.msra.mxu0 %v417
        %456 = vmatprep.subr.mxu0 0.0
        %457 = vmatpush1.msra.mxu0 %v418
        %458 = vmatprep.subr.mxu0 0.0
        %459 = vmatpush1.msra.mxu0 %v419
        %460 = vmatprep.subr.mxu0 0.0
        %461 = vmatpush1.msra.mxu0 %v420
        %462 = vmatprep.subr.mxu0 0.0
        %463 = vmatpush1.msra.mxu0 %v421
        %464 = vmatprep.subr.mxu0 0.0
        %465 = vmatpush1.msra.mxu0 %v422
        %466 = vmatprep.subr.mxu0 0.0
        %467 = vmatpush1.msra.mxu0 %v423
        %468 = vmatprep.subr.mxu0 0.0
        %469 = vmatpush1.msra.mxu0 %v424
        %470 = vmatprep.subr.mxu0 0.0
        %471 = vmatpush1.msra.mxu0 %v425
        %472 = vmatprep.subr.mxu0 0.0
        %473 = vmatpush1.msra.mxu0 %v426
        %474 = vmatprep.subr.mxu0 0.0
        %475 = vmatpush1.msra.mxu0 %v427
        %476 = vmatprep.subr.mxu0 0.0
        %477 = vmatpush1.msra.mxu0 %v428
        %478 = vmatprep.subr.mxu0 0.0
        %479 = vmatpush1.msra.mxu0 %v429
        %480 = vmatprep.subr.mxu0 0.0
        %481 = vmatpush1.msra.mxu0 %v430
        %482 = vmatprep.subr.mxu0 0.0
        %483 = vmatpush1.msra.mxu0 %v431
        %484 = vmatprep.subr.mxu0 0.0
        %485 = vmatpush1.msra.mxu0 %v432
        %486 = vmatprep.subr.mxu0 0.0
        %487 = vmatpush1.msra.mxu0 %v433
        %488 = vmatprep.subr.mxu0 0.0
        %489 = vmatpush1.msra.mxu0 %v434
        %490 = vmatprep.subr.mxu0 0.0
        %491 = vmatpush1.msra.mxu0 %v435
        %492 = vmatprep.subr.mxu0 0.0
        %493 = vmatpush1.msra.mxu0 %v436
        %494 = vmatprep.subr.mxu0 0.0
        %495 = vmatpush1.msra.mxu0 %v437
        %496 = vmatprep.subr.mxu0 0.0
        %497 = vmatpush1.msra.mxu0 %v438
        %498 = vmatprep.subr.mxu0 0.0
        %499 = vmatpush1.msra.mxu0 %v439
        %500 = vmatprep.subr.mxu0 0.0
        %501 = vmatpush1.msra.mxu0 %v440
        %502 = vmatprep.subr.mxu0 0.0
        %503 = vmatpush1.msra.mxu0 %v441
        %504 = vmatprep.subr.mxu0 0.0
        %505 = vmatpush1.msra.mxu0 %v442
        %506 = vmatprep.subr.mxu0 0.0
        %507 = vmatpush1.msra.mxu0 %v443
        %508 = vmatprep.subr.mxu0 0.0
        %509 = vmatpush1.msra.mxu0 %v444
        %510 = vmatprep.mubr.f32.mxu0 %v412
        %511 = vmatmul.mubr.f32.gmra.mrb[0].mxu0 %v411
        %v512 = vpop.f32.mrb[0].mxu0
        %v513 = vadd.f32 %v445, %v512
        %v514 = vpop.f32.mrb[0].mxu0
        %515 = vdwg.mxu0
        %v516 = vld [vmem:[%s6] sm:$0x3f]
        %vm517 = vcmask 258048
        %v518 = vsel %vm517, %v513, 0.0
        %519 = vadd.xlane.f32.xlu0 %v518
        %v520 = vpop.xlane.xlu0 %519
        %v521 = vrcp.pop 32.0
        %v522 = vmul.f32 %v520, %v521
        %v523 = vsub.f32 %v513, %v522
        %v524 = vmul.f32 %v523, %v523
        %v525 = vsel %vm517, %v524, 0.0
        %526 = vadd.xlane.f32.xlu0 %v525
        %v527 = vpop.xlane.xlu0 %526
        %v528 = vmul.f32 %v527, %v521
        %v529 = vadd.f32 %v528, 1e-05
        %v530 = vrsqrt.pop %v529
        %v531 = vmul.f32 %v523, %v530
        %v532 = vlaneseq
        %v533 = vshrl.u32 %v532, 7
        %v534 = vsub.s32 0, %v533
        %v535 = vrot.slane %v516, %v534
        %v536 = vmul.f32 %v531, %v535
        %v537 = vlaneseq
        %v538 = vshrl.u32 %v537, 7
        %v539 = vsub.s32 1, %v538
        %v540 = vrot.slane %v516, %v539
        %v541 = vadd.f32 %v536, %v540
        %v542 = vld [vmem:[%s3] sm:$0xff]
        %v543 = vld [vmem:[%s3 + $0x8] sm:$0xff]
        %v544 = vld [vmem:[%s3 + $0x10] sm:$0xff]
        %v545 = vld [vmem:[%s3 + $0x18] sm:$0xff]
        %v546 = vld [vmem:[%s3 + $0x20] sm:$0xff]
        %v547 = vld [vmem:[%s3 + $0x28] sm:$0xff]
        %v548 = vld [vmem:[%s3 + $0x30] sm:$0xff]
        %v549 = vld [vmem:[%s3 + $0x38] sm:$0xff]
        %v550 = vld [vmem:[%s3 + $0x40] sm:$0xff]
        %v551 = vld [vmem:[%s3 + $0x48] sm:$0xff]
        %v552 = vld [vmem:[%s3 + $0x50] sm:$0xff]
        %v553 = vld [vmem:[%s3 + $0x58] sm:$0xff]
        %v554 = vld [vmem:[%s3 + $0x60] sm:$0xff]
        %v555 = vld [vmem:[%s3 + $0x68] sm:$0xff]
        %v556 = vld [vmem:[%s3 + $0x70] sm:$0xff]
        %v557 = vld [vmem:[%s3 + $0x78] sm:$0xff]
        %v558 = vld [vmem:[%s4] sm:$0x1]
        %v559 = vld [vmem:[%s4 + $0x1] sm:$0x1]
        %v560 = vld [vmem:[%s4 + $0x2] sm:$0x1]
        %v561 = vld [vmem:[%s4 + $0x3] sm:$0x1]
        %v566 = vlaneseq
        %v567 = vshrl.u32 %v566, 7
        %v568 = vsub.s32 0, %v567
        %v569 = vrot.slane %v558, %v568
        %v570 = vlaneseq
        %v571 = vshrl.u32 %v570, 7
        %v572 = vsub.s32 0, %v571
        %v573 = vrot.slane %v559, %v572
        %v574 = vlaneseq
        %v575 = vshrl.u32 %v574, 7
        %v576 = vsub.s32 0, %v575
        %v577 = vrot.slane %v560, %v576
        %v578 = vlaneseq
        %v579 = vshrl.u32 %v578, 7
        %v580 = vsub.s32 0, %v579
        %v581 = vrot.slane %v561, %v580
        %vm586 = vcmask 261120
        %v588 = vsel %vm586, %v541, 0
        %590 = vmatprep.subr.mxu0 0.0
        %591 = vmatpush1.msra.mxu0 %v542
        %592 = vmatprep.subr.mxu0 0.0
        %593 = vmatpush1.msra.mxu0 %v543
        %594 = vmatprep.subr.mxu0 0.0
        %595 = vmatpush1.msra.mxu0 %v544
        %596 = vmatprep.subr.mxu0 0.0
        %597 = vmatpush1.msra.mxu0 %v545
        %598 = vmatprep.subr.mxu0 0.0
        %599 = vmatpush1.msra.mxu0 0.0
        %600 = vmatprep.subr.mxu0 0.0
        %601 = vmatpush1.msra.mxu0 0.0
        %602 = vmatprep.subr.mxu0 0.0
        %603 = vmatpush1.msra.mxu0 0.0
        %604 = vmatprep.subr.mxu0 0.0
        %605 = vmatpush1.msra.mxu0 0.0
        %606 = vmatprep.subr.mxu0 0.0
        %607 = vmatpush1.msra.mxu0 0.0
        %608 = vmatprep.subr.mxu0 0.0
        %609 = vmatpush1.msra.mxu0 0.0
        %610 = vmatprep.subr.mxu0 0.0
        %611 = vmatpush1.msra.mxu0 0.0
        %612 = vmatprep.subr.mxu0 0.0
        %613 = vmatpush1.msra.mxu0 0.0
        %614 = vmatprep.subr.mxu0 0.0
        %615 = vmatpush1.msra.mxu0 0.0
        %616 = vmatprep.subr.mxu0 0.0
        %617 = vmatpush1.msra.mxu0 0.0
        %618 = vmatprep.subr.mxu0 0.0
        %619 = vmatpush1.msra.mxu0 0.0
        %620 = vmatprep.subr.mxu0 0.0
        %621 = vmatpush1.msra.mxu0 0.0
        %622 = vmatprep.subr.mxu0 0.0
        %623 = vmatpush1.msra.mxu0 0.0
        %624 = vmatprep.subr.mxu0 0.0
        %625 = vmatpush1.msra.mxu0 0.0
        %626 = vmatprep.subr.mxu0 0.0
        %627 = vmatpush1.msra.mxu0 0.0
        %628 = vmatprep.subr.mxu0 0.0
        %629 = vmatpush1.msra.mxu0 0.0
        %630 = vmatprep.subr.mxu0 0.0
        %631 = vmatpush1.msra.mxu0 0.0
        %632 = vmatprep.subr.mxu0 0.0
        %633 = vmatpush1.msra.mxu0 0.0
        %634 = vmatprep.subr.mxu0 0.0
        %635 = vmatpush1.msra.mxu0 0.0
        %636 = vmatprep.subr.mxu0 0.0
        %637 = vmatpush1.msra.mxu0 0.0
        %638 = vmatprep.subr.mxu0 0.0
        %639 = vmatpush1.msra.mxu0 0.0
        %640 = vmatprep.subr.mxu0 0.0
        %641 = vmatpush1.msra.mxu0 0.0
        %642 = vmatprep.subr.mxu0 0.0
        %643 = vmatpush1.msra.mxu0 0.0
        %644 = vmatprep.subr.mxu0 0.0
        %645 = vmatpush1.msra.mxu0 0.0
        %646 = vmatprep.subr.mxu0 0.0
        %647 = vmatpush1.msra.mxu0 0.0
        %648 = vmatprep.subr.mxu0 0.0
        %649 = vmatpush1.msra.mxu0 0.0
        %650 = vmatprep.subr.mxu0 0.0
        %651 = vmatpush1.msra.mxu0 0.0
        %652 = vmatprep.subr.mxu0 0.0
        %653 = vmatpush1.msra.mxu0 0.0
        %654 = vmatprep.mubr.f32.mxu0 0.0
        %655 = vmatmul.mubr.f32.gmra.mrb[0].mxu0 %v588
        %v656 = vpop.f32.mrb[0].mxu0
        %v657 = vadd.f32 %v569, %v656
        %v658 = vpop.f32.mrb[0].mxu0
        %659 = vdwg.mxu0
        %660 = vmatprep.subr.mxu0 0.0
        %661 = vmatpush1.msra.mxu0 %v546
        %662 = vmatprep.subr.mxu0 0.0
        %663 = vmatpush1.msra.mxu0 %v547
        %664 = vmatprep.subr.mxu0 0.0
        %665 = vmatpush1.msra.mxu0 %v548
        %666 = vmatprep.subr.mxu0 0.0
        %667 = vmatpush1.msra.mxu0 %v549
        %668 = vmatprep.subr.mxu0 0.0
        %669 = vmatpush1.msra.mxu0 0.0
        %670 = vmatprep.subr.mxu0 0.0
        %671 = vmatpush1.msra.mxu0 0.0
        %672 = vmatprep.subr.mxu0 0.0
        %673 = vmatpush1.msra.mxu0 0.0
        %674 = vmatprep.subr.mxu0 0.0
        %675 = vmatpush1.msra.mxu0 0.0
        %676 = vmatprep.subr.mxu0 0.0
        %677 = vmatpush1.msra.mxu0 0.0
        %678 = vmatprep.subr.mxu0 0.0
        %679 = vmatpush1.msra.mxu0 0.0
        %680 = vmatprep.subr.mxu0 0.0
        %681 = vmatpush1.msra.mxu0 0.0
        %682 = vmatprep.subr.mxu0 0.0
        %683 = vmatpush1.msra.mxu0 0.0
        %684 = vmatprep.subr.mxu0 0.0
        %685 = vmatpush1.msra.mxu0 0.0
        %686 = vmatprep.subr.mxu0 0.0
        %687 = vmatpush1.msra.mxu0 0.0
        %688 = vmatprep.subr.mxu0 0.0
        %689 = vmatpush1.msra.mxu0 0.0
        %690 = vmatprep.subr.mxu0 0.0
        %691 = vmatpush1.msra.mxu0 0.0
        %692 = vmatprep.subr.mxu0 0.0
        %693 = vmatpush1.msra.mxu0 0.0
        %694 = vmatprep.subr.mxu0 0.0
        %695 = vmatpush1.msra.mxu0 0.0
        %696 = vmatprep.subr.mxu0 0.0
        %697 = vmatpush1.msra.mxu0 0.0
        %698 = vmatprep.subr.mxu0 0.0
        %699 = vmatpush1.msra.mxu0 0.0
        %700 = vmatprep.subr.mxu0 0.0
        %701 = vmatpush1.msra.mxu0 0.0
        %702 = vmatprep.subr.mxu0 0.0
        %703 = vmatpush1.msra.mxu0 0.0
        %704 = vmatprep.subr.mxu0 0.0
        %705 = vmatpush1.msra.mxu0 0.0
        %706 = vmatprep.subr.mxu0 0.0
        %707 = vmatpush1.msra.mxu0 0.0
        %708 = vmatprep.subr.mxu0 0.0
        %709 = vmatpush1.msra.mxu0 0.0
        %710 = vmatprep.subr.mxu0 0.0
        %711 = vmatpush1.msra.mxu0 0.0
        %712 = vmatprep.subr.mxu0 0.0
        %713 = vmatpush1.msra.mxu0 0.0
        %714 = vmatprep.subr.mxu0 0.0
        %715 = vmatpush1.msra.mxu0 0.0
        %716 = vmatprep.subr.mxu0 0.0
        %717 = vmatpush1.msra.mxu0 0.0
        %718 = vmatprep.subr.mxu0 0.0
        %719 = vmatpush1.msra.mxu0 0.0
        %720 = vmatprep.subr.mxu0 0.0
        %721 = vmatpush1.msra.mxu0 0.0
        %722 = vmatprep.subr.mxu0 0.0
        %723 = vmatpush1.msra.mxu0 0.0
        %724 = vmatprep.mubr.f32.mxu0 0.0
        %725 = vmatmul.mubr.f32.gmra.mrb[0].mxu0 %v588
        %v726 = vpop.f32.mrb[0].mxu0
        %v727 = vadd.f32 %v573, %v726
        %v728 = vpop.f32.mrb[0].mxu0
        %729 = vdwg.mxu0
        %730 = vmatprep.subr.mxu0 0.0
        %731 = vmatpush1.msra.mxu0 %v550
        %732 = vmatprep.subr.mxu0 0.0
        %733 = vmatpush1.msra.mxu0 %v551
        %734 = vmatprep.subr.mxu0 0.0
        %735 = vmatpush1.msra.mxu0 %v552
        %736 = vmatprep.subr.mxu0 0.0
        %737 = vmatpush1.msra.mxu0 %v553
        %738 = vmatprep.subr.mxu0 0.0
        %739 = vmatpush1.msra.mxu0 0.0
        %740 = vmatprep.subr.mxu0 0.0
        %741 = vmatpush1.msra.mxu0 0.0
        %742 = vmatprep.subr.mxu0 0.0
        %743 = vmatpush1.msra.mxu0 0.0
        %744 = vmatprep.subr.mxu0 0.0
        %745 = vmatpush1.msra.mxu0 0.0
        %746 = vmatprep.subr.mxu0 0.0
        %747 = vmatpush1.msra.mxu0 0.0
        %748 = vmatprep.subr.mxu0 0.0
        %749 = vmatpush1.msra.mxu0 0.0
        %750 = vmatprep.subr.mxu0 0.0
        %751 = vmatpush1.msra.mxu0 0.0
        %752 = vmatprep.subr.mxu0 0.0
        %753 = vmatpush1.msra.mxu0 0.0
        %754 = vmatprep.subr.mxu0 0.0
        %755 = vmatpush1.msra.mxu0 0.0
        %756 = vmatprep.subr.mxu0 0.0
        %757 = vmatpush1.msra.mxu0 0.0
        %758 = vmatprep.subr.mxu0 0.0
        %759 = vmatpush1.msra.mxu0 0.0
        %760 = vmatprep.subr.mxu0 0.0
        %761 = vmatpush1.msra.mxu0 0.0
        %762 = vmatprep.subr.mxu0 0.0
        %763 = vmatpush1.msra.mxu0 0.0
        %764 = vmatprep.subr.mxu0 0.0
        %765 = vmatpush1.msra.mxu0 0.0
        %766 = vmatprep.subr.mxu0 0.0
        %767 = vmatpush1.msra.mxu0 0.0
        %768 = vmatprep.subr.mxu0 0.0
        %769 = vmatpush1.msra.mxu0 0.0
        %770 = vmatprep.subr.mxu0 0.0
        %771 = vmatpush1.msra.mxu0 0.0
        %772 = vmatprep.subr.mxu0 0.0
        %773 = vmatpush1.msra.mxu0 0.0
        %774 = vmatprep.subr.mxu0 0.0
        %775 = vmatpush1.msra.mxu0 0.0
        %776 = vmatprep.subr.mxu0 0.0
        %777 = vmatpush1.msra.mxu0 0.0
        %778 = vmatprep.subr.mxu0 0.0
        %779 = vmatpush1.msra.mxu0 0.0
        %780 = vmatprep.subr.mxu0 0.0
        %781 = vmatpush1.msra.mxu0 0.0
        %782 = vmatprep.subr.mxu0 0.0
        %783 = vmatpush1.msra.mxu0 0.0
        %784 = vmatprep.subr.mxu0 0.0
        %785 = vmatpush1.msra.mxu0 0.0
        %786 = vmatprep.subr.mxu0 0.0
        %787 = vmatpush1.msra.mxu0 0.0
        %788 = vmatprep.subr.mxu0 0.0
        %789 = vmatpush1.msra.mxu0 0.0
        %790 = vmatprep.subr.mxu0 0.0
        %791 = vmatpush1.msra.mxu0 0.0
        %792 = vmatprep.subr.mxu0 0.0
        %793 = vmatpush1.msra.mxu0 0.0
        %794 = vmatprep.mubr.f32.mxu0 0.0
        %795 = vmatmul.mubr.f32.gmra.mrb[0].mxu0 %v588
        %v796 = vpop.f32.mrb[0].mxu0
        %v797 = vadd.f32 %v577, %v796
        %v798 = vpop.f32.mrb[0].mxu0
        %799 = vdwg.mxu0
        %800 = vmatprep.subr.mxu0 0.0
        %801 = vmatpush1.msra.mxu0 %v554
        %802 = vmatprep.subr.mxu0 0.0
        %803 = vmatpush1.msra.mxu0 %v555
        %804 = vmatprep.subr.mxu0 0.0
        %805 = vmatpush1.msra.mxu0 %v556
        %806 = vmatprep.subr.mxu0 0.0
        %807 = vmatpush1.msra.mxu0 %v557
        %808 = vmatprep.subr.mxu0 0.0
        %809 = vmatpush1.msra.mxu0 0.0
        %810 = vmatprep.subr.mxu0 0.0
        %811 = vmatpush1.msra.mxu0 0.0
        %812 = vmatprep.subr.mxu0 0.0
        %813 = vmatpush1.msra.mxu0 0.0
        %814 = vmatprep.subr.mxu0 0.0
        %815 = vmatpush1.msra.mxu0 0.0
        %816 = vmatprep.subr.mxu0 0.0
        %817 = vmatpush1.msra.mxu0 0.0
        %818 = vmatprep.subr.mxu0 0.0
        %819 = vmatpush1.msra.mxu0 0.0
        %820 = vmatprep.subr.mxu0 0.0
        %821 = vmatpush1.msra.mxu0 0.0
        %822 = vmatprep.subr.mxu0 0.0
        %823 = vmatpush1.msra.mxu0 0.0
        %824 = vmatprep.subr.mxu0 0.0
        %825 = vmatpush1.msra.mxu0 0.0
        %826 = vmatprep.subr.mxu0 0.0
        %827 = vmatpush1.msra.mxu0 0.0
        %828 = vmatprep.subr.mxu0 0.0
        %829 = vmatpush1.msra.mxu0 0.0
        %830 = vmatprep.subr.mxu0 0.0
        %831 = vmatpush1.msra.mxu0 0.0
        %832 = vmatprep.subr.mxu0 0.0
        %833 = vmatpush1.msra.mxu0 0.0
        %834 = vmatprep.subr.mxu0 0.0
        %835 = vmatpush1.msra.mxu0 0.0
        %836 = vmatprep.subr.mxu0 0.0
        %837 = vmatpush1.msra.mxu0 0.0
        %838 = vmatprep.subr.mxu0 0.0
        %839 = vmatpush1.msra.mxu0 0.0
        %840 = vmatprep.subr.mxu0 0.0
        %841 = vmatpush1.msra.mxu0 0.0
        %842 = vmatprep.subr.mxu0 0.0
        %843 = vmatpush1.msra.mxu0 0.0
        %844 = vmatprep.subr.mxu0 0.0
        %845 = vmatpush1.msra.mxu0 0.0
        %846 = vmatprep.subr.mxu0 0.0
        %847 = vmatpush1.msra.mxu0 0.0
        %848 = vmatprep.subr.mxu0 0.0
        %849 = vmatpush1.msra.mxu0 0.0
        %850 = vmatprep.subr.mxu0 0.0
        %851 = vmatpush1.msra.mxu0 0.0
        %852 = vmatprep.subr.mxu0 0.0
        %853 = vmatpush1.msra.mxu0 0.0
        %854 = vmatprep.subr.mxu0 0.0
        %855 = vmatpush1.msra.mxu0 0.0
        %856 = vmatprep.subr.mxu0 0.0
        %857 = vmatpush1.msra.mxu0 0.0
        %858 = vmatprep.subr.mxu0 0.0
        %859 = vmatpush1.msra.mxu0 0.0
        %860 = vmatprep.subr.mxu0 0.0
        %861 = vmatpush1.msra.mxu0 0.0
        %862 = vmatprep.subr.mxu0 0.0
        %863 = vmatpush1.msra.mxu0 0.0
        %864 = vmatprep.mubr.f32.mxu0 0.0
        %865 = vmatmul.mubr.f32.gmra.mrb[0].mxu0 %v588
        %v866 = vpop.f32.mrb[0].mxu0
        %v867 = vadd.f32 %v581, %v866
        %v868 = vpop.f32.mrb[0].mxu0
        %869 = vdwg.mxu0
        %s870 = scalar_lea.vmem %s3, 128
        %v871 = vld [vmem:[%s870] sm:$0xff]
        %v872 = vld [vmem:[%s870 + $0x8] sm:$0xff]
        %v873 = vld [vmem:[%s870 + $0x10] sm:$0xff]
        %v874 = vld [vmem:[%s870 + $0x18] sm:$0xff]
        %v875 = vld [vmem:[%s870 + $0x20] sm:$0xff]
        %v876 = vld [vmem:[%s870 + $0x28] sm:$0xff]
        %v877 = vld [vmem:[%s870 + $0x30] sm:$0xff]
        %v878 = vld [vmem:[%s870 + $0x38] sm:$0xff]
        %v879 = vld [vmem:[%s870 + $0x40] sm:$0xff]
        %v880 = vld [vmem:[%s870 + $0x48] sm:$0xff]
        %v881 = vld [vmem:[%s870 + $0x50] sm:$0xff]
        %v882 = vld [vmem:[%s870 + $0x58] sm:$0xff]
        %v883 = vld [vmem:[%s870 + $0x60] sm:$0xff]
        %v884 = vld [vmem:[%s870 + $0x68] sm:$0xff]
        %v885 = vld [vmem:[%s870 + $0x70] sm:$0xff]
        %v886 = vld [vmem:[%s870 + $0x78] sm:$0xff]
        %s887 = scalar_lea.vmem %s4, 4
        %v888 = vld [vmem:[%s887] sm:$0x1]
        %v889 = vld [vmem:[%s887 + $0x1] sm:$0x1]
        %v890 = vld [vmem:[%s887 + $0x2] sm:$0x1]
        %v891 = vld [vmem:[%s887 + $0x3] sm:$0x1]
        %v896 = vlaneseq
        %v897 = vshrl.u32 %v896, 7
        %v898 = vsub.s32 0, %v897
        %v899 = vrot.slane %v888, %v898
        %v900 = vlaneseq
        %v901 = vshrl.u32 %v900, 7
        %v902 = vsub.s32 0, %v901
        %v903 = vrot.slane %v889, %v902
        %v904 = vlaneseq
        %v905 = vshrl.u32 %v904, 7
        %v906 = vsub.s32 0, %v905
        %v907 = vrot.slane %v890, %v906
        %v908 = vlaneseq
        %v909 = vshrl.u32 %v908, 7
        %v910 = vsub.s32 0, %v909
        %v911 = vrot.slane %v891, %v910
        %916 = vmatprep.subr.mxu0 0.0
        %917 = vmatpush1.msra.mxu0 %v871
        %918 = vmatprep.subr.mxu0 0.0
        %919 = vmatpush1.msra.mxu0 %v872
        %920 = vmatprep.subr.mxu0 0.0
        %921 = vmatpush1.msra.mxu0 %v873
        %922 = vmatprep.subr.mxu0 0.0
        %923 = vmatpush1.msra.mxu0 %v874
        %924 = vmatprep.subr.mxu0 0.0
        %925 = vmatpush1.msra.mxu0 0.0
        %926 = vmatprep.subr.mxu0 0.0
        %927 = vmatpush1.msra.mxu0 0.0
        %928 = vmatprep.subr.mxu0 0.0
        %929 = vmatpush1.msra.mxu0 0.0
        %930 = vmatprep.subr.mxu0 0.0
        %931 = vmatpush1.msra.mxu0 0.0
        %932 = vmatprep.subr.mxu0 0.0
        %933 = vmatpush1.msra.mxu0 0.0
        %934 = vmatprep.subr.mxu0 0.0
        %935 = vmatpush1.msra.mxu0 0.0
        %936 = vmatprep.subr.mxu0 0.0
        %937 = vmatpush1.msra.mxu0 0.0
        %938 = vmatprep.subr.mxu0 0.0
        %939 = vmatpush1.msra.mxu0 0.0
        %940 = vmatprep.subr.mxu0 0.0
        %941 = vmatpush1.msra.mxu0 0.0
        %942 = vmatprep.subr.mxu0 0.0
        %943 = vmatpush1.msra.mxu0 0.0
        %944 = vmatprep.subr.mxu0 0.0
        %945 = vmatpush1.msra.mxu0 0.0
        %946 = vmatprep.subr.mxu0 0.0
        %947 = vmatpush1.msra.mxu0 0.0
        %948 = vmatprep.subr.mxu0 0.0
        %949 = vmatpush1.msra.mxu0 0.0
        %950 = vmatprep.subr.mxu0 0.0
        %951 = vmatpush1.msra.mxu0 0.0
        %952 = vmatprep.subr.mxu0 0.0
        %953 = vmatpush1.msra.mxu0 0.0
        %954 = vmatprep.subr.mxu0 0.0
        %955 = vmatpush1.msra.mxu0 0.0
        %956 = vmatprep.subr.mxu0 0.0
        %957 = vmatpush1.msra.mxu0 0.0
        %958 = vmatprep.subr.mxu0 0.0
        %959 = vmatpush1.msra.mxu0 0.0
        %960 = vmatprep.subr.mxu0 0.0
        %961 = vmatpush1.msra.mxu0 0.0
        %962 = vmatprep.subr.mxu0 0.0
        %963 = vmatpush1.msra.mxu0 0.0
        %964 = vmatprep.subr.mxu0 0.0
        %965 = vmatpush1.msra.mxu0 0.0
        %966 = vmatprep.subr.mxu0 0.0
        %967 = vmatpush1.msra.mxu0 0.0
        %968 = vmatprep.subr.mxu0 0.0
        %969 = vmatpush1.msra.mxu0 0.0
        %970 = vmatprep.subr.mxu0 0.0
        %971 = vmatpush1.msra.mxu0 0.0
        %972 = vmatprep.subr.mxu0 0.0
        %973 = vmatpush1.msra.mxu0 0.0
        %974 = vmatprep.subr.mxu0 0.0
        %975 = vmatpush1.msra.mxu0 0.0
        %976 = vmatprep.subr.mxu0 0.0
        %977 = vmatpush1.msra.mxu0 0.0
        %978 = vmatprep.subr.mxu0 0.0
        %979 = vmatpush1.msra.mxu0 0.0
        %980 = vmatprep.mubr.f32.mxu0 0.0
        %981 = vmatmul.mubr.f32.gmra.mrb[0].mxu0 %v588
        %v982 = vpop.f32.mrb[0].mxu0
        %v983 = vadd.f32 %v899, %v982
        %v984 = vpop.f32.mrb[0].mxu0
        %985 = vdwg.mxu0
        %986 = vmatprep.subr.mxu0 0.0
        %987 = vmatpush1.msra.mxu0 %v875
        %988 = vmatprep.subr.mxu0 0.0
        %989 = vmatpush1.msra.mxu0 %v876
        %990 = vmatprep.subr.mxu0 0.0
        %991 = vmatpush1.msra.mxu0 %v877
        %992 = vmatprep.subr.mxu0 0.0
        %993 = vmatpush1.msra.mxu0 %v878
        %994 = vmatprep.subr.mxu0 0.0
        %995 = vmatpush1.msra.mxu0 0.0
        %996 = vmatprep.subr.mxu0 0.0
        %997 = vmatpush1.msra.mxu0 0.0
        %998 = vmatprep.subr.mxu0 0.0
        %999 = vmatpush1.msra.mxu0 0.0
        %1000 = vmatprep.subr.mxu0 0.0
        %1001 = vmatpush1.msra.mxu0 0.0
        %1002 = vmatprep.subr.mxu0 0.0
        %1003 = vmatpush1.msra.mxu0 0.0
        %1004 = vmatprep.subr.mxu0 0.0
        %1005 = vmatpush1.msra.mxu0 0.0
        %1006 = vmatprep.subr.mxu0 0.0
        %1007 = vmatpush1.msra.mxu0 0.0
        %1008 = vmatprep.subr.mxu0 0.0
        %1009 = vmatpush1.msra.mxu0 0.0
        %1010 = vmatprep.subr.mxu0 0.0
        %1011 = vmatpush1.msra.mxu0 0.0
        %1012 = vmatprep.subr.mxu0 0.0
        %1013 = vmatpush1.msra.mxu0 0.0
        %1014 = vmatprep.subr.mxu0 0.0
        %1015 = vmatpush1.msra.mxu0 0.0
        %1016 = vmatprep.subr.mxu0 0.0
        %1017 = vmatpush1.msra.mxu0 0.0
        %1018 = vmatprep.subr.mxu0 0.0
        %1019 = vmatpush1.msra.mxu0 0.0
        %1020 = vmatprep.subr.mxu0 0.0
        %1021 = vmatpush1.msra.mxu0 0.0
        %1022 = vmatprep.subr.mxu0 0.0
        %1023 = vmatpush1.msra.mxu0 0.0
        %1024 = vmatprep.subr.mxu0 0.0
        %1025 = vmatpush1.msra.mxu0 0.0
        %1026 = vmatprep.subr.mxu0 0.0
        %1027 = vmatpush1.msra.mxu0 0.0
        %1028 = vmatprep.subr.mxu0 0.0
        %1029 = vmatpush1.msra.mxu0 0.0
        %1030 = vmatprep.subr.mxu0 0.0
        %1031 = vmatpush1.msra.mxu0 0.0
        %1032 = vmatprep.subr.mxu0 0.0
        %1033 = vmatpush1.msra.mxu0 0.0
        %1034 = vmatprep.subr.mxu0 0.0
        %1035 = vmatpush1.msra.mxu0 0.0
        %1036 = vmatprep.subr.mxu0 0.0
        %1037 = vmatpush1.msra.mxu0 0.0
        %1038 = vmatprep.subr.mxu0 0.0
        %1039 = vmatpush1.msra.mxu0 0.0
        %1040 = vmatprep.subr.mxu0 0.0
        %1041 = vmatpush1.msra.mxu0 0.0
        %1042 = vmatprep.subr.mxu0 0.0
        %1043 = vmatpush1.msra.mxu0 0.0
        %1044 = vmatprep.subr.mxu0 0.0
        %1045 = vmatpush1.msra.mxu0 0.0
        %1046 = vmatprep.subr.mxu0 0.0
        %1047 = vmatpush1.msra.mxu0 0.0
        %1048 = vmatprep.subr.mxu0 0.0
        %1049 = vmatpush1.msra.mxu0 0.0
        %1050 = vmatprep.mubr.f32.mxu0 0.0
        %1051 = vmatmul.mubr.f32.gmra.mrb[0].mxu0 %v588
        %v1052 = vpop.f32.mrb[0].mxu0
        %v1053 = vadd.f32 %v903, %v1052
        %v1054 = vpop.f32.mrb[0].mxu0
        %1055 = vdwg.mxu0
        %1056 = vmatprep.subr.mxu0 0.0
        %1057 = vmatpush1.msra.mxu0 %v879
        %1058 = vmatprep.subr.mxu0 0.0
        %1059 = vmatpush1.msra.mxu0 %v880
        %1060 = vmatprep.subr.mxu0 0.0
        %1061 = vmatpush1.msra.mxu0 %v881
        %1062 = vmatprep.subr.mxu0 0.0
        %1063 = vmatpush1.msra.mxu0 %v882
        %1064 = vmatprep.subr.mxu0 0.0
        %1065 = vmatpush1.msra.mxu0 0.0
        %1066 = vmatprep.subr.mxu0 0.0
        %1067 = vmatpush1.msra.mxu0 0.0
        %1068 = vmatprep.subr.mxu0 0.0
        %1069 = vmatpush1.msra.mxu0 0.0
        %1070 = vmatprep.subr.mxu0 0.0
        %1071 = vmatpush1.msra.mxu0 0.0
        %1072 = vmatprep.subr.mxu0 0.0
        %1073 = vmatpush1.msra.mxu0 0.0
        %1074 = vmatprep.subr.mxu0 0.0
        %1075 = vmatpush1.msra.mxu0 0.0
        %1076 = vmatprep.subr.mxu0 0.0
        %1077 = vmatpush1.msra.mxu0 0.0
        %1078 = vmatprep.subr.mxu0 0.0
        %1079 = vmatpush1.msra.mxu0 0.0
        %1080 = vmatprep.subr.mxu0 0.0
        %1081 = vmatpush1.msra.mxu0 0.0
        %1082 = vmatprep.subr.mxu0 0.0
        %1083 = vmatpush1.msra.mxu0 0.0
        %1084 = vmatprep.subr.mxu0 0.0
        %1085 = vmatpush1.msra.mxu0 0.0
        %1086 = vmatprep.subr.mxu0 0.0
        %1087 = vmatpush1.msra.mxu0 0.0
        %1088 = vmatprep.subr.mxu0 0.0
        %1089 = vmatpush1.msra.mxu0 0.0
        %1090 = vmatprep.subr.mxu0 0.0
        %1091 = vmatpush1.msra.mxu0 0.0
        %1092 = vmatprep.subr.mxu0 0.0
        %1093 = vmatpush1.msra.mxu0 0.0
        %1094 = vmatprep.subr.mxu0 0.0
        %1095 = vmatpush1.msra.mxu0 0.0
        %1096 = vmatprep.subr.mxu0 0.0
        %1097 = vmatpush1.msra.mxu0 0.0
        %1098 = vmatprep.subr.mxu0 0.0
        %1099 = vmatpush1.msra.mxu0 0.0
        %1100 = vmatprep.subr.mxu0 0.0
        %1101 = vmatpush1.msra.mxu0 0.0
        %1102 = vmatprep.subr.mxu0 0.0
        %1103 = vmatpush1.msra.mxu0 0.0
        %1104 = vmatprep.subr.mxu0 0.0
        %1105 = vmatpush1.msra.mxu0 0.0
        %1106 = vmatprep.subr.mxu0 0.0
        %1107 = vmatpush1.msra.mxu0 0.0
        %1108 = vmatprep.subr.mxu0 0.0
        %1109 = vmatpush1.msra.mxu0 0.0
        %1110 = vmatprep.subr.mxu0 0.0
        %1111 = vmatpush1.msra.mxu0 0.0
        %1112 = vmatprep.subr.mxu0 0.0
        %1113 = vmatpush1.msra.mxu0 0.0
        %1114 = vmatprep.subr.mxu0 0.0
        %1115 = vmatpush1.msra.mxu0 0.0
        %1116 = vmatprep.subr.mxu0 0.0
        %1117 = vmatpush1.msra.mxu0 0.0
        %1118 = vmatprep.subr.mxu0 0.0
        %1119 = vmatpush1.msra.mxu0 0.0
        %1120 = vmatprep.mubr.f32.mxu0 0.0
        %1121 = vmatmul.mubr.f32.gmra.mrb[0].mxu0 %v588
        %v1122 = vpop.f32.mrb[0].mxu0
        %v1123 = vadd.f32 %v907, %v1122
        %v1124 = vpop.f32.mrb[0].mxu0
        %1125 = vdwg.mxu0
        %1126 = vmatprep.subr.mxu0 0.0
        %1127 = vmatpush1.msra.mxu0 %v883
        %1128 = vmatprep.subr.mxu0 0.0
        %1129 = vmatpush1.msra.mxu0 %v884
        %1130 = vmatprep.subr.mxu0 0.0
        %1131 = vmatpush1.msra.mxu0 %v885
        %1132 = vmatprep.subr.mxu0 0.0
        %1133 = vmatpush1.msra.mxu0 %v886
        %1134 = vmatprep.subr.mxu0 0.0
        %1135 = vmatpush1.msra.mxu0 0.0
        %1136 = vmatprep.subr.mxu0 0.0
        %1137 = vmatpush1.msra.mxu0 0.0
        %1138 = vmatprep.subr.mxu0 0.0
        %1139 = vmatpush1.msra.mxu0 0.0
        %1140 = vmatprep.subr.mxu0 0.0
        %1141 = vmatpush1.msra.mxu0 0.0
        %1142 = vmatprep.subr.mxu0 0.0
        %1143 = vmatpush1.msra.mxu0 0.0
        %1144 = vmatprep.subr.mxu0 0.0
        %1145 = vmatpush1.msra.mxu0 0.0
        %1146 = vmatprep.subr.mxu0 0.0
        %1147 = vmatpush1.msra.mxu0 0.0
        %1148 = vmatprep.subr.mxu0 0.0
        %1149 = vmatpush1.msra.mxu0 0.0
        %1150 = vmatprep.subr.mxu0 0.0
        %1151 = vmatpush1.msra.mxu0 0.0
        %1152 = vmatprep.subr.mxu0 0.0
        %1153 = vmatpush1.msra.mxu0 0.0
        %1154 = vmatprep.subr.mxu0 0.0
        %1155 = vmatpush1.msra.mxu0 0.0
        %1156 = vmatprep.subr.mxu0 0.0
        %1157 = vmatpush1.msra.mxu0 0.0
        %1158 = vmatprep.subr.mxu0 0.0
        %1159 = vmatpush1.msra.mxu0 0.0
        %1160 = vmatprep.subr.mxu0 0.0
        %1161 = vmatpush1.msra.mxu0 0.0
        %1162 = vmatprep.subr.mxu0 0.0
        %1163 = vmatpush1.msra.mxu0 0.0
        %1164 = vmatprep.subr.mxu0 0.0
        %1165 = vmatpush1.msra.mxu0 0.0
        %1166 = vmatprep.subr.mxu0 0.0
        %1167 = vmatpush1.msra.mxu0 0.0
        %1168 = vmatprep.subr.mxu0 0.0
        %1169 = vmatpush1.msra.mxu0 0.0
        %1170 = vmatprep.subr.mxu0 0.0
        %1171 = vmatpush1.msra.mxu0 0.0
        %1172 = vmatprep.subr.mxu0 0.0
        %1173 = vmatpush1.msra.mxu0 0.0
        %1174 = vmatprep.subr.mxu0 0.0
        %1175 = vmatpush1.msra.mxu0 0.0
        %1176 = vmatprep.subr.mxu0 0.0
        %1177 = vmatpush1.msra.mxu0 0.0
        %1178 = vmatprep.subr.mxu0 0.0
        %1179 = vmatpush1.msra.mxu0 0.0
        %1180 = vmatprep.subr.mxu0 0.0
        %1181 = vmatpush1.msra.mxu0 0.0
        %1182 = vmatprep.subr.mxu0 0.0
        %1183 = vmatpush1.msra.mxu0 0.0
        %1184 = vmatprep.subr.mxu0 0.0
        %1185 = vmatpush1.msra.mxu0 0.0
        %1186 = vmatprep.subr.mxu0 0.0
        %1187 = vmatpush1.msra.mxu0 0.0
        %1188 = vmatprep.subr.mxu0 0.0
        %1189 = vmatpush1.msra.mxu0 0.0
        %1190 = vmatprep.mubr.f32.mxu0 0.0
        %1191 = vmatmul.mubr.f32.gmra.mrb[0].mxu0 %v588
        %v1192 = vpop.f32.mrb[0].mxu0
        %v1193 = vadd.f32 %v911, %v1192
        %v1194 = vpop.f32.mrb[0].mxu0
        %1195 = vdwg.mxu0
        %s1196 = scalar_lea.vmem %s3, 256
        %v1197 = vld [vmem:[%s1196] sm:$0xff]
        %v1198 = vld [vmem:[%s1196 + $0x8] sm:$0xff]
        %v1199 = vld [vmem:[%s1196 + $0x10] sm:$0xff]
        %v1200 = vld [vmem:[%s1196 + $0x18] sm:$0xff]
        %v1201 = vld [vmem:[%s1196 + $0x20] sm:$0xff]
        %v1202 = vld [vmem:[%s1196 + $0x28] sm:$0xff]
        %v1203 = vld [vmem:[%s1196 + $0x30] sm:$0xff]
        %v1204 = vld [vmem:[%s1196 + $0x38] sm:$0xff]
        %v1205 = vld [vmem:[%s1196 + $0x40] sm:$0xff]
        %v1206 = vld [vmem:[%s1196 + $0x48] sm:$0xff]
        %v1207 = vld [vmem:[%s1196 + $0x50] sm:$0xff]
        %v1208 = vld [vmem:[%s1196 + $0x58] sm:$0xff]
        %v1209 = vld [vmem:[%s1196 + $0x60] sm:$0xff]
        %v1210 = vld [vmem:[%s1196 + $0x68] sm:$0xff]
        %v1211 = vld [vmem:[%s1196 + $0x70] sm:$0xff]
        %v1212 = vld [vmem:[%s1196 + $0x78] sm:$0xff]
        %s1213 = scalar_lea.vmem %s4, 8
        %v1214 = vld [vmem:[%s1213] sm:$0x1]
        %v1215 = vld [vmem:[%s1213 + $0x1] sm:$0x1]
        %v1216 = vld [vmem:[%s1213 + $0x2] sm:$0x1]
        %v1217 = vld [vmem:[%s1213 + $0x3] sm:$0x1]
        %v1222 = vlaneseq
        %v1223 = vshrl.u32 %v1222, 7
        %v1224 = vsub.s32 0, %v1223
        %v1225 = vrot.slane %v1214, %v1224
        %v1226 = vlaneseq
        %v1227 = vshrl.u32 %v1226, 7
        %v1228 = vsub.s32 0, %v1227
        %v1229 = vrot.slane %v1215, %v1228
        %v1230 = vlaneseq
        %v1231 = vshrl.u32 %v1230, 7
        %v1232 = vsub.s32 0, %v1231
        %v1233 = vrot.slane %v1216, %v1232
        %v1234 = vlaneseq
        %v1235 = vshrl.u32 %v1234, 7
        %v1236 = vsub.s32 0, %v1235
        %v1237 = vrot.slane %v1217, %v1236
        %1242 = vmatprep.subr.mxu0 0.0
        %1243 = vmatpush1.msra.mxu0 %v1197
        %1244 = vmatprep.subr.mxu0 0.0
        %1245 = vmatpush1.msra.mxu0 %v1198
        %1246 = vmatprep.subr.mxu0 0.0
        %1247 = vmatpush1.msra.mxu0 %v1199
        %1248 = vmatprep.subr.mxu0 0.0
        %1249 = vmatpush1.msra.mxu0 %v1200
        %1250 = vmatprep.subr.mxu0 0.0
        %1251 = vmatpush1.msra.mxu0 0.0
        %1252 = vmatprep.subr.mxu0 0.0
        %1253 = vmatpush1.msra.mxu0 0.0
        %1254 = vmatprep.subr.mxu0 0.0
        %1255 = vmatpush1.msra.mxu0 0.0
        %1256 = vmatprep.subr.mxu0 0.0
        %1257 = vmatpush1.msra.mxu0 0.0
        %1258 = vmatprep.subr.mxu0 0.0
        %1259 = vmatpush1.msra.mxu0 0.0
        %1260 = vmatprep.subr.mxu0 0.0
        %1261 = vmatpush1.msra.mxu0 0.0
        %1262 = vmatprep.subr.mxu0 0.0
        %1263 = vmatpush1.msra.mxu0 0.0
        %1264 = vmatprep.subr.mxu0 0.0
        %1265 = vmatpush1.msra.mxu0 0.0
        %1266 = vmatprep.subr.mxu0 0.0
        %1267 = vmatpush1.msra.mxu0 0.0
        %1268 = vmatprep.subr.mxu0 0.0
        %1269 = vmatpush1.msra.mxu0 0.0
        %1270 = vmatprep.subr.mxu0 0.0
        %1271 = vmatpush1.msra.mxu0 0.0
        %1272 = vmatprep.subr.mxu0 0.0
        %1273 = vmatpush1.msra.mxu0 0.0
        %1274 = vmatprep.subr.mxu0 0.0
        %1275 = vmatpush1.msra.mxu0 0.0
        %1276 = vmatprep.subr.mxu0 0.0
        %1277 = vmatpush1.msra.mxu0 0.0
        %1278 = vmatprep.subr.mxu0 0.0
        %1279 = vmatpush1.msra.mxu0 0.0
        %1280 = vmatprep.subr.mxu0 0.0
        %1281 = vmatpush1.msra.mxu0 0.0
        %1282 = vmatprep.subr.mxu0 0.0
        %1283 = vmatpush1.msra.mxu0 0.0
        %1284 = vmatprep.subr.mxu0 0.0
        %1285 = vmatpush1.msra.mxu0 0.0
        %1286 = vmatprep.subr.mxu0 0.0
        %1287 = vmatpush1.msra.mxu0 0.0
        %1288 = vmatprep.subr.mxu0 0.0
        %1289 = vmatpush1.msra.mxu0 0.0
        %1290 = vmatprep.subr.mxu0 0.0
        %1291 = vmatpush1.msra.mxu0 0.0
        %1292 = vmatprep.subr.mxu0 0.0
        %1293 = vmatpush1.msra.mxu0 0.0
        %1294 = vmatprep.subr.mxu0 0.0
        %1295 = vmatpush1.msra.mxu0 0.0
        %1296 = vmatprep.subr.mxu0 0.0
        %1297 = vmatpush1.msra.mxu0 0.0
        %1298 = vmatprep.subr.mxu0 0.0
        %1299 = vmatpush1.msra.mxu0 0.0
        %1300 = vmatprep.subr.mxu0 0.0
        %1301 = vmatpush1.msra.mxu0 0.0
        %1302 = vmatprep.subr.mxu0 0.0
        %1303 = vmatpush1.msra.mxu0 0.0
        %1304 = vmatprep.subr.mxu0 0.0
        %1305 = vmatpush1.msra.mxu0 0.0
        %1306 = vmatprep.mubr.f32.mxu0 0.0
        %1307 = vmatmul.mubr.f32.gmra.mrb[0].mxu0 %v588
        %v1308 = vpop.f32.mrb[0].mxu0
        %v1309 = vadd.f32 %v1225, %v1308
        %v1310 = vpop.f32.mrb[0].mxu0
        %1311 = vdwg.mxu0
        %1312 = vmatprep.subr.mxu0 0.0
        %1313 = vmatpush1.msra.mxu0 %v1201
        %1314 = vmatprep.subr.mxu0 0.0
        %1315 = vmatpush1.msra.mxu0 %v1202
        %1316 = vmatprep.subr.mxu0 0.0
        %1317 = vmatpush1.msra.mxu0 %v1203
        %1318 = vmatprep.subr.mxu0 0.0
        %1319 = vmatpush1.msra.mxu0 %v1204
        %1320 = vmatprep.subr.mxu0 0.0
        %1321 = vmatpush1.msra.mxu0 0.0
        %1322 = vmatprep.subr.mxu0 0.0
        %1323 = vmatpush1.msra.mxu0 0.0
        %1324 = vmatprep.subr.mxu0 0.0
        %1325 = vmatpush1.msra.mxu0 0.0
        %1326 = vmatprep.subr.mxu0 0.0
        %1327 = vmatpush1.msra.mxu0 0.0
        %1328 = vmatprep.subr.mxu0 0.0
        %1329 = vmatpush1.msra.mxu0 0.0
        %1330 = vmatprep.subr.mxu0 0.0
        %1331 = vmatpush1.msra.mxu0 0.0
        %1332 = vmatprep.subr.mxu0 0.0
        %1333 = vmatpush1.msra.mxu0 0.0
        %1334 = vmatprep.subr.mxu0 0.0
        %1335 = vmatpush1.msra.mxu0 0.0
        %1336 = vmatprep.subr.mxu0 0.0
        %1337 = vmatpush1.msra.mxu0 0.0
        %1338 = vmatprep.subr.mxu0 0.0
        %1339 = vmatpush1.msra.mxu0 0.0
        %1340 = vmatprep.subr.mxu0 0.0
        %1341 = vmatpush1.msra.mxu0 0.0
        %1342 = vmatprep.subr.mxu0 0.0
        %1343 = vmatpush1.msra.mxu0 0.0
        %1344 = vmatprep.subr.mxu0 0.0
        %1345 = vmatpush1.msra.mxu0 0.0
        %1346 = vmatprep.subr.mxu0 0.0
        %1347 = vmatpush1.msra.mxu0 0.0
        %1348 = vmatprep.subr.mxu0 0.0
        %1349 = vmatpush1.msra.mxu0 0.0
        %1350 = vmatprep.subr.mxu0 0.0
        %1351 = vmatpush1.msra.mxu0 0.0
        %1352 = vmatprep.subr.mxu0 0.0
        %1353 = vmatpush1.msra.mxu0 0.0
        %1354 = vmatprep.subr.mxu0 0.0
        %1355 = vmatpush1.msra.mxu0 0.0
        %1356 = vmatprep.subr.mxu0 0.0
        %1357 = vmatpush1.msra.mxu0 0.0
        %1358 = vmatprep.subr.mxu0 0.0
        %1359 = vmatpush1.msra.mxu0 0.0
        %1360 = vmatprep.subr.mxu0 0.0
        %1361 = vmatpush1.msra.mxu0 0.0
        %1362 = vmatprep.subr.mxu0 0.0
        %1363 = vmatpush1.msra.mxu0 0.0
        %1364 = vmatprep.subr.mxu0 0.0
        %1365 = vmatpush1.msra.mxu0 0.0
        %1366 = vmatprep.subr.mxu0 0.0
        %1367 = vmatpush1.msra.mxu0 0.0
        %1368 = vmatprep.subr.mxu0 0.0
        %1369 = vmatpush1.msra.mxu0 0.0
        %1370 = vmatprep.subr.mxu0 0.0
        %1371 = vmatpush1.msra.mxu0 0.0
        %1372 = vmatprep.subr.mxu0 0.0
        %1373 = vmatpush1.msra.mxu0 0.0
        %1374 = vmatprep.subr.mxu0 0.0
        %1375 = vmatpush1.msra.mxu0 0.0
        %1376 = vmatprep.mubr.f32.mxu0 0.0
        %1377 = vmatmul.mubr.f32.gmra.mrb[0].mxu0 %v588
        %v1378 = vpop.f32.mrb[0].mxu0
        %v1379 = vadd.f32 %v1229, %v1378
        %v1380 = vpop.f32.mrb[0].mxu0
        %1381 = vdwg.mxu0
        %1382 = vmatprep.subr.mxu0 0.0
        %1383 = vmatpush1.msra.mxu0 %v1205
        %1384 = vmatprep.subr.mxu0 0.0
        %1385 = vmatpush1.msra.mxu0 %v1206
        %1386 = vmatprep.subr.mxu0 0.0
        %1387 = vmatpush1.msra.mxu0 %v1207
        %1388 = vmatprep.subr.mxu0 0.0
        %1389 = vmatpush1.msra.mxu0 %v1208
        %1390 = vmatprep.subr.mxu0 0.0
        %1391 = vmatpush1.msra.mxu0 0.0
        %1392 = vmatprep.subr.mxu0 0.0
        %1393 = vmatpush1.msra.mxu0 0.0
        %1394 = vmatprep.subr.mxu0 0.0
        %1395 = vmatpush1.msra.mxu0 0.0
        %1396 = vmatprep.subr.mxu0 0.0
        %1397 = vmatpush1.msra.mxu0 0.0
        %1398 = vmatprep.subr.mxu0 0.0
        %1399 = vmatpush1.msra.mxu0 0.0
        %1400 = vmatprep.subr.mxu0 0.0
        %1401 = vmatpush1.msra.mxu0 0.0
        %1402 = vmatprep.subr.mxu0 0.0
        %1403 = vmatpush1.msra.mxu0 0.0
        %1404 = vmatprep.subr.mxu0 0.0
        %1405 = vmatpush1.msra.mxu0 0.0
        %1406 = vmatprep.subr.mxu0 0.0
        %1407 = vmatpush1.msra.mxu0 0.0
        %1408 = vmatprep.subr.mxu0 0.0
        %1409 = vmatpush1.msra.mxu0 0.0
        %1410 = vmatprep.subr.mxu0 0.0
        %1411 = vmatpush1.msra.mxu0 0.0
        %1412 = vmatprep.subr.mxu0 0.0
        %1413 = vmatpush1.msra.mxu0 0.0
        %1414 = vmatprep.subr.mxu0 0.0
        %1415 = vmatpush1.msra.mxu0 0.0
        %1416 = vmatprep.subr.mxu0 0.0
        %1417 = vmatpush1.msra.mxu0 0.0
        %1418 = vmatprep.subr.mxu0 0.0
        %1419 = vmatpush1.msra.mxu0 0.0
        %1420 = vmatprep.subr.mxu0 0.0
        %1421 = vmatpush1.msra.mxu0 0.0
        %1422 = vmatprep.subr.mxu0 0.0
        %1423 = vmatpush1.msra.mxu0 0.0
        %1424 = vmatprep.subr.mxu0 0.0
        %1425 = vmatpush1.msra.mxu0 0.0
        %1426 = vmatprep.subr.mxu0 0.0
        %1427 = vmatpush1.msra.mxu0 0.0
        %1428 = vmatprep.subr.mxu0 0.0
        %1429 = vmatpush1.msra.mxu0 0.0
        %1430 = vmatprep.subr.mxu0 0.0
        %1431 = vmatpush1.msra.mxu0 0.0
        %1432 = vmatprep.subr.mxu0 0.0
        %1433 = vmatpush1.msra.mxu0 0.0
        %1434 = vmatprep.subr.mxu0 0.0
        %1435 = vmatpush1.msra.mxu0 0.0
        %1436 = vmatprep.subr.mxu0 0.0
        %1437 = vmatpush1.msra.mxu0 0.0
        %1438 = vmatprep.subr.mxu0 0.0
        %1439 = vmatpush1.msra.mxu0 0.0
        %1440 = vmatprep.subr.mxu0 0.0
        %1441 = vmatpush1.msra.mxu0 0.0
        %1442 = vmatprep.subr.mxu0 0.0
        %1443 = vmatpush1.msra.mxu0 0.0
        %1444 = vmatprep.subr.mxu0 0.0
        %1445 = vmatpush1.msra.mxu0 0.0
        %1446 = vmatprep.mubr.f32.mxu0 0.0
        %1447 = vmatmul.mubr.f32.gmra.mrb[0].mxu0 %v588
        %v1448 = vpop.f32.mrb[0].mxu0
        %v1449 = vadd.f32 %v1233, %v1448
        %v1450 = vpop.f32.mrb[0].mxu0
        %1451 = vdwg.mxu0
        %1452 = vmatprep.subr.mxu0 0.0
        %1453 = vmatpush1.msra.mxu0 %v1209
        %1454 = vmatprep.subr.mxu0 0.0
        %1455 = vmatpush1.msra.mxu0 %v1210
        %1456 = vmatprep.subr.mxu0 0.0
        %1457 = vmatpush1.msra.mxu0 %v1211
        %1458 = vmatprep.subr.mxu0 0.0
        %1459 = vmatpush1.msra.mxu0 %v1212
        %1460 = vmatprep.subr.mxu0 0.0
        %1461 = vmatpush1.msra.mxu0 0.0
        %1462 = vmatprep.subr.mxu0 0.0
        %1463 = vmatpush1.msra.mxu0 0.0
        %1464 = vmatprep.subr.mxu0 0.0
        %1465 = vmatpush1.msra.mxu0 0.0
        %1466 = vmatprep.subr.mxu0 0.0
        %1467 = vmatpush1.msra.mxu0 0.0
        %1468 = vmatprep.subr.mxu0 0.0
        %1469 = vmatpush1.msra.mxu0 0.0
        %1470 = vmatprep.subr.mxu0 0.0
        %1471 = vmatpush1.msra.mxu0 0.0
        %1472 = vmatprep.subr.mxu0 0.0
        %1473 = vmatpush1.msra.mxu0 0.0
        %1474 = vmatprep.subr.mxu0 0.0
        %1475 = vmatpush1.msra.mxu0 0.0
        %1476 = vmatprep.subr.mxu0 0.0
        %1477 = vmatpush1.msra.mxu0 0.0
        %1478 = vmatprep.subr.mxu0 0.0
        %1479 = vmatpush1.msra.mxu0 0.0
        %1480 = vmatprep.subr.mxu0 0.0
        %1481 = vmatpush1.msra.mxu0 0.0
        %1482 = vmatprep.subr.mxu0 0.0
        %1483 = vmatpush1.msra.mxu0 0.0
        %1484 = vmatprep.subr.mxu0 0.0
        %1485 = vmatpush1.msra.mxu0 0.0
        %1486 = vmatprep.subr.mxu0 0.0
        %1487 = vmatpush1.msra.mxu0 0.0
        %1488 = vmatprep.subr.mxu0 0.0
        %1489 = vmatpush1.msra.mxu0 0.0
        %1490 = vmatprep.subr.mxu0 0.0
        %1491 = vmatpush1.msra.mxu0 0.0
        %1492 = vmatprep.subr.mxu0 0.0
        %1493 = vmatpush1.msra.mxu0 0.0
        %1494 = vmatprep.subr.mxu0 0.0
        %1495 = vmatpush1.msra.mxu0 0.0
        %1496 = vmatprep.subr.mxu0 0.0
        %1497 = vmatpush1.msra.mxu0 0.0
        %1498 = vmatprep.subr.mxu0 0.0
        %1499 = vmatpush1.msra.mxu0 0.0
        %1500 = vmatprep.subr.mxu0 0.0
        %1501 = vmatpush1.msra.mxu0 0.0
        %1502 = vmatprep.subr.mxu0 0.0
        %1503 = vmatpush1.msra.mxu0 0.0
        %1504 = vmatprep.subr.mxu0 0.0
        %1505 = vmatpush1.msra.mxu0 0.0
        %1506 = vmatprep.subr.mxu0 0.0
        %1507 = vmatpush1.msra.mxu0 0.0
        %1508 = vmatprep.subr.mxu0 0.0
        %1509 = vmatpush1.msra.mxu0 0.0
        %1510 = vmatprep.subr.mxu0 0.0
        %1511 = vmatpush1.msra.mxu0 0.0
        %1512 = vmatprep.subr.mxu0 0.0
        %1513 = vmatpush1.msra.mxu0 0.0
        %1514 = vmatprep.subr.mxu0 0.0
        %1515 = vmatpush1.msra.mxu0 0.0
        %1516 = vmatprep.mubr.f32.mxu0 0.0
        %1517 = vmatmul.mubr.f32.gmra.mrb[0].mxu0 %v588
        %v1518 = vpop.f32.mrb[0].mxu0
        %v1519 = vadd.f32 %v1237, %v1518
        %v1520 = vpop.f32.mrb[0].mxu0
        %1521 = vdwg.mxu0
        %vm1522 = vcmask 64512
        %v1524 = vsel %vm1522, %v657, 0
        %v1527 = vsel %vm1522, %v983, 0
        %1529 = vmatprep.subr.mxu0 0.0
        %1530 = vmatpush1.xpose.msra.mxu0 %v1527
        %1531 = vmatprep.subr.mxu0 0.0
        %1532 = vmatpush1.xpose.msra.mxu0 0.0
        %1533 = vmatprep.subr.mxu0 0.0
        %1534 = vmatpush1.xpose.msra.mxu0 0.0
        %1535 = vmatprep.subr.mxu0 0.0
        %1536 = vmatpush1.xpose.msra.mxu0 0.0
        %1537 = vmatprep.subr.mxu0 0.0
        %1538 = vmatpush1.xpose.msra.mxu0 0.0
        %1539 = vmatprep.subr.mxu0 0.0
        %1540 = vmatpush1.xpose.msra.mxu0 0.0
        %1541 = vmatprep.subr.mxu0 0.0
        %1542 = vmatpush1.xpose.msra.mxu0 0.0
        %1543 = vmatprep.subr.mxu0 0.0
        %1544 = vmatpush1.xpose.msra.mxu0 0.0
        %1545 = vmatprep.subr.mxu0 0.0
        %1546 = vmatpush1.xpose.msra.mxu0 0.0
        %1547 = vmatprep.subr.mxu0 0.0
        %1548 = vmatpush1.xpose.msra.mxu0 0.0
        %1549 = vmatprep.subr.mxu0 0.0
        %1550 = vmatpush1.xpose.msra.mxu0 0.0
        %1551 = vmatprep.subr.mxu0 0.0
        %1552 = vmatpush1.xpose.msra.mxu0 0.0
        %1553 = vmatprep.subr.mxu0 0.0
        %1554 = vmatpush1.xpose.msra.mxu0 0.0
        %1555 = vmatprep.subr.mxu0 0.0
        %1556 = vmatpush1.xpose.msra.mxu0 0.0
        %1557 = vmatprep.subr.mxu0 0.0
        %1558 = vmatpush1.xpose.msra.mxu0 0.0
        %1559 = vmatprep.subr.mxu0 0.0
        %1560 = vmatpush1.xpose.msra.mxu0 0.0
        %1561 = vmatprep.subr.mxu0 0.0
        %1562 = vmatpush1.xpose.msra.mxu0 0.0
        %1563 = vmatprep.subr.mxu0 0.0
        %1564 = vmatpush1.xpose.msra.mxu0 0.0
        %1565 = vmatprep.subr.mxu0 0.0
        %1566 = vmatpush1.xpose.msra.mxu0 0.0
        %1567 = vmatprep.subr.mxu0 0.0
        %1568 = vmatpush1.xpose.msra.mxu0 0.0
        %1569 = vmatprep.subr.mxu0 0.0
        %1570 = vmatpush1.xpose.msra.mxu0 0.0
        %1571 = vmatprep.subr.mxu0 0.0
        %1572 = vmatpush1.xpose.msra.mxu0 0.0
        %1573 = vmatprep.subr.mxu0 0.0
        %1574 = vmatpush1.xpose.msra.mxu0 0.0
        %1575 = vmatprep.subr.mxu0 0.0
        %1576 = vmatpush1.xpose.msra.mxu0 0.0
        %1577 = vmatprep.subr.mxu0 0.0
        %1578 = vmatpush1.xpose.msra.mxu0 0.0
        %1579 = vmatprep.subr.mxu0 0.0
        %1580 = vmatpush1.xpose.msra.mxu0 0.0
        %1581 = vmatprep.subr.mxu0 0.0
        %1582 = vmatpush1.xpose.msra.mxu0 0.0
        %1583 = vmatprep.subr.mxu0 0.0
        %1584 = vmatpush1.xpose.msra.mxu0 0.0
        %1585 = vmatprep.subr.mxu0 0.0
        %1586 = vmatpush1.xpose.msra.mxu0 0.0
        %1587 = vmatprep.subr.mxu0 0.0
        %1588 = vmatpush1.xpose.msra.mxu0 0.0
        %1589 = vmatprep.subr.mxu0 0.0
        %1590 = vmatpush1.xpose.msra.mxu0 0.0
        %1591 = vmatprep.subr.mxu0 0.0
        %1592 = vmatpush1.xpose.msra.mxu0 0.0
        %1593 = vmatprep.mubr.f32.mxu0 0.0
        %1594 = vmatmul.mubr.f32.gmra.mrb[0].mxu0 %v1524
        %v1595 = vpop.f32.mrb[0].mxu0
        %v1596 = vadd.f32 0.0, %v1595
        %v1597 = vpop.f32.mrb[0].mxu0
        %1598 = vdwg.mxu0
        %v1600 = vsel %vm1522, %v727, 0
        %v1603 = vsel %vm1522, %v1053, 0
        %1605 = vmatprep.subr.mxu0 0.0
        %1606 = vmatpush1.xpose.msra.mxu0 %v1603
        %1607 = vmatprep.subr.mxu0 0.0
        %1608 = vmatpush1.xpose.msra.mxu0 0.0
        %1609 = vmatprep.subr.mxu0 0.0
        %1610 = vmatpush1.xpose.msra.mxu0 0.0
        %1611 = vmatprep.subr.mxu0 0.0
        %1612 = vmatpush1.xpose.msra.mxu0 0.0
        %1613 = vmatprep.subr.mxu0 0.0
        %1614 = vmatpush1.xpose.msra.mxu0 0.0
        %1615 = vmatprep.subr.mxu0 0.0
        %1616 = vmatpush1.xpose.msra.mxu0 0.0
        %1617 = vmatprep.subr.mxu0 0.0
        %1618 = vmatpush1.xpose.msra.mxu0 0.0
        %1619 = vmatprep.subr.mxu0 0.0
        %1620 = vmatpush1.xpose.msra.mxu0 0.0
        %1621 = vmatprep.subr.mxu0 0.0
        %1622 = vmatpush1.xpose.msra.mxu0 0.0
        %1623 = vmatprep.subr.mxu0 0.0
        %1624 = vmatpush1.xpose.msra.mxu0 0.0
        %1625 = vmatprep.subr.mxu0 0.0
        %1626 = vmatpush1.xpose.msra.mxu0 0.0
        %1627 = vmatprep.subr.mxu0 0.0
        %1628 = vmatpush1.xpose.msra.mxu0 0.0
        %1629 = vmatprep.subr.mxu0 0.0
        %1630 = vmatpush1.xpose.msra.mxu0 0.0
        %1631 = vmatprep.subr.mxu0 0.0
        %1632 = vmatpush1.xpose.msra.mxu0 0.0
        %1633 = vmatprep.subr.mxu0 0.0
        %1634 = vmatpush1.xpose.msra.mxu0 0.0
        %1635 = vmatprep.subr.mxu0 0.0
        %1636 = vmatpush1.xpose.msra.mxu0 0.0
        %1637 = vmatprep.subr.mxu0 0.0
        %1638 = vmatpush1.xpose.msra.mxu0 0.0
        %1639 = vmatprep.subr.mxu0 0.0
        %1640 = vmatpush1.xpose.msra.mxu0 0.0
        %1641 = vmatprep.subr.mxu0 0.0
        %1642 = vmatpush1.xpose.msra.mxu0 0.0
        %1643 = vmatprep.subr.mxu0 0.0
        %1644 = vmatpush1.xpose.msra.mxu0 0.0
        %1645 = vmatprep.subr.mxu0 0.0
        %1646 = vmatpush1.xpose.msra.mxu0 0.0
        %1647 = vmatprep.subr.mxu0 0.0
        %1648 = vmatpush1.xpose.msra.mxu0 0.0
        %1649 = vmatprep.subr.mxu0 0.0
        %1650 = vmatpush1.xpose.msra.mxu0 0.0
        %1651 = vmatprep.subr.mxu0 0.0
        %1652 = vmatpush1.xpose.msra.mxu0 0.0
        %1653 = vmatprep.subr.mxu0 0.0
        %1654 = vmatpush1.xpose.msra.mxu0 0.0
        %1655 = vmatprep.subr.mxu0 0.0
        %1656 = vmatpush1.xpose.msra.mxu0 0.0
        %1657 = vmatprep.subr.mxu0 0.0
        %1658 = vmatpush1.xpose.msra.mxu0 0.0
        %1659 = vmatprep.subr.mxu0 0.0
        %1660 = vmatpush1.xpose.msra.mxu0 0.0
        %1661 = vmatprep.subr.mxu0 0.0
        %1662 = vmatpush1.xpose.msra.mxu0 0.0
        %1663 = vmatprep.subr.mxu0 0.0
        %1664 = vmatpush1.xpose.msra.mxu0 0.0
        %1665 = vmatprep.subr.mxu0 0.0
        %1666 = vmatpush1.xpose.msra.mxu0 0.0
        %1667 = vmatprep.subr.mxu0 0.0
        %1668 = vmatpush1.xpose.msra.mxu0 0.0
        %1669 = vmatprep.mubr.f32.mxu0 0.0
        %1670 = vmatmul.mubr.f32.gmra.mrb[0].mxu0 %v1600
        %v1671 = vpop.f32.mrb[0].mxu0
        %v1672 = vadd.f32 0.0, %v1671
        %v1673 = vpop.f32.mrb[0].mxu0
        %1674 = vdwg.mxu0
        %v1676 = vsel %vm1522, %v797, 0
        %v1679 = vsel %vm1522, %v1123, 0
        %1681 = vmatprep.subr.mxu0 0.0
        %1682 = vmatpush1.xpose.msra.mxu0 %v1679
        %1683 = vmatprep.subr.mxu0 0.0
        %1684 = vmatpush1.xpose.msra.mxu0 0.0
        %1685 = vmatprep.subr.mxu0 0.0
        %1686 = vmatpush1.xpose.msra.mxu0 0.0
        %1687 = vmatprep.subr.mxu0 0.0
        %1688 = vmatpush1.xpose.msra.mxu0 0.0
        %1689 = vmatprep.subr.mxu0 0.0
        %1690 = vmatpush1.xpose.msra.mxu0 0.0
        %1691 = vmatprep.subr.mxu0 0.0
        %1692 = vmatpush1.xpose.msra.mxu0 0.0
        %1693 = vmatprep.subr.mxu0 0.0
        %1694 = vmatpush1.xpose.msra.mxu0 0.0
        %1695 = vmatprep.subr.mxu0 0.0
        %1696 = vmatpush1.xpose.msra.mxu0 0.0
        %1697 = vmatprep.subr.mxu0 0.0
        %1698 = vmatpush1.xpose.msra.mxu0 0.0
        %1699 = vmatprep.subr.mxu0 0.0
        %1700 = vmatpush1.xpose.msra.mxu0 0.0
        %1701 = vmatprep.subr.mxu0 0.0
        %1702 = vmatpush1.xpose.msra.mxu0 0.0
        %1703 = vmatprep.subr.mxu0 0.0
        %1704 = vmatpush1.xpose.msra.mxu0 0.0
        %1705 = vmatprep.subr.mxu0 0.0
        %1706 = vmatpush1.xpose.msra.mxu0 0.0
        %1707 = vmatprep.subr.mxu0 0.0
        %1708 = vmatpush1.xpose.msra.mxu0 0.0
        %1709 = vmatprep.subr.mxu0 0.0
        %1710 = vmatpush1.xpose.msra.mxu0 0.0
        %1711 = vmatprep.subr.mxu0 0.0
        %1712 = vmatpush1.xpose.msra.mxu0 0.0
        %1713 = vmatprep.subr.mxu0 0.0
        %1714 = vmatpush1.xpose.msra.mxu0 0.0
        %1715 = vmatprep.subr.mxu0 0.0
        %1716 = vmatpush1.xpose.msra.mxu0 0.0
        %1717 = vmatprep.subr.mxu0 0.0
        %1718 = vmatpush1.xpose.msra.mxu0 0.0
        %1719 = vmatprep.subr.mxu0 0.0
        %1720 = vmatpush1.xpose.msra.mxu0 0.0
        %1721 = vmatprep.subr.mxu0 0.0
        %1722 = vmatpush1.xpose.msra.mxu0 0.0
        %1723 = vmatprep.subr.mxu0 0.0
        %1724 = vmatpush1.xpose.msra.mxu0 0.0
        %1725 = vmatprep.subr.mxu0 0.0
        %1726 = vmatpush1.xpose.msra.mxu0 0.0
        %1727 = vmatprep.subr.mxu0 0.0
        %1728 = vmatpush1.xpose.msra.mxu0 0.0
        %1729 = vmatprep.subr.mxu0 0.0
        %1730 = vmatpush1.xpose.msra.mxu0 0.0
        %1731 = vmatprep.subr.mxu0 0.0
        %1732 = vmatpush1.xpose.msra.mxu0 0.0
        %1733 = vmatprep.subr.mxu0 0.0
        %1734 = vmatpush1.xpose.msra.mxu0 0.0
        %1735 = vmatprep.subr.mxu0 0.0
        %1736 = vmatpush1.xpose.msra.mxu0 0.0
        %1737 = vmatprep.subr.mxu0 0.0
        %1738 = vmatpush1.xpose.msra.mxu0 0.0
        %1739 = vmatprep.subr.mxu0 0.0
        %1740 = vmatpush1.xpose.msra.mxu0 0.0
        %1741 = vmatprep.subr.mxu0 0.0
        %1742 = vmatpush1.xpose.msra.mxu0 0.0
        %1743 = vmatprep.subr.mxu0 0.0
        %1744 = vmatpush1.xpose.msra.mxu0 0.0
        %1745 = vmatprep.mubr.f32.mxu0 0.0
        %1746 = vmatmul.mubr.f32.gmra.mrb[0].mxu0 %v1676
        %v1747 = vpop.f32.mrb[0].mxu0
        %v1748 = vadd.f32 0.0, %v1747
        %v1749 = vpop.f32.mrb[0].mxu0
        %1750 = vdwg.mxu0
        %v1752 = vsel %vm1522, %v867, 0
        %v1755 = vsel %vm1522, %v1193, 0
        %1757 = vmatprep.subr.mxu0 0.0
        %1758 = vmatpush1.xpose.msra.mxu0 %v1755
        %1759 = vmatprep.subr.mxu0 0.0
        %1760 = vmatpush1.xpose.msra.mxu0 0.0
        %1761 = vmatprep.subr.mxu0 0.0
        %1762 = vmatpush1.xpose.msra.mxu0 0.0
        %1763 = vmatprep.subr.mxu0 0.0
        %1764 = vmatpush1.xpose.msra.mxu0 0.0
        %1765 = vmatprep.subr.mxu0 0.0
        %1766 = vmatpush1.xpose.msra.mxu0 0.0
        %1767 = vmatprep.subr.mxu0 0.0
        %1768 = vmatpush1.xpose.msra.mxu0 0.0
        %1769 = vmatprep.subr.mxu0 0.0
        %1770 = vmatpush1.xpose.msra.mxu0 0.0
        %1771 = vmatprep.subr.mxu0 0.0
        %1772 = vmatpush1.xpose.msra.mxu0 0.0
        %1773 = vmatprep.subr.mxu0 0.0
        %1774 = vmatpush1.xpose.msra.mxu0 0.0
        %1775 = vmatprep.subr.mxu0 0.0
        %1776 = vmatpush1.xpose.msra.mxu0 0.0
        %1777 = vmatprep.subr.mxu0 0.0
        %1778 = vmatpush1.xpose.msra.mxu0 0.0
        %1779 = vmatprep.subr.mxu0 0.0
        %1780 = vmatpush1.xpose.msra.mxu0 0.0
        %1781 = vmatprep.subr.mxu0 0.0
        %1782 = vmatpush1.xpose.msra.mxu0 0.0
        %1783 = vmatprep.subr.mxu0 0.0
        %1784 = vmatpush1.xpose.msra.mxu0 0.0
        %1785 = vmatprep.subr.mxu0 0.0
        %1786 = vmatpush1.xpose.msra.mxu0 0.0
        %1787 = vmatprep.subr.mxu0 0.0
        %1788 = vmatpush1.xpose.msra.mxu0 0.0
        %1789 = vmatprep.subr.mxu0 0.0
        %1790 = vmatpush1.xpose.msra.mxu0 0.0
        %1791 = vmatprep.subr.mxu0 0.0
        %1792 = vmatpush1.xpose.msra.mxu0 0.0
        %1793 = vmatprep.subr.mxu0 0.0
        %1794 = vmatpush1.xpose.msra.mxu0 0.0
        %1795 = vmatprep.subr.mxu0 0.0
        %1796 = vmatpush1.xpose.msra.mxu0 0.0
        %1797 = vmatprep.subr.mxu0 0.0
        %1798 = vmatpush1.xpose.msra.mxu0 0.0
        %1799 = vmatprep.subr.mxu0 0.0
        %1800 = vmatpush1.xpose.msra.mxu0 0.0
        %1801 = vmatprep.subr.mxu0 0.0
        %1802 = vmatpush1.xpose.msra.mxu0 0.0
        %1803 = vmatprep.subr.mxu0 0.0
        %1804 = vmatpush1.xpose.msra.mxu0 0.0
        %1805 = vmatprep.subr.mxu0 0.0
        %1806 = vmatpush1.xpose.msra.mxu0 0.0
        %1807 = vmatprep.subr.mxu0 0.0
        %1808 = vmatpush1.xpose.msra.mxu0 0.0
        %1809 = vmatprep.subr.mxu0 0.0
        %1810 = vmatpush1.xpose.msra.mxu0 0.0
        %1811 = vmatprep.subr.mxu0 0.0
        %1812 = vmatpush1.xpose.msra.mxu0 0.0
        %1813 = vmatprep.subr.mxu0 0.0
        %1814 = vmatpush1.xpose.msra.mxu0 0.0
        %1815 = vmatprep.subr.mxu0 0.0
        %1816 = vmatpush1.xpose.msra.mxu0 0.0
        %1817 = vmatprep.subr.mxu0 0.0
        %1818 = vmatpush1.xpose.msra.mxu0 0.0
        %1819 = vmatprep.subr.mxu0 0.0
        %1820 = vmatpush1.xpose.msra.mxu0 0.0
        %1821 = vmatprep.mubr.f32.mxu0 0.0
        %1822 = vmatmul.mubr.f32.gmra.mrb[0].mxu0 %v1752
        %v1823 = vpop.f32.mrb[0].mxu0
        %v1824 = vadd.f32 0.0, %v1823
        %v1825 = vpop.f32.mrb[0].mxu0
        %1826 = vdwg.mxu0
        %v1827 = vmul.f32 %v1596, 0.35355338
        %v1828 = vmul.f32 %v1672, 0.35355338
        %v1829 = vmul.f32 %v1748, 0.35355338
        %v1830 = vmul.f32 %v1824, 0.35355338
        %vm1831 = vcmask 36864
        %v1832 = vsel %vm1831, %v1827, -inf
        %1833 = vmax.xlane.f32.xlu0 %v1832
        %v1834 = vpop.xlane.xlu0 %1833
        %v1835 = vsel %vm1831, %v1828, -inf
        %1836 = vmax.xlane.f32.xlu0 %v1835
        %v1837 = vpop.xlane.xlu0 %1836
        %v1838 = vsel %vm1831, %v1829, -inf
        %1839 = vmax.xlane.f32.xlu0 %v1838
        %v1840 = vpop.xlane.xlu0 %1839
        %v1841 = vsel %vm1831, %v1830, -inf
        %1842 = vmax.xlane.f32.xlu0 %v1841
        %v1843 = vpop.xlane.xlu0 %1842
        %v1844 = vsub.f32 %v1827, %v1834
        %v1845 = vsub.f32 %v1828, %v1837
        %v1846 = vsub.f32 %v1829, %v1840
        %v1847 = vsub.f32 %v1830, %v1843
        %v1848 = vmul.f32 %v1844, 1.442695
        %v1849 = vpow.pop %v1848
        %v1850 = vmul.f32 %v1845, 1.442695
        %v1851 = vpow.pop %v1850
        %v1852 = vmul.f32 %v1846, 1.442695
        %v1853 = vpow.pop %v1852
        %v1854 = vmul.f32 %v1847, 1.442695
        %v1855 = vpow.pop %v1854
        %v1856 = vsel %vm1831, %v1849, 0.0
        %1857 = vadd.xlane.f32.xlu0 %v1856
        %v1858 = vpop.xlane.xlu0 %1857
        %v1859 = vsel %vm1831, %v1851, 0.0
        %1860 = vadd.xlane.f32.xlu0 %v1859
        %v1861 = vpop.xlane.xlu0 %1860
        %v1862 = vsel %vm1831, %v1853, 0.0
        %1863 = vadd.xlane.f32.xlu0 %v1862
        %v1864 = vpop.xlane.xlu0 %1863
        %v1865 = vsel %vm1831, %v1855, 0.0
        %1866 = vadd.xlane.f32.xlu0 %v1865
        %v1867 = vpop.xlane.xlu0 %1866
        %v1868 = vrcp.pop %v1858
        %v1869 = vrcp.pop %v1861
        %v1870 = vrcp.pop %v1864
        %v1871 = vrcp.pop %v1867
        %v1872 = vmul.f32 %v1849, %v1868
        %v1873 = vmul.f32 %v1851, %v1869
        %v1874 = vmul.f32 %v1853, %v1870
        %v1875 = vmul.f32 %v1855, %v1871
        %vm1876 = vcmask 39936
        %v1878 = vsel %vm1876, %v1872, 0
        %vm1880 = vcmask 1044480
        %v1882 = vsel %vm1880, %v1309, 0
        %1884 = vmatprep.subr.mxu0 0.0
        %1885 = vmatpush1.msra.mxu0 %v1882
        %1886 = vmatprep.subr.mxu0 0.0
        %1887 = vmatpush1.msra.mxu0 0.0
        %1888 = vmatprep.subr.mxu0 0.0
        %1889 = vmatpush1.msra.mxu0 0.0
        %1890 = vmatprep.subr.mxu0 0.0
        %1891 = vmatpush1.msra.mxu0 0.0
        %1892 = vmatprep.subr.mxu0 0.0
        %1893 = vmatpush1.msra.mxu0 0.0
        %1894 = vmatprep.subr.mxu0 0.0
        %1895 = vmatpush1.msra.mxu0 0.0
        %1896 = vmatprep.subr.mxu0 0.0
        %1897 = vmatpush1.msra.mxu0 0.0
        %1898 = vmatprep.subr.mxu0 0.0
        %1899 = vmatpush1.msra.mxu0 0.0
        %1900 = vmatprep.subr.mxu0 0.0
        %1901 = vmatpush1.msra.mxu0 0.0
        %1902 = vmatprep.subr.mxu0 0.0
        %1903 = vmatpush1.msra.mxu0 0.0
        %1904 = vmatprep.subr.mxu0 0.0
        %1905 = vmatpush1.msra.mxu0 0.0
        %1906 = vmatprep.subr.mxu0 0.0
        %1907 = vmatpush1.msra.mxu0 0.0
        %1908 = vmatprep.subr.mxu0 0.0
        %1909 = vmatpush1.msra.mxu0 0.0
        %1910 = vmatprep.subr.mxu0 0.0
        %1911 = vmatpush1.msra.mxu0 0.0
        %1912 = vmatprep.subr.mxu0 0.0
        %1913 = vmatpush1.msra.mxu0 0.0
        %1914 = vmatprep.subr.mxu0 0.0
        %1915 = vmatpush1.msra.mxu0 0.0
        %1916 = vmatprep.subr.mxu0 0.0
        %1917 = vmatpush1.msra.mxu0 0.0
        %1918 = vmatprep.subr.mxu0 0.0
        %1919 = vmatpush1.msra.mxu0 0.0
        %1920 = vmatprep.subr.mxu0 0.0
        %1921 = vmatpush1.msra.mxu0 0.0
        %1922 = vmatprep.subr.mxu0 0.0
        %1923 = vmatpush1.msra.mxu0 0.0
        %1924 = vmatprep.subr.mxu0 0.0
        %1925 = vmatpush1.msra.mxu0 0.0
        %1926 = vmatprep.subr.mxu0 0.0
        %1927 = vmatpush1.msra.mxu0 0.0
        %1928 = vmatprep.subr.mxu0 0.0
        %1929 = vmatpush1.msra.mxu0 0.0
        %1930 = vmatprep.subr.mxu0 0.0
        %1931 = vmatpush1.msra.mxu0 0.0
        %1932 = vmatprep.subr.mxu0 0.0
        %1933 = vmatpush1.msra.mxu0 0.0
        %1934 = vmatprep.subr.mxu0 0.0
        %1935 = vmatpush1.msra.mxu0 0.0
        %1936 = vmatprep.subr.mxu0 0.0
        %1937 = vmatpush1.msra.mxu0 0.0
        %1938 = vmatprep.subr.mxu0 0.0
        %1939 = vmatpush1.msra.mxu0 0.0
        %1940 = vmatprep.subr.mxu0 0.0
        %1941 = vmatpush1.msra.mxu0 0.0
        %1942 = vmatprep.subr.mxu0 0.0
        %1943 = vmatpush1.msra.mxu0 0.0
        %1944 = vmatprep.subr.mxu0 0.0
        %1945 = vmatpush1.msra.mxu0 0.0
        %1946 = vmatprep.subr.mxu0 0.0
        %1947 = vmatpush1.msra.mxu0 0.0
        %1948 = vmatprep.mubr.f32.mxu0 0.0
        %1949 = vmatmul.mubr.f32.gmra.mrb[0].mxu0 %v1878
        %v1950 = vpop.f32.mrb[0].mxu0
        %v1951 = vadd.f32 0.0, %v1950
        %v1952 = vpop.f32.mrb[0].mxu0
        %1953 = vdwg.mxu0
        %v1955 = vsel %vm1876, %v1873, 0
        %v1958 = vsel %vm1880, %v1379, 0
        %1960 = vmatprep.subr.mxu0 0.0
        %1961 = vmatpush1.msra.mxu0 %v1958
        %1962 = vmatprep.subr.mxu0 0.0
        %1963 = vmatpush1.msra.mxu0 0.0
        %1964 = vmatprep.subr.mxu0 0.0
        %1965 = vmatpush1.msra.mxu0 0.0
        %1966 = vmatprep.subr.mxu0 0.0
        %1967 = vmatpush1.msra.mxu0 0.0
        %1968 = vmatprep.subr.mxu0 0.0
        %1969 = vmatpush1.msra.mxu0 0.0
        %1970 = vmatprep.subr.mxu0 0.0
        %1971 = vmatpush1.msra.mxu0 0.0
        %1972 = vmatprep.subr.mxu0 0.0
        %1973 = vmatpush1.msra.mxu0 0.0
        %1974 = vmatprep.subr.mxu0 0.0
        %1975 = vmatpush1.msra.mxu0 0.0
        %1976 = vmatprep.subr.mxu0 0.0
        %1977 = vmatpush1.msra.mxu0 0.0
        %1978 = vmatprep.subr.mxu0 0.0
        %1979 = vmatpush1.msra.mxu0 0.0
        %1980 = vmatprep.subr.mxu0 0.0
        %1981 = vmatpush1.msra.mxu0 0.0
        %1982 = vmatprep.subr.mxu0 0.0
        %1983 = vmatpush1.msra.mxu0 0.0
        %1984 = vmatprep.subr.mxu0 0.0
        %1985 = vmatpush1.msra.mxu0 0.0
        %1986 = vmatprep.subr.mxu0 0.0
        %1987 = vmatpush1.msra.mxu0 0.0
        %1988 = vmatprep.subr.mxu0 0.0
        %1989 = vmatpush1.msra.mxu0 0.0
        %1990 = vmatprep.subr.mxu0 0.0
        %1991 = vmatpush1.msra.mxu0 0.0
        %1992 = vmatprep.subr.mxu0 0.0
        %1993 = vmatpush1.msra.mxu0 0.0
        %1994 = vmatprep.subr.mxu0 0.0
        %1995 = vmatpush1.msra.mxu0 0.0
        %1996 = vmatprep.subr.mxu0 0.0
        %1997 = vmatpush1.msra.mxu0 0.0
        %1998 = vmatprep.subr.mxu0 0.0
        %1999 = vmatpush1.msra.mxu0 0.0
        %2000 = vmatprep.subr.mxu0 0.0
        %2001 = vmatpush1.msra.mxu0 0.0
        %2002 = vmatprep.subr.mxu0 0.0
        %2003 = vmatpush1.msra.mxu0 0.0
        %2004 = vmatprep.subr.mxu0 0.0
        %2005 = vmatpush1.msra.mxu0 0.0
        %2006 = vmatprep.subr.mxu0 0.0
        %2007 = vmatpush1.msra.mxu0 0.0
        %2008 = vmatprep.subr.mxu0 0.0
        %2009 = vmatpush1.msra.mxu0 0.0
        %2010 = vmatprep.subr.mxu0 0.0
        %2011 = vmatpush1.msra.mxu0 0.0
        %2012 = vmatprep.subr.mxu0 0.0
        %2013 = vmatpush1.msra.mxu0 0.0
        %2014 = vmatprep.subr.mxu0 0.0
        %2015 = vmatpush1.msra.mxu0 0.0
        %2016 = vmatprep.subr.mxu0 0.0
        %2017 = vmatpush1.msra.mxu0 0.0
        %2018 = vmatprep.subr.mxu0 0.0
        %2019 = vmatpush1.msra.mxu0 0.0
        %2020 = vmatprep.subr.mxu0 0.0
        %2021 = vmatpush1.msra.mxu0 0.0
        %2022 = vmatprep.subr.mxu0 0.0
        %2023 = vmatpush1.msra.mxu0 0.0
        %2024 = vmatprep.mubr.f32.mxu0 0.0
        %2025 = vmatmul.mubr.f32.gmra.mrb[0].mxu0 %v1955
        %v2026 = vpop.f32.mrb[0].mxu0
        %v2027 = vadd.f32 0.0, %v2026
        %v2028 = vpop.f32.mrb[0].mxu0
        %2029 = vdwg.mxu0
        %v2031 = vsel %vm1876, %v1874, 0
        %v2034 = vsel %vm1880, %v1449, 0
        %2036 = vmatprep.subr.mxu0 0.0
        %2037 = vmatpush1.msra.mxu0 %v2034
        %2038 = vmatprep.subr.mxu0 0.0
        %2039 = vmatpush1.msra.mxu0 0.0
        %2040 = vmatprep.subr.mxu0 0.0
        %2041 = vmatpush1.msra.mxu0 0.0
        %2042 = vmatprep.subr.mxu0 0.0
        %2043 = vmatpush1.msra.mxu0 0.0
        %2044 = vmatprep.subr.mxu0 0.0
        %2045 = vmatpush1.msra.mxu0 0.0
        %2046 = vmatprep.subr.mxu0 0.0
        %2047 = vmatpush1.msra.mxu0 0.0
        %2048 = vmatprep.subr.mxu0 0.0
        %2049 = vmatpush1.msra.mxu0 0.0
        %2050 = vmatprep.subr.mxu0 0.0
        %2051 = vmatpush1.msra.mxu0 0.0
        %2052 = vmatprep.subr.mxu0 0.0
        %2053 = vmatpush1.msra.mxu0 0.0
        %2054 = vmatprep.subr.mxu0 0.0
        %2055 = vmatpush1.msra.mxu0 0.0
        %2056 = vmatprep.subr.mxu0 0.0
        %2057 = vmatpush1.msra.mxu0 0.0
        %2058 = vmatprep.subr.mxu0 0.0
        %2059 = vmatpush1.msra.mxu0 0.0
        %2060 = vmatprep.subr.mxu0 0.0
        %2061 = vmatpush1.msra.mxu0 0.0
        %2062 = vmatprep.subr.mxu0 0.0
        %2063 = vmatpush1.msra.mxu0 0.0
        %2064 = vmatprep.subr.mxu0 0.0
        %2065 = vmatpush1.msra.mxu0 0.0
        %2066 = vmatprep.subr.mxu0 0.0
        %2067 = vmatpush1.msra.mxu0 0.0
        %2068 = vmatprep.subr.mxu0 0.0
        %2069 = vmatpush1.msra.mxu0 0.0
        %2070 = vmatprep.subr.mxu0 0.0
        %2071 = vmatpush1.msra.mxu0 0.0
        %2072 = vmatprep.subr.mxu0 0.0
        %2073 = vmatpush1.msra.mxu0 0.0
        %2074 = vmatprep.subr.mxu0 0.0
        %2075 = vmatpush1.msra.mxu0 0.0
        %2076 = vmatprep.subr.mxu0 0.0
        %2077 = vmatpush1.msra.mxu0 0.0
        %2078 = vmatprep.subr.mxu0 0.0
        %2079 = vmatpush1.msra.mxu0 0.0
        %2080 = vmatprep.subr.mxu0 0.0
        %2081 = vmatpush1.msra.mxu0 0.0
        %2082 = vmatprep.subr.mxu0 0.0
        %2083 = vmatpush1.msra.mxu0 0.0
        %2084 = vmatprep.subr.mxu0 0.0
        %2085 = vmatpush1.msra.mxu0 0.0
        %2086 = vmatprep.subr.mxu0 0.0
        %2087 = vmatpush1.msra.mxu0 0.0
        %2088 = vmatprep.subr.mxu0 0.0
        %2089 = vmatpush1.msra.mxu0 0.0
        %2090 = vmatprep.subr.mxu0 0.0
        %2091 = vmatpush1.msra.mxu0 0.0
        %2092 = vmatprep.subr.mxu0 0.0
        %2093 = vmatpush1.msra.mxu0 0.0
        %2094 = vmatprep.subr.mxu0 0.0
        %2095 = vmatpush1.msra.mxu0 0.0
        %2096 = vmatprep.subr.mxu0 0.0
        %2097 = vmatpush1.msra.mxu0 0.0
        %2098 = vmatprep.subr.mxu0 0.0
        %2099 = vmatpush1.msra.mxu0 0.0
        %2100 = vmatprep.mubr.f32.mxu0 0.0
        %2101 = vmatmul.mubr.f32.gmra.mrb[0].mxu0 %v2031
        %v2102 = vpop.f32.mrb[0].mxu0
        %v2103 = vadd.f32 0.0, %v2102
        %v2104 = vpop.f32.mrb[0].mxu0
        %2105 = vdwg.mxu0
        %v2107 = vsel %vm1876, %v1875, 0
        %v2110 = vsel %vm1880, %v1519, 0
        %2112 = vmatprep.subr.mxu0 0.0
        %2113 = vmatpush1.msra.mxu0 %v2110
        %2114 = vmatprep.subr.mxu0 0.0
        %2115 = vmatpush1.msra.mxu0 0.0
        %2116 = vmatprep.subr.mxu0 0.0
        %2117 = vmatpush1.msra.mxu0 0.0
        %2118 = vmatprep.subr.mxu0 0.0
        %2119 = vmatpush1.msra.mxu0 0.0
        %2120 = vmatprep.subr.mxu0 0.0
        %2121 = vmatpush1.msra.mxu0 0.0
        %2122 = vmatprep.subr.mxu0 0.0
        %2123 = vmatpush1.msra.mxu0 0.0
        %2124 = vmatprep.subr.mxu0 0.0
        %2125 = vmatpush1.msra.mxu0 0.0
        %2126 = vmatprep.subr.mxu0 0.0
        %2127 = vmatpush1.msra.mxu0 0.0
        %2128 = vmatprep.subr.mxu0 0.0
        %2129 = vmatpush1.msra.mxu0 0.0
        %2130 = vmatprep.subr.mxu0 0.0
        %2131 = vmatpush1.msra.mxu0 0.0
        %2132 = vmatprep.subr.mxu0 0.0
        %2133 = vmatpush1.msra.mxu0 0.0
        %2134 = vmatprep.subr.mxu0 0.0
        %2135 = vmatpush1.msra.mxu0 0.0
        %2136 = vmatprep.subr.mxu0 0.0
        %2137 = vmatpush1.msra.mxu0 0.0
        %2138 = vmatprep.subr.mxu0 0.0
        %2139 = vmatpush1.msra.mxu0 0.0
        %2140 = vmatprep.subr.mxu0 0.0
        %2141 = vmatpush1.msra.mxu0 0.0
        %2142 = vmatprep.subr.mxu0 0.0
        %2143 = vmatpush1.msra.mxu0 0.0
        %2144 = vmatprep.subr.mxu0 0.0
        %2145 = vmatpush1.msra.mxu0 0.0
        %2146 = vmatprep.subr.mxu0 0.0
        %2147 = vmatpush1.msra.mxu0 0.0
        %2148 = vmatprep.subr.mxu0 0.0
        %2149 = vmatpush1.msra.mxu0 0.0
        %2150 = vmatprep.subr.mxu0 0.0
        %2151 = vmatpush1.msra.mxu0 0.0
        %2152 = vmatprep.subr.mxu0 0.0
        %2153 = vmatpush1.msra.mxu0 0.0
        %2154 = vmatprep.subr.mxu0 0.0
        %2155 = vmatpush1.msra.mxu0 0.0
        %2156 = vmatprep.subr.mxu0 0.0
        %2157 = vmatpush1.msra.mxu0 0.0
        %2158 = vmatprep.subr.mxu0 0.0
        %2159 = vmatpush1.msra.mxu0 0.0
        %2160 = vmatprep.subr.mxu0 0.0
        %2161 = vmatpush1.msra.mxu0 0.0
        %2162 = vmatprep.subr.mxu0 0.0
        %2163 = vmatpush1.msra.mxu0 0.0
        %2164 = vmatprep.subr.mxu0 0.0
        %2165 = vmatpush1.msra.mxu0 0.0
        %2166 = vmatprep.subr.mxu0 0.0
        %2167 = vmatpush1.msra.mxu0 0.0
        %2168 = vmatprep.subr.mxu0 0.0
        %2169 = vmatpush1.msra.mxu0 0.0
        %2170 = vmatprep.subr.mxu0 0.0
        %2171 = vmatpush1.msra.mxu0 0.0
        %2172 = vmatprep.subr.mxu0 0.0
        %2173 = vmatpush1.msra.mxu0 0.0
        %2174 = vmatprep.subr.mxu0 0.0
        %2175 = vmatpush1.msra.mxu0 0.0
        %2176 = vmatprep.mubr.f32.mxu0 0.0
        %2177 = vmatmul.mubr.f32.gmra.mrb[0].mxu0 %v2107
        %v2178 = vpop.f32.mrb[0].mxu0
        %v2179 = vadd.f32 0.0, %v2178
        %v2180 = vpop.f32.mrb[0].mxu0
        %2181 = vdwg.mxu0
        %v2182 = vld [vmem:[%s5] sm:$0xff]
        %v2183 = vld [vmem:[%s5 + $0x8] sm:$0xff]
        %v2184 = vld [vmem:[%s5 + $0x10] sm:$0xff]
        %v2185 = vld [vmem:[%s5 + $0x18] sm:$0xff]
        %v2187 = vsel %vm1522, %v1951, 0
        %2189 = vmatprep.subr.mxu0 0.0
        %2190 = vmatpush1.msra.mxu0 %v2182
        %2191 = vmatprep.subr.mxu0 0.0
        %2192 = vmatpush1.msra.mxu0 0.0
        %2193 = vmatprep.subr.mxu0 0.0
        %2194 = vmatpush1.msra.mxu0 0.0
        %2195 = vmatprep.subr.mxu0 0.0
        %2196 = vmatpush1.msra.mxu0 0.0
        %2197 = vmatprep.subr.mxu0 0.0
        %2198 = vmatpush1.msra.mxu0 0.0
        %2199 = vmatprep.subr.mxu0 0.0
        %2200 = vmatpush1.msra.mxu0 0.0
        %2201 = vmatprep.subr.mxu0 0.0
        %2202 = vmatpush1.msra.mxu0 0.0
        %2203 = vmatprep.subr.mxu0 0.0
        %2204 = vmatpush1.msra.mxu0 0.0
        %2205 = vmatprep.subr.mxu0 0.0
        %2206 = vmatpush1.msra.mxu0 0.0
        %2207 = vmatprep.subr.mxu0 0.0
        %2208 = vmatpush1.msra.mxu0 0.0
        %2209 = vmatprep.subr.mxu0 0.0
        %2210 = vmatpush1.msra.mxu0 0.0
        %2211 = vmatprep.subr.mxu0 0.0
        %2212 = vmatpush1.msra.mxu0 0.0
        %2213 = vmatprep.subr.mxu0 0.0
        %2214 = vmatpush1.msra.mxu0 0.0
        %2215 = vmatprep.subr.mxu0 0.0
        %2216 = vmatpush1.msra.mxu0 0.0
        %2217 = vmatprep.subr.mxu0 0.0
        %2218 = vmatpush1.msra.mxu0 0.0
        %2219 = vmatprep.subr.mxu0 0.0
        %2220 = vmatpush1.msra.mxu0 0.0
        %2221 = vmatprep.subr.mxu0 0.0
        %2222 = vmatpush1.msra.mxu0 0.0
        %2223 = vmatprep.subr.mxu0 0.0
        %2224 = vmatpush1.msra.mxu0 0.0
        %2225 = vmatprep.subr.mxu0 0.0
        %2226 = vmatpush1.msra.mxu0 0.0
        %2227 = vmatprep.subr.mxu0 0.0
        %2228 = vmatpush1.msra.mxu0 0.0
        %2229 = vmatprep.subr.mxu0 0.0
        %2230 = vmatpush1.msra.mxu0 0.0
        %2231 = vmatprep.subr.mxu0 0.0
        %2232 = vmatpush1.msra.mxu0 0.0
        %2233 = vmatprep.subr.mxu0 0.0
        %2234 = vmatpush1.msra.mxu0 0.0
        %2235 = vmatprep.subr.mxu0 0.0
        %2236 = vmatpush1.msra.mxu0 0.0
        %2237 = vmatprep.subr.mxu0 0.0
        %2238 = vmatpush1.msra.mxu0 0.0
        %2239 = vmatprep.subr.mxu0 0.0
        %2240 = vmatpush1.msra.mxu0 0.0
        %2241 = vmatprep.subr.mxu0 0.0
        %2242 = vmatpush1.msra.mxu0 0.0
        %2243 = vmatprep.subr.mxu0 0.0
        %2244 = vmatpush1.msra.mxu0 0.0
        %2245 = vmatprep.subr.mxu0 0.0
        %2246 = vmatpush1.msra.mxu0 0.0
        %2247 = vmatprep.subr.mxu0 0.0
        %2248 = vmatpush1.msra.mxu0 0.0
        %2249 = vmatprep.subr.mxu0 0.0
        %2250 = vmatpush1.msra.mxu0 0.0
        %2251 = vmatprep.subr.mxu0 0.0
        %2252 = vmatpush1.msra.mxu0 0.0
        %2253 = vmatprep.mubr.f32.mxu0 0.0
        %2254 = vmatmul.mubr.f32.gmra.mrb[0].mxu0 %v2187
        %v2255 = vpop.f32.mrb[0].mxu0
        %v2256 = vadd.f32 0.0, %v2255
        %v2257 = vpop.f32.mrb[0].mxu0
        %2258 = vdwg.mxu0
        %v2260 = vsel %vm1522, %v2027, 0
        %2262 = vmatprep.subr.mxu0 0.0
        %2263 = vmatpush1.msra.mxu0 %v2183
        %2264 = vmatprep.subr.mxu0 0.0
        %2265 = vmatpush1.msra.mxu0 0.0
        %2266 = vmatprep.subr.mxu0 0.0
        %2267 = vmatpush1.msra.mxu0 0.0
        %2268 = vmatprep.subr.mxu0 0.0
        %2269 = vmatpush1.msra.mxu0 0.0
        %2270 = vmatprep.subr.mxu0 0.0
        %2271 = vmatpush1.msra.mxu0 0.0
        %2272 = vmatprep.subr.mxu0 0.0
        %2273 = vmatpush1.msra.mxu0 0.0
        %2274 = vmatprep.subr.mxu0 0.0
        %2275 = vmatpush1.msra.mxu0 0.0
        %2276 = vmatprep.subr.mxu0 0.0
        %2277 = vmatpush1.msra.mxu0 0.0
        %2278 = vmatprep.subr.mxu0 0.0
        %2279 = vmatpush1.msra.mxu0 0.0
        %2280 = vmatprep.subr.mxu0 0.0
        %2281 = vmatpush1.msra.mxu0 0.0
        %2282 = vmatprep.subr.mxu0 0.0
        %2283 = vmatpush1.msra.mxu0 0.0
        %2284 = vmatprep.subr.mxu0 0.0
        %2285 = vmatpush1.msra.mxu0 0.0
        %2286 = vmatprep.subr.mxu0 0.0
        %2287 = vmatpush1.msra.mxu0 0.0
        %2288 = vmatprep.subr.mxu0 0.0
        %2289 = vmatpush1.msra.mxu0 0.0
        %2290 = vmatprep.subr.mxu0 0.0
        %2291 = vmatpush1.msra.mxu0 0.0
        %2292 = vmatprep.subr.mxu0 0.0
        %2293 = vmatpush1.msra.mxu0 0.0
        %2294 = vmatprep.subr.mxu0 0.0
        %2295 = vmatpush1.msra.mxu0 0.0
        %2296 = vmatprep.subr.mxu0 0.0
        %2297 = vmatpush1.msra.mxu0 0.0
        %2298 = vmatprep.subr.mxu0 0.0
        %2299 = vmatpush1.msra.mxu0 0.0
        %2300 = vmatprep.subr.mxu0 0.0
        %2301 = vmatpush1.msra.mxu0 0.0
        %2302 = vmatprep.subr.mxu0 0.0
        %2303 = vmatpush1.msra.mxu0 0.0
        %2304 = vmatprep.subr.mxu0 0.0
        %2305 = vmatpush1.msra.mxu0 0.0
        %2306 = vmatprep.subr.mxu0 0.0
        %2307 = vmatpush1.msra.mxu0 0.0
        %2308 = vmatprep.subr.mxu0 0.0
        %2309 = vmatpush1.msra.mxu0 0.0
        %2310 = vmatprep.subr.mxu0 0.0
        %2311 = vmatpush1.msra.mxu0 0.0
        %2312 = vmatprep.subr.mxu0 0.0
        %2313 = vmatpush1.msra.mxu0 0.0
        %2314 = vmatprep.subr.mxu0 0.0
        %2315 = vmatpush1.msra.mxu0 0.0
        %2316 = vmatprep.subr.mxu0 0.0
        %2317 = vmatpush1.msra.mxu0 0.0
        %2318 = vmatprep.subr.mxu0 0.0
        %2319 = vmatpush1.msra.mxu0 0.0
        %2320 = vmatprep.subr.mxu0 0.0
        %2321 = vmatpush1.msra.mxu0 0.0
        %2322 = vmatprep.subr.mxu0 0.0
        %2323 = vmatpush1.msra.mxu0 0.0
        %2324 = vmatprep.subr.mxu0 0.0
        %2325 = vmatpush1.msra.mxu0 0.0
        %2326 = vmatprep.mubr.f32.mxu0 0.0
        %2327 = vmatmul.mubr.f32.gmra.mrb[0].mxu0 %v2260
        %v2328 = vpop.f32.mrb[0].mxu0
        %v2329 = vadd.f32 0.0, %v2328
        %v2330 = vpop.f32.mrb[0].mxu0
        %2331 = vdwg.mxu0
        %v2333 = vsel %vm1522, %v2103, 0
        %2335 = vmatprep.subr.mxu0 0.0
        %2336 = vmatpush1.msra.mxu0 %v2184
        %2337 = vmatprep.subr.mxu0 0.0
        %2338 = vmatpush1.msra.mxu0 0.0
        %2339 = vmatprep.subr.mxu0 0.0
        %2340 = vmatpush1.msra.mxu0 0.0
        %2341 = vmatprep.subr.mxu0 0.0
        %2342 = vmatpush1.msra.mxu0 0.0
        %2343 = vmatprep.subr.mxu0 0.0
        %2344 = vmatpush1.msra.mxu0 0.0
        %2345 = vmatprep.subr.mxu0 0.0
        %2346 = vmatpush1.msra.mxu0 0.0
        %2347 = vmatprep.subr.mxu0 0.0
        %2348 = vmatpush1.msra.mxu0 0.0
        %2349 = vmatprep.subr.mxu0 0.0
        %2350 = vmatpush1.msra.mxu0 0.0
        %2351 = vmatprep.subr.mxu0 0.0
        %2352 = vmatpush1.msra.mxu0 0.0
        %2353 = vmatprep.subr.mxu0 0.0
        %2354 = vmatpush1.msra.mxu0 0.0
        %2355 = vmatprep.subr.mxu0 0.0
        %2356 = vmatpush1.msra.mxu0 0.0
        %2357 = vmatprep.subr.mxu0 0.0
        %2358 = vmatpush1.msra.mxu0 0.0
        %2359 = vmatprep.subr.mxu0 0.0
        %2360 = vmatpush1.msra.mxu0 0.0
        %2361 = vmatprep.subr.mxu0 0.0
        %2362 = vmatpush1.msra.mxu0 0.0
        %2363 = vmatprep.subr.mxu0 0.0
        %2364 = vmatpush1.msra.mxu0 0.0
        %2365 = vmatprep.subr.mxu0 0.0
        %2366 = vmatpush1.msra.mxu0 0.0
        %2367 = vmatprep.subr.mxu0 0.0
        %2368 = vmatpush1.msra.mxu0 0.0
        %2369 = vmatprep.subr.mxu0 0.0
        %2370 = vmatpush1.msra.mxu0 0.0
        %2371 = vmatprep.subr.mxu0 0.0
        %2372 = vmatpush1.msra.mxu0 0.0
        %2373 = vmatprep.subr.mxu0 0.0
        %2374 = vmatpush1.msra.mxu0 0.0
        %2375 = vmatprep.subr.mxu0 0.0
        %2376 = vmatpush1.msra.mxu0 0.0
        %2377 = vmatprep.subr.mxu0 0.0
        %2378 = vmatpush1.msra.mxu0 0.0
        %2379 = vmatprep.subr.mxu0 0.0
        %2380 = vmatpush1.msra.mxu0 0.0
        %2381 = vmatprep.subr.mxu0 0.0
        %2382 = vmatpush1.msra.mxu0 0.0
        %2383 = vmatprep.subr.mxu0 0.0
        %2384 = vmatpush1.msra.mxu0 0.0
        %2385 = vmatprep.subr.mxu0 0.0
        %2386 = vmatpush1.msra.mxu0 0.0
        %2387 = vmatprep.subr.mxu0 0.0
        %2388 = vmatpush1.msra.mxu0 0.0
        %2389 = vmatprep.subr.mxu0 0.0
        %2390 = vmatpush1.msra.mxu0 0.0
        %2391 = vmatprep.subr.mxu0 0.0
        %2392 = vmatpush1.msra.mxu0 0.0
        %2393 = vmatprep.subr.mxu0 0.0
        %2394 = vmatpush1.msra.mxu0 0.0
        %2395 = vmatprep.subr.mxu0 0.0
        %2396 = vmatpush1.msra.mxu0 0.0
        %2397 = vmatprep.subr.mxu0 0.0
        %2398 = vmatpush1.msra.mxu0 0.0
        %2399 = vmatprep.mubr.f32.mxu0 0.0
        %2400 = vmatmul.mubr.f32.gmra.mrb[0].mxu0 %v2333
        %v2401 = vpop.f32.mrb[0].mxu0
        %v2402 = vadd.f32 0.0, %v2401
        %v2403 = vpop.f32.mrb[0].mxu0
        %2404 = vdwg.mxu0
        %v2406 = vsel %vm1522, %v2179, 0
        %2408 = vmatprep.subr.mxu0 0.0
        %2409 = vmatpush1.msra.mxu0 %v2185
        %2410 = vmatprep.subr.mxu0 0.0
        %2411 = vmatpush1.msra.mxu0 0.0
        %2412 = vmatprep.subr.mxu0 0.0
        %2413 = vmatpush1.msra.mxu0 0.0
        %2414 = vmatprep.subr.mxu0 0.0
        %2415 = vmatpush1.msra.mxu0 0.0
        %2416 = vmatprep.subr.mxu0 0.0
        %2417 = vmatpush1.msra.mxu0 0.0
        %2418 = vmatprep.subr.mxu0 0.0
        %2419 = vmatpush1.msra.mxu0 0.0
        %2420 = vmatprep.subr.mxu0 0.0
        %2421 = vmatpush1.msra.mxu0 0.0
        %2422 = vmatprep.subr.mxu0 0.0
        %2423 = vmatpush1.msra.mxu0 0.0
        %2424 = vmatprep.subr.mxu0 0.0
        %2425 = vmatpush1.msra.mxu0 0.0
        %2426 = vmatprep.subr.mxu0 0.0
        %2427 = vmatpush1.msra.mxu0 0.0
        %2428 = vmatprep.subr.mxu0 0.0
        %2429 = vmatpush1.msra.mxu0 0.0
        %2430 = vmatprep.subr.mxu0 0.0
        %2431 = vmatpush1.msra.mxu0 0.0
        %2432 = vmatprep.subr.mxu0 0.0
        %2433 = vmatpush1.msra.mxu0 0.0
        %2434 = vmatprep.subr.mxu0 0.0
        %2435 = vmatpush1.msra.mxu0 0.0
        %2436 = vmatprep.subr.mxu0 0.0
        %2437 = vmatpush1.msra.mxu0 0.0
        %2438 = vmatprep.subr.mxu0 0.0
        %2439 = vmatpush1.msra.mxu0 0.0
        %2440 = vmatprep.subr.mxu0 0.0
        %2441 = vmatpush1.msra.mxu0 0.0
        %2442 = vmatprep.subr.mxu0 0.0
        %2443 = vmatpush1.msra.mxu0 0.0
        %2444 = vmatprep.subr.mxu0 0.0
        %2445 = vmatpush1.msra.mxu0 0.0
        %2446 = vmatprep.subr.mxu0 0.0
        %2447 = vmatpush1.msra.mxu0 0.0
        %2448 = vmatprep.subr.mxu0 0.0
        %2449 = vmatpush1.msra.mxu0 0.0
        %2450 = vmatprep.subr.mxu0 0.0
        %2451 = vmatpush1.msra.mxu0 0.0
        %2452 = vmatprep.subr.mxu0 0.0
        %2453 = vmatpush1.msra.mxu0 0.0
        %2454 = vmatprep.subr.mxu0 0.0
        %2455 = vmatpush1.msra.mxu0 0.0
        %2456 = vmatprep.subr.mxu0 0.0
        %2457 = vmatpush1.msra.mxu0 0.0
        %2458 = vmatprep.subr.mxu0 0.0
        %2459 = vmatpush1.msra.mxu0 0.0
        %2460 = vmatprep.subr.mxu0 0.0
        %2461 = vmatpush1.msra.mxu0 0.0
        %2462 = vmatprep.subr.mxu0 0.0
        %2463 = vmatpush1.msra.mxu0 0.0
        %2464 = vmatprep.subr.mxu0 0.0
        %2465 = vmatpush1.msra.mxu0 0.0
        %2466 = vmatprep.subr.mxu0 0.0
        %2467 = vmatpush1.msra.mxu0 0.0
        %2468 = vmatprep.subr.mxu0 0.0
        %2469 = vmatpush1.msra.mxu0 0.0
        %2470 = vmatprep.subr.mxu0 0.0
        %2471 = vmatpush1.msra.mxu0 0.0
        %2472 = vmatprep.mubr.f32.mxu0 0.0
        %2473 = vmatmul.mubr.f32.gmra.mrb[0].mxu0 %v2406
        %v2474 = vpop.f32.mrb[0].mxu0
        %v2475 = vadd.f32 0.0, %v2474
        %v2476 = vpop.f32.mrb[0].mxu0
        %2477 = vdwg.mxu0
        %v2478 = vadd.f32 %v2256, %v2329
        %v2479 = vadd.f32 %v2478, %v2402
        %v2480 = vadd.f32 %v2479, %v2475
        %v2481 = vadd.f32 %v513, %v2480
        %v2482 = vlaneseq
        %v2483 = vshrl.u32 %v2482, 7
        %v2484 = vsub.s32 2, %v2483
        %v2485 = vrot.slane %v516, %v2484
        %v2486 = vadd.f32 %v2481, %v2485
        %v2487 = vsel %vm517, %v2486, 0.0
        %2488 = vadd.xlane.f32.xlu0 %v2487
        %v2489 = vpop.xlane.xlu0 %2488
        %v2490 = vmul.f32 %v2489, %v521
        %v2491 = vsub.f32 %v2486, %v2490
        %v2492 = vmul.f32 %v2491, %v2491
        %v2493 = vsel %vm517, %v2492, 0.0
        %2494 = vadd.xlane.f32.xlu0 %v2493
        %v2495 = vpop.xlane.xlu0 %2494
        %v2496 = vmul.f32 %v2495, %v521
        %v2497 = vadd.f32 %v2496, 1e-05
        %v2498 = vrsqrt.pop %v2497
        %v2499 = vmul.f32 %v2491, %v2498
        %v2500 = vlaneseq
        %v2501 = vshrl.u32 %v2500, 7
        %v2502 = vsub.s32 3, %v2501
        %v2503 = vrot.slane %v516, %v2502
        %v2504 = vmul.f32 %v2499, %v2503
        %v2505 = vlaneseq
        %v2506 = vshrl.u32 %v2505, 7
        %v2507 = vsub.s32 4, %v2506
        %v2508 = vrot.slane %v516, %v2507
        %v2509 = vadd.f32 %v2504, %v2508
        %v2510 = vld [vmem:[%s7] sm:$0xff]
        %v2511 = vld [vmem:[%s7 + $0x8] sm:$0xff]
        %v2512 = vld [vmem:[%s7 + $0x10] sm:$0xff]
        %v2513 = vld [vmem:[%s7 + $0x18] sm:$0xff]
        %v2514 = vld [vmem:[%s8] sm:$0x1]
        %v2516 = vlaneseq
        %v2517 = vshrl.u32 %v2516, 7
        %v2518 = vsub.s32 0, %v2517
        %v2519 = vrot.slane %v2514, %v2518
        %v2522 = vsel %vm586, %v2509, 0
        %2524 = vmatprep.subr.mxu0 0.0
        %2525 = vmatpush1.msra.mxu0 %v2510
        %2526 = vmatprep.subr.mxu0 0.0
        %2527 = vmatpush1.msra.mxu0 %v2511
        %2528 = vmatprep.subr.mxu0 0.0
        %2529 = vmatpush1.msra.mxu0 %v2512
        %2530 = vmatprep.subr.mxu0 0.0
        %2531 = vmatpush1.msra.mxu0 %v2513
        %2532 = vmatprep.subr.mxu0 0.0
        %2533 = vmatpush1.msra.mxu0 0.0
        %2534 = vmatprep.subr.mxu0 0.0
        %2535 = vmatpush1.msra.mxu0 0.0
        %2536 = vmatprep.subr.mxu0 0.0
        %2537 = vmatpush1.msra.mxu0 0.0
        %2538 = vmatprep.subr.mxu0 0.0
        %2539 = vmatpush1.msra.mxu0 0.0
        %2540 = vmatprep.subr.mxu0 0.0
        %2541 = vmatpush1.msra.mxu0 0.0
        %2542 = vmatprep.subr.mxu0 0.0
        %2543 = vmatpush1.msra.mxu0 0.0
        %2544 = vmatprep.subr.mxu0 0.0
        %2545 = vmatpush1.msra.mxu0 0.0
        %2546 = vmatprep.subr.mxu0 0.0
        %2547 = vmatpush1.msra.mxu0 0.0
        %2548 = vmatprep.subr.mxu0 0.0
        %2549 = vmatpush1.msra.mxu0 0.0
        %2550 = vmatprep.subr.mxu0 0.0
        %2551 = vmatpush1.msra.mxu0 0.0
        %2552 = vmatprep.subr.mxu0 0.0
        %2553 = vmatpush1.msra.mxu0 0.0
        %2554 = vmatprep.subr.mxu0 0.0
        %2555 = vmatpush1.msra.mxu0 0.0
        %2556 = vmatprep.subr.mxu0 0.0
        %2557 = vmatpush1.msra.mxu0 0.0
        %2558 = vmatprep.subr.mxu0 0.0
        %2559 = vmatpush1.msra.mxu0 0.0
        %2560 = vmatprep.subr.mxu0 0.0
        %2561 = vmatpush1.msra.mxu0 0.0
        %2562 = vmatprep.subr.mxu0 0.0
        %2563 = vmatpush1.msra.mxu0 0.0
        %2564 = vmatprep.subr.mxu0 0.0
        %2565 = vmatpush1.msra.mxu0 0.0
        %2566 = vmatprep.subr.mxu0 0.0
        %2567 = vmatpush1.msra.mxu0 0.0
        %2568 = vmatprep.subr.mxu0 0.0
        %2569 = vmatpush1.msra.mxu0 0.0
        %2570 = vmatprep.subr.mxu0 0.0
        %2571 = vmatpush1.msra.mxu0 0.0
        %2572 = vmatprep.subr.mxu0 0.0
        %2573 = vmatpush1.msra.mxu0 0.0
        %2574 = vmatprep.subr.mxu0 0.0
        %2575 = vmatpush1.msra.mxu0 0.0
        %2576 = vmatprep.subr.mxu0 0.0
        %2577 = vmatpush1.msra.mxu0 0.0
        %2578 = vmatprep.subr.mxu0 0.0
        %2579 = vmatpush1.msra.mxu0 0.0
        %2580 = vmatprep.subr.mxu0 0.0
        %2581 = vmatpush1.msra.mxu0 0.0
        %2582 = vmatprep.subr.mxu0 0.0
        %2583 = vmatpush1.msra.mxu0 0.0
        %2584 = vmatprep.subr.mxu0 0.0
        %2585 = vmatpush1.msra.mxu0 0.0
        %2586 = vmatprep.subr.mxu0 0.0
        %2587 = vmatpush1.msra.mxu0 0.0
        %2588 = vmatprep.mubr.f32.mxu0 0.0
        %2589 = vmatmul.mubr.f32.gmra.mrb[0].mxu0 %v2522
        %v2590 = vpop.f32.mrb[0].mxu0
        %v2591 = vadd.f32 %v2519, %v2590
        %v2592 = vpop.f32.mrb[0].mxu0
        %2593 = vdwg.mxu0
        %v2594 = vmul.f32 %v2591, 0.5
        %v2595 = vmul.f32 %v2591, 0.70710677
        %vm2596 = vcmp.ge.f32.partialorder %v2595, 0.0
        %v2597 = vsel %vm2596, 1.0, -1.0
        %v2598 = vand.u32 2147483647, %v2595
        %v2599 = vmul.f32 %v2598, 0.3275911
        %v2600 = vadd.f32 %v2599, 1.0
        %v2601 = vrcp.pop %v2600
        %v2602 = vmul.f32 1.0, %v2601
        %v2603 = vmul.f32 %v2602, 1.0614054
        %v2604 = vadd.f32 %v2603, -1.4531521
        %v2605 = vmul.f32 %v2604, %v2602
        %v2606 = vadd.f32 %v2605, 1.4214138
        %v2607 = vmul.f32 %v2606, %v2602
        %v2608 = vadd.f32 %v2607, -0.28449672
        %v2609 = vmul.f32 %v2608, %v2602
        %v2610 = vadd.f32 %v2609, 0.2548296
        %v2611 = vmul.f32 %v2610, %v2602
        %v2612 = vsub.f32 0.0, %v2598
        %v2613 = vmul.f32 %v2612, %v2598
        %v2614 = vmul.f32 %v2613, 1.442695
        %v2615 = vpow.pop %v2614
        %v2616 = vmul.f32 %v2611, %v2615
        %v2617 = vsub.f32 1.0, %v2616
        %v2618 = vmul.f32 %v2597, %v2617
        %v2619 = vadd.f32 %v2618, 1.0
        %v2620 = vmul.f32 %v2594, %v2619
        %v2621 = vld [vmem:[%s9] sm:$0xff]
        %v2622 = vld [vmem:[%s9 + $0x8] sm:$0xff]
        %v2623 = vld [vmem:[%s9 + $0x10] sm:$0xff]
        %v2624 = vld [vmem:[%s9 + $0x18] sm:$0xff]
        %v2625 = vld [vmem:[%s9 + $0x20] sm:$0xff]
        %v2626 = vld [vmem:[%s9 + $0x28] sm:$0xff]
        %v2627 = vld [vmem:[%s9 + $0x30] sm:$0xff]
        %v2628 = vld [vmem:[%s9 + $0x38] sm:$0xff]
        %v2629 = vlaneseq
        %v2630 = vshrl.u32 %v2629, 7
        %v2631 = vsub.s32 5, %v2630
        %v2632 = vrot.slane %v516, %v2631
        %vm2633 = vcmask 523264
        %v2635 = vsel %vm2633, %v2620, 0
        %2637 = vmatprep.subr.mxu0 0.0
        %2638 = vmatpush1.msra.mxu0 %v2621
        %2639 = vmatprep.subr.mxu0 0.0
        %2640 = vmatpush1.msra.mxu0 %v2622
        %2641 = vmatprep.subr.mxu0 0.0
        %2642 = vmatpush1.msra.mxu0 %v2623
        %2643 = vmatprep.subr.mxu0 0.0
        %2644 = vmatpush1.msra.mxu0 %v2624
        %2645 = vmatprep.subr.mxu0 0.0
        %2646 = vmatpush1.msra.mxu0 %v2625
        %2647 = vmatprep.subr.mxu0 0.0
        %2648 = vmatpush1.msra.mxu0 %v2626
        %2649 = vmatprep.subr.mxu0 0.0
        %2650 = vmatpush1.msra.mxu0 %v2627
        %2651 = vmatprep.subr.mxu0 0.0
        %2652 = vmatpush1.msra.mxu0 %v2628
        %2653 = vmatprep.subr.mxu0 0.0
        %2654 = vmatpush1.msra.mxu0 0.0
        %2655 = vmatprep.subr.mxu0 0.0
        %2656 = vmatpush1.msra.mxu0 0.0
        %2657 = vmatprep.subr.mxu0 0.0
        %2658 = vmatpush1.msra.mxu0 0.0
        %2659 = vmatprep.subr.mxu0 0.0
        %2660 = vmatpush1.msra.mxu0 0.0
        %2661 = vmatprep.subr.mxu0 0.0
        %2662 = vmatpush1.msra.mxu0 0.0
        %2663 = vmatprep.subr.mxu0 0.0
        %2664 = vmatpush1.msra.mxu0 0.0
        %2665 = vmatprep.subr.mxu0 0.0
        %2666 = vmatpush1.msra.mxu0 0.0
        %2667 = vmatprep.subr.mxu0 0.0
        %2668 = vmatpush1.msra.mxu0 0.0
        %2669 = vmatprep.subr.mxu0 0.0
        %2670 = vmatpush1.msra.mxu0 0.0
        %2671 = vmatprep.subr.mxu0 0.0
        %2672 = vmatpush1.msra.mxu0 0.0
        %2673 = vmatprep.subr.mxu0 0.0
        %2674 = vmatpush1.msra.mxu0 0.0
        %2675 = vmatprep.subr.mxu0 0.0
        %2676 = vmatpush1.msra.mxu0 0.0
        %2677 = vmatprep.subr.mxu0 0.0
        %2678 = vmatpush1.msra.mxu0 0.0
        %2679 = vmatprep.subr.mxu0 0.0
        %2680 = vmatpush1.msra.mxu0 0.0
        %2681 = vmatprep.subr.mxu0 0.0
        %2682 = vmatpush1.msra.mxu0 0.0
        %2683 = vmatprep.subr.mxu0 0.0
        %2684 = vmatpush1.msra.mxu0 0.0
        %2685 = vmatprep.subr.mxu0 0.0
        %2686 = vmatpush1.msra.mxu0 0.0
        %2687 = vmatprep.subr.mxu0 0.0
        %2688 = vmatpush1.msra.mxu0 0.0
        %2689 = vmatprep.subr.mxu0 0.0
        %2690 = vmatpush1.msra.mxu0 0.0
        %2691 = vmatprep.subr.mxu0 0.0
        %2692 = vmatpush1.msra.mxu0 0.0
        %2693 = vmatprep.subr.mxu0 0.0
        %2694 = vmatpush1.msra.mxu0 0.0
        %2695 = vmatprep.subr.mxu0 0.0
        %2696 = vmatpush1.msra.mxu0 0.0
        %2697 = vmatprep.subr.mxu0 0.0
        %2698 = vmatpush1.msra.mxu0 0.0
        %2699 = vmatprep.subr.mxu0 0.0
        %2700 = vmatpush1.msra.mxu0 0.0
        %2701 = vmatprep.mubr.f32.mxu0 0.0
        %2702 = vmatmul.mubr.f32.gmra.mrb[0].mxu0 %v2635
        %v2703 = vpop.f32.mrb[0].mxu0
        %v2704 = vadd.f32 %v2632, %v2703
        %v2705 = vpop.f32.mrb[0].mxu0
        %2706 = vdwg.mxu0
        %v2707 = vadd.f32 %v2486, %v2704
        %s2708 = scalar_lea.vmem %s6, 8
        %v2709 = vld [vmem:[%s2708] sm:$0x3f]
        %v2710 = vsel %vm517, %v2707, 0.0
        %2711 = vadd.xlane.f32.xlu0 %v2710
        %v2712 = vpop.xlane.xlu0 %2711
        %v2713 = vmul.f32 %v2712, %v521
        %v2714 = vsub.f32 %v2707, %v2713
        %v2715 = vmul.f32 %v2714, %v2714
        %v2716 = vsel %vm517, %v2715, 0.0
        %2717 = vadd.xlane.f32.xlu0 %v2716
        %v2718 = vpop.xlane.xlu0 %2717
        %v2719 = vmul.f32 %v2718, %v521
        %v2720 = vadd.f32 %v2719, 1e-05
        %v2721 = vrsqrt.pop %v2720
        %v2722 = vmul.f32 %v2714, %v2721
        %v2723 = vlaneseq
        %v2724 = vshrl.u32 %v2723, 7
        %v2725 = vsub.s32 0, %v2724
        %v2726 = vrot.slane %v2709, %v2725
        %v2727 = vmul.f32 %v2722, %v2726
        %v2728 = vlaneseq
        %v2729 = vshrl.u32 %v2728, 7
        %v2730 = vsub.s32 1, %v2729
        %v2731 = vrot.slane %v2709, %v2730
        %v2732 = vadd.f32 %v2727, %v2731
        %s2733 = scalar_lea.vmem %s3, 384
        %v2734 = vld [vmem:[%s2733] sm:$0xff]
        %v2735 = vld [vmem:[%s2733 + $0x8] sm:$0xff]
        %v2736 = vld [vmem:[%s2733 + $0x10] sm:$0xff]
        %v2737 = vld [vmem:[%s2733 + $0x18] sm:$0xff]
        %v2738 = vld [vmem:[%s2733 + $0x20] sm:$0xff]
        %v2739 = vld [vmem:[%s2733 + $0x28] sm:$0xff]
        %v2740 = vld [vmem:[%s2733 + $0x30] sm:$0xff]
        %v2741 = vld [vmem:[%s2733 + $0x38] sm:$0xff]
        %v2742 = vld [vmem:[%s2733 + $0x40] sm:$0xff]
        %v2743 = vld [vmem:[%s2733 + $0x48] sm:$0xff]
        %v2744 = vld [vmem:[%s2733 + $0x50] sm:$0xff]
        %v2745 = vld [vmem:[%s2733 + $0x58] sm:$0xff]
        %v2746 = vld [vmem:[%s2733 + $0x60] sm:$0xff]
        %v2747 = vld [vmem:[%s2733 + $0x68] sm:$0xff]
        %v2748 = vld [vmem:[%s2733 + $0x70] sm:$0xff]
        %v2749 = vld [vmem:[%s2733 + $0x78] sm:$0xff]
        %s2750 = scalar_lea.vmem %s4, 12
        %v2751 = vld [vmem:[%s2750] sm:$0x1]
        %v2752 = vld [vmem:[%s2750 + $0x1] sm:$0x1]
        %v2753 = vld [vmem:[%s2750 + $0x2] sm:$0x1]
        %v2754 = vld [vmem:[%s2750 + $0x3] sm:$0x1]
        %v2759 = vlaneseq
        %v2760 = vshrl.u32 %v2759, 7
        %v2761 = vsub.s32 0, %v2760
        %v2762 = vrot.slane %v2751, %v2761
        %v2763 = vlaneseq
        %v2764 = vshrl.u32 %v2763, 7
        %v2765 = vsub.s32 0, %v2764
        %v2766 = vrot.slane %v2752, %v2765
        %v2767 = vlaneseq
        %v2768 = vshrl.u32 %v2767, 7
        %v2769 = vsub.s32 0, %v2768
        %v2770 = vrot.slane %v2753, %v2769
        %v2771 = vlaneseq
        %v2772 = vshrl.u32 %v2771, 7
        %v2773 = vsub.s32 0, %v2772
        %v2774 = vrot.slane %v2754, %v2773
        %v2780 = vsel %vm586, %v2732, 0
        %2782 = vmatprep.subr.mxu0 0.0
        %2783 = vmatpush1.msra.mxu0 %v2734
        %2784 = vmatprep.subr.mxu0 0.0
        %2785 = vmatpush1.msra.mxu0 %v2735
        %2786 = vmatprep.subr.mxu0 0.0
        %2787 = vmatpush1.msra.mxu0 %v2736
        %2788 = vmatprep.subr.mxu0 0.0
        %2789 = vmatpush1.msra.mxu0 %v2737
        %2790 = vmatprep.subr.mxu0 0.0
        %2791 = vmatpush1.msra.mxu0 0.0
        %2792 = vmatprep.subr.mxu0 0.0
        %2793 = vmatpush1.msra.mxu0 0.0
        %2794 = vmatprep.subr.mxu0 0.0
        %2795 = vmatpush1.msra.mxu0 0.0
        %2796 = vmatprep.subr.mxu0 0.0
        %2797 = vmatpush1.msra.mxu0 0.0
        %2798 = vmatprep.subr.mxu0 0.0
        %2799 = vmatpush1.msra.mxu0 0.0
        %2800 = vmatprep.subr.mxu0 0.0
        %2801 = vmatpush1.msra.mxu0 0.0
        %2802 = vmatprep.subr.mxu0 0.0
        %2803 = vmatpush1.msra.mxu0 0.0
        %2804 = vmatprep.subr.mxu0 0.0
        %2805 = vmatpush1.msra.mxu0 0.0
        %2806 = vmatprep.subr.mxu0 0.0
        %2807 = vmatpush1.msra.mxu0 0.0
        %2808 = vmatprep.subr.mxu0 0.0
        %2809 = vmatpush1.msra.mxu0 0.0
        %2810 = vmatprep.subr.mxu0 0.0
        %2811 = vmatpush1.msra.mxu0 0.0
        %2812 = vmatprep.subr.mxu0 0.0
        %2813 = vmatpush1.msra.mxu0 0.0
        %2814 = vmatprep.subr.mxu0 0.0
        %2815 = vmatpush1.msra.mxu0 0.0
        %2816 = vmatprep.subr.mxu0 0.0
        %2817 = vmatpush1.msra.mxu0 0.0
        %2818 = vmatprep.subr.mxu0 0.0
        %2819 = vmatpush1.msra.mxu0 0.0
        %2820 = vmatprep.subr.mxu0 0.0
        %2821 = vmatpush1.msra.mxu0 0.0
        %2822 = vmatprep.subr.mxu0 0.0
        %2823 = vmatpush1.msra.mxu0 0.0
        %2824 = vmatprep.subr.mxu0 0.0
        %2825 = vmatpush1.msra.mxu0 0.0
        %2826 = vmatprep.subr.mxu0 0.0
        %2827 = vmatpush1.msra.mxu0 0.0
        %2828 = vmatprep.subr.mxu0 0.0
        %2829 = vmatpush1.msra.mxu0 0.0
        %2830 = vmatprep.subr.mxu0 0.0
        %2831 = vmatpush1.msra.mxu0 0.0
        %2832 = vmatprep.subr.mxu0 0.0
        %2833 = vmatpush1.msra.mxu0 0.0
        %2834 = vmatprep.subr.mxu0 0.0
        %2835 = vmatpush1.msra.mxu0 0.0
        %2836 = vmatprep.subr.mxu0 0.0
        %2837 = vmatpush1.msra.mxu0 0.0
        %2838 = vmatprep.subr.mxu0 0.0
        %2839 = vmatpush1.msra.mxu0 0.0
        %2840 = vmatprep.subr.mxu0 0.0
        %2841 = vmatpush1.msra.mxu0 0.0
        %2842 = vmatprep.subr.mxu0 0.0
        %2843 = vmatpush1.msra.mxu0 0.0
        %2844 = vmatprep.subr.mxu0 0.0
        %2845 = vmatpush1.msra.mxu0 0.0
        %2846 = vmatprep.mubr.f32.mxu0 0.0
        %2847 = vmatmul.mubr.f32.gmra.mrb[0].mxu0 %v2780
        %v2848 = vpop.f32.mrb[0].mxu0
        %v2849 = vadd.f32 %v2762, %v2848
        %v2850 = vpop.f32.mrb[0].mxu0
        %2851 = vdwg.mxu0
        %2852 = vmatprep.subr.mxu0 0.0
        %2853 = vmatpush1.msra.mxu0 %v2738
        %2854 = vmatprep.subr.mxu0 0.0
        %2855 = vmatpush1.msra.mxu0 %v2739
        %2856 = vmatprep.subr.mxu0 0.0
        %2857 = vmatpush1.msra.mxu0 %v2740
        %2858 = vmatprep.subr.mxu0 0.0
        %2859 = vmatpush1.msra.mxu0 %v2741
        %2860 = vmatprep.subr.mxu0 0.0
        %2861 = vmatpush1.msra.mxu0 0.0
        %2862 = vmatprep.subr.mxu0 0.0
        %2863 = vmatpush1.msra.mxu0 0.0
        %2864 = vmatprep.subr.mxu0 0.0
        %2865 = vmatpush1.msra.mxu0 0.0
        %2866 = vmatprep.subr.mxu0 0.0
        %2867 = vmatpush1.msra.mxu0 0.0
        %2868 = vmatprep.subr.mxu0 0.0
        %2869 = vmatpush1.msra.mxu0 0.0
        %2870 = vmatprep.subr.mxu0 0.0
        %2871 = vmatpush1.msra.mxu0 0.0
        %2872 = vmatprep.subr.mxu0 0.0
        %2873 = vmatpush1.msra.mxu0 0.0
        %2874 = vmatprep.subr.mxu0 0.0
        %2875 = vmatpush1.msra.mxu0 0.0
        %2876 = vmatprep.subr.mxu0 0.0
        %2877 = vmatpush1.msra.mxu0 0.0
        %2878 = vmatprep.subr.mxu0 0.0
        %2879 = vmatpush1.msra.mxu0 0.0
        %2880 = vmatprep.subr.mxu0 0.0
        %2881 = vmatpush1.msra.mxu0 0.0
        %2882 = vmatprep.subr.mxu0 0.0
        %2883 = vmatpush1.msra.mxu0 0.0
        %2884 = vmatprep.subr.mxu0 0.0
        %2885 = vmatpush1.msra.mxu0 0.0
        %2886 = vmatprep.subr.mxu0 0.0
        %2887 = vmatpush1.msra.mxu0 0.0
        %2888 = vmatprep.subr.mxu0 0.0
        %2889 = vmatpush1.msra.mxu0 0.0
        %2890 = vmatprep.subr.mxu0 0.0
        %2891 = vmatpush1.msra.mxu0 0.0
        %2892 = vmatprep.subr.mxu0 0.0
        %2893 = vmatpush1.msra.mxu0 0.0
        %2894 = vmatprep.subr.mxu0 0.0
        %2895 = vmatpush1.msra.mxu0 0.0
        %2896 = vmatprep.subr.mxu0 0.0
        %2897 = vmatpush1.msra.mxu0 0.0
        %2898 = vmatprep.subr.mxu0 0.0
        %2899 = vmatpush1.msra.mxu0 0.0
        %2900 = vmatprep.subr.mxu0 0.0
        %2901 = vmatpush1.msra.mxu0 0.0
        %2902 = vmatprep.subr.mxu0 0.0
        %2903 = vmatpush1.msra.mxu0 0.0
        %2904 = vmatprep.subr.mxu0 0.0
        %2905 = vmatpush1.msra.mxu0 0.0
        %2906 = vmatprep.subr.mxu0 0.0
        %2907 = vmatpush1.msra.mxu0 0.0
        %2908 = vmatprep.subr.mxu0 0.0
        %2909 = vmatpush1.msra.mxu0 0.0
        %2910 = vmatprep.subr.mxu0 0.0
        %2911 = vmatpush1.msra.mxu0 0.0
        %2912 = vmatprep.subr.mxu0 0.0
        %2913 = vmatpush1.msra.mxu0 0.0
        %2914 = vmatprep.subr.mxu0 0.0
        %2915 = vmatpush1.msra.mxu0 0.0
        %2916 = vmatprep.mubr.f32.mxu0 0.0
        %2917 = vmatmul.mubr.f32.gmra.mrb[0].mxu0 %v2780
        %v2918 = vpop.f32.mrb[0].mxu0
        %v2919 = vadd.f32 %v2766, %v2918
        %v2920 = vpop.f32.mrb[0].mxu0
        %2921 = vdwg.mxu0
        %2922 = vmatprep.subr.mxu0 0.0
        %2923 = vmatpush1.msra.mxu0 %v2742
        %2924 = vmatprep.subr.mxu0 0.0
        %2925 = vmatpush1.msra.mxu0 %v2743
        %2926 = vmatprep.subr.mxu0 0.0
        %2927 = vmatpush1.msra.mxu0 %v2744
        %2928 = vmatprep.subr.mxu0 0.0
        %2929 = vmatpush1.msra.mxu0 %v2745
        %2930 = vmatprep.subr.mxu0 0.0
        %2931 = vmatpush1.msra.mxu0 0.0
        %2932 = vmatprep.subr.mxu0 0.0
        %2933 = vmatpush1.msra.mxu0 0.0
        %2934 = vmatprep.subr.mxu0 0.0
        %2935 = vmatpush1.msra.mxu0 0.0
        %2936 = vmatprep.subr.mxu0 0.0
        %2937 = vmatpush1.msra.mxu0 0.0
        %2938 = vmatprep.subr.mxu0 0.0
        %2939 = vmatpush1.msra.mxu0 0.0
        %2940 = vmatprep.subr.mxu0 0.0
        %2941 = vmatpush1.msra.mxu0 0.0
        %2942 = vmatprep.subr.mxu0 0.0
        %2943 = vmatpush1.msra.mxu0 0.0
        %2944 = vmatprep.subr.mxu0 0.0
        %2945 = vmatpush1.msra.mxu0 0.0
        %2946 = vmatprep.subr.mxu0 0.0
        %2947 = vmatpush1.msra.mxu0 0.0
        %2948 = vmatprep.subr.mxu0 0.0
        %2949 = vmatpush1.msra.mxu0 0.0
        %2950 = vmatprep.subr.mxu0 0.0
        %2951 = vmatpush1.msra.mxu0 0.0
        %2952 = vmatprep.subr.mxu0 0.0
        %2953 = vmatpush1.msra.mxu0 0.0
        %2954 = vmatprep.subr.mxu0 0.0
        %2955 = vmatpush1.msra.mxu0 0.0
        %2956 = vmatprep.subr.mxu0 0.0
        %2957 = vmatpush1.msra.mxu0 0.0
        %2958 = vmatprep.subr.mxu0 0.0
        %2959 = vmatpush1.msra.mxu0 0.0
        %2960 = vmatprep.subr.mxu0 0.0
        %2961 = vmatpush1.msra.mxu0 0.0
        %2962 = vmatprep.subr.mxu0 0.0
        %2963 = vmatpush1.msra.mxu0 0.0
        %2964 = vmatprep.subr.mxu0 0.0
        %2965 = vmatpush1.msra.mxu0 0.0
        %2966 = vmatprep.subr.mxu0 0.0
        %2967 = vmatpush1.msra.mxu0 0.0
        %2968 = vmatprep.subr.mxu0 0.0
        %2969 = vmatpush1.msra.mxu0 0.0
        %2970 = vmatprep.subr.mxu0 0.0
        %2971 = vmatpush1.msra.mxu0 0.0
        %2972 = vmatprep.subr.mxu0 0.0
        %2973 = vmatpush1.msra.mxu0 0.0
        %2974 = vmatprep.subr.mxu0 0.0
        %2975 = vmatpush1.msra.mxu0 0.0
        %2976 = vmatprep.subr.mxu0 0.0
        %2977 = vmatpush1.msra.mxu0 0.0
        %2978 = vmatprep.subr.mxu0 0.0
        %2979 = vmatpush1.msra.mxu0 0.0
        %2980 = vmatprep.subr.mxu0 0.0
        %2981 = vmatpush1.msra.mxu0 0.0
        %2982 = vmatprep.subr.mxu0 0.0
        %2983 = vmatpush1.msra.mxu0 0.0
        %2984 = vmatprep.subr.mxu0 0.0
        %2985 = vmatpush1.msra.mxu0 0.0
        %2986 = vmatprep.mubr.f32.mxu0 0.0
        %2987 = vmatmul.mubr.f32.gmra.mrb[0].mxu0 %v2780
        %v2988 = vpop.f32.mrb[0].mxu0
        %v2989 = vadd.f32 %v2770, %v2988
        %v2990 = vpop.f32.mrb[0].mxu0
        %2991 = vdwg.mxu0
        %2992 = vmatprep.subr.mxu0 0.0
        %2993 = vmatpush1.msra.mxu0 %v2746
        %2994 = vmatprep.subr.mxu0 0.0
        %2995 = vmatpush1.msra.mxu0 %v2747
        %2996 = vmatprep.subr.mxu0 0.0
        %2997 = vmatpush1.msra.mxu0 %v2748
        %2998 = vmatprep.subr.mxu0 0.0
        %2999 = vmatpush1.msra.mxu0 %v2749
        %3000 = vmatprep.subr.mxu0 0.0
        %3001 = vmatpush1.msra.mxu0 0.0
        %3002 = vmatprep.subr.mxu0 0.0
        %3003 = vmatpush1.msra.mxu0 0.0
        %3004 = vmatprep.subr.mxu0 0.0
        %3005 = vmatpush1.msra.mxu0 0.0
        %3006 = vmatprep.subr.mxu0 0.0
        %3007 = vmatpush1.msra.mxu0 0.0
        %3008 = vmatprep.subr.mxu0 0.0
        %3009 = vmatpush1.msra.mxu0 0.0
        %3010 = vmatprep.subr.mxu0 0.0
        %3011 = vmatpush1.msra.mxu0 0.0
        %3012 = vmatprep.subr.mxu0 0.0
        %3013 = vmatpush1.msra.mxu0 0.0
        %3014 = vmatprep.subr.mxu0 0.0
        %3015 = vmatpush1.msra.mxu0 0.0
        %3016 = vmatprep.subr.mxu0 0.0
        %3017 = vmatpush1.msra.mxu0 0.0
        %3018 = vmatprep.subr.mxu0 0.0
        %3019 = vmatpush1.msra.mxu0 0.0
        %3020 = vmatprep.subr.mxu0 0.0
        %3021 = vmatpush1.msra.mxu0 0.0
        %3022 = vmatprep.subr.mxu0 0.0
        %3023 = vmatpush1.msra.mxu0 0.0
        %3024 = vmatprep.subr.mxu0 0.0
        %3025 = vmatpush1.msra.mxu0 0.0
        %3026 = vmatprep.subr.mxu0 0.0
        %3027 = vmatpush1.msra.mxu0 0.0
        %3028 = vmatprep.subr.mxu0 0.0
        %3029 = vmatpush1.msra.mxu0 0.0
        %3030 = vmatprep.subr.mxu0 0.0
        %3031 = vmatpush1.msra.mxu0 0.0
        %3032 = vmatprep.subr.mxu0 0.0
        %3033 = vmatpush1.msra.mxu0 0.0
        %3034 = vmatprep.subr.mxu0 0.0
        %3035 = vmatpush1.msra.mxu0 0.0
        %3036 = vmatprep.subr.mxu0 0.0
        %3037 = vmatpush1.msra.mxu0 0.0
        %3038 = vmatprep.subr.mxu0 0.0
        %3039 = vmatpush1.msra.mxu0 0.0
        %3040 = vmatprep.subr.mxu0 0.0
        %3041 = vmatpush1.msra.mxu0 0.0
        %3042 = vmatprep.subr.mxu0 0.0
        %3043 = vmatpush1.msra.mxu0 0.0
        %3044 = vmatprep.subr.mxu0 0.0
        %3045 = vmatpush1.msra.mxu0 0.0
        %3046 = vmatprep.subr.mxu0 0.0
        %3047 = vmatpush1.msra.mxu0 0.0
        %3048 = vmatprep.subr.mxu0 0.0
        %3049 = vmatpush1.msra.mxu0 0.0
        %3050 = vmatprep.subr.mxu0 0.0
        %3051 = vmatpush1.msra.mxu0 0.0
        %3052 = vmatprep.subr.mxu0 0.0
        %3053 = vmatpush1.msra.mxu0 0.0
        %3054 = vmatprep.subr.mxu0 0.0
        %3055 = vmatpush1.msra.mxu0 0.0
        %3056 = vmatprep.mubr.f32.mxu0 0.0
        %3057 = vmatmul.mubr.f32.gmra.mrb[0].mxu0 %v2780
        %v3058 = vpop.f32.mrb[0].mxu0
        %v3059 = vadd.f32 %v2774, %v3058
        %v3060 = vpop.f32.mrb[0].mxu0
        %3061 = vdwg.mxu0
        %s3062 = scalar_lea.vmem %s3, 512
        %v3063 = vld [vmem:[%s3062] sm:$0xff]
        %v3064 = vld [vmem:[%s3062 + $0x8] sm:$0xff]
        %v3065 = vld [vmem:[%s3062 + $0x10] sm:$0xff]
        %v3066 = vld [vmem:[%s3062 + $0x18] sm:$0xff]
        %v3067 = vld [vmem:[%s3062 + $0x20] sm:$0xff]
        %v3068 = vld [vmem:[%s3062 + $0x28] sm:$0xff]
        %v3069 = vld [vmem:[%s3062 + $0x30] sm:$0xff]
        %v3070 = vld [vmem:[%s3062 + $0x38] sm:$0xff]
        %v3071 = vld [vmem:[%s3062 + $0x40] sm:$0xff]
        %v3072 = vld [vmem:[%s3062 + $0x48] sm:$0xff]
        %v3073 = vld [vmem:[%s3062 + $0x50] sm:$0xff]
        %v3074 = vld [vmem:[%s3062 + $0x58] sm:$0xff]
        %v3075 = vld [vmem:[%s3062 + $0x60] sm:$0xff]
        %v3076 = vld [vmem:[%s3062 + $0x68] sm:$0xff]
        %v3077 = vld [vmem:[%s3062 + $0x70] sm:$0xff]
        %v3078 = vld [vmem:[%s3062 + $0x78] sm:$0xff]
        %s3079 = scalar_lea.vmem %s4, 16
        %v3080 = vld [vmem:[%s3079] sm:$0x1]
        %v3081 = vld [vmem:[%s3079 + $0x1] sm:$0x1]
        %v3082 = vld [vmem:[%s3079 + $0x2] sm:$0x1]
        %v3083 = vld [vmem:[%s3079 + $0x3] sm:$0x1]
        %v3088 = vlaneseq
        %v3089 = vshrl.u32 %v3088, 7
        %v3090 = vsub.s32 0, %v3089
        %v3091 = vrot.slane %v3080, %v3090
        %v3092 = vlaneseq
        %v3093 = vshrl.u32 %v3092, 7
        %v3094 = vsub.s32 0, %v3093
        %v3095 = vrot.slane %v3081, %v3094
        %v3096 = vlaneseq
        %v3097 = vshrl.u32 %v3096, 7
        %v3098 = vsub.s32 0, %v3097
        %v3099 = vrot.slane %v3082, %v3098
        %v3100 = vlaneseq
        %v3101 = vshrl.u32 %v3100, 7
        %v3102 = vsub.s32 0, %v3101
        %v3103 = vrot.slane %v3083, %v3102
        %3108 = vmatprep.subr.mxu0 0.0
        %3109 = vmatpush1.msra.mxu0 %v3063
        %3110 = vmatprep.subr.mxu0 0.0
        %3111 = vmatpush1.msra.mxu0 %v3064
        %3112 = vmatprep.subr.mxu0 0.0
        %3113 = vmatpush1.msra.mxu0 %v3065
        %3114 = vmatprep.subr.mxu0 0.0
        %3115 = vmatpush1.msra.mxu0 %v3066
        %3116 = vmatprep.subr.mxu0 0.0
        %3117 = vmatpush1.msra.mxu0 0.0
        %3118 = vmatprep.subr.mxu0 0.0
        %3119 = vmatpush1.msra.mxu0 0.0
        %3120 = vmatprep.subr.mxu0 0.0
        %3121 = vmatpush1.msra.mxu0 0.0
        %3122 = vmatprep.subr.mxu0 0.0
        %3123 = vmatpush1.msra.mxu0 0.0
        %3124 = vmatprep.subr.mxu0 0.0
        %3125 = vmatpush1.msra.mxu0 0.0
        %3126 = vmatprep.subr.mxu0 0.0
        %3127 = vmatpush1.msra.mxu0 0.0
        %3128 = vmatprep.subr.mxu0 0.0
        %3129 = vmatpush1.msra.mxu0 0.0
        %3130 = vmatprep.subr.mxu0 0.0
        %3131 = vmatpush1.msra.mxu0 0.0
        %3132 = vmatprep.subr.mxu0 0.0
        %3133 = vmatpush1.msra.mxu0 0.0
        %3134 = vmatprep.subr.mxu0 0.0
        %3135 = vmatpush1.msra.mxu0 0.0
        %3136 = vmatprep.subr.mxu0 0.0
        %3137 = vmatpush1.msra.mxu0 0.0
        %3138 = vmatprep.subr.mxu0 0.0
        %3139 = vmatpush1.msra.mxu0 0.0
        %3140 = vmatprep.subr.mxu0 0.0
        %3141 = vmatpush1.msra.mxu0 0.0
        %3142 = vmatprep.subr.mxu0 0.0
        %3143 = vmatpush1.msra.mxu0 0.0
        %3144 = vmatprep.subr.mxu0 0.0
        %3145 = vmatpush1.msra.mxu0 0.0
        %3146 = vmatprep.subr.mxu0 0.0
        %3147 = vmatpush1.msra.mxu0 0.0
        %3148 = vmatprep.subr.mxu0 0.0
        %3149 = vmatpush1.msra.mxu0 0.0
        %3150 = vmatprep.subr.mxu0 0.0
        %3151 = vmatpush1.msra.mxu0 0.0
        %3152 = vmatprep.subr.mxu0 0.0
        %3153 = vmatpush1.msra.mxu0 0.0
        %3154 = vmatprep.subr.mxu0 0.0
        %3155 = vmatpush1.msra.mxu0 0.0
        %3156 = vmatprep.subr.mxu0 0.0
        %3157 = vmatpush1.msra.mxu0 0.0
        %3158 = vmatprep.subr.mxu0 0.0
        %3159 = vmatpush1.msra.mxu0 0.0
        %3160 = vmatprep.subr.mxu0 0.0
        %3161 = vmatpush1.msra.mxu0 0.0
        %3162 = vmatprep.subr.mxu0 0.0
        %3163 = vmatpush1.msra.mxu0 0.0
        %3164 = vmatprep.subr.mxu0 0.0
        %3165 = vmatpush1.msra.mxu0 0.0
        %3166 = vmatprep.subr.mxu0 0.0
        %3167 = vmatpush1.msra.mxu0 0.0
        %3168 = vmatprep.subr.mxu0 0.0
        %3169 = vmatpush1.msra.mxu0 0.0
        %3170 = vmatprep.subr.mxu0 0.0
        %3171 = vmatpush1.msra.mxu0 0.0
        %3172 = vmatprep.mubr.f32.mxu0 0.0
        %3173 = vmatmul.mubr.f32.gmra.mrb[0].mxu0 %v2780
        %v3174 = vpop.f32.mrb[0].mxu0
        %v3175 = vadd.f32 %v3091, %v3174
        %v3176 = vpop.f32.mrb[0].mxu0
        %3177 = vdwg.mxu0
        %3178 = vmatprep.subr.mxu0 0.0
        %3179 = vmatpush1.msra.mxu0 %v3067
        %3180 = vmatprep.subr.mxu0 0.0
        %3181 = vmatpush1.msra.mxu0 %v3068
        %3182 = vmatprep.subr.mxu0 0.0
        %3183 = vmatpush1.msra.mxu0 %v3069
        %3184 = vmatprep.subr.mxu0 0.0
        %3185 = vmatpush1.msra.mxu0 %v3070
        %3186 = vmatprep.subr.mxu0 0.0
        %3187 = vmatpush1.msra.mxu0 0.0
        %3188 = vmatprep.subr.mxu0 0.0
        %3189 = vmatpush1.msra.mxu0 0.0
        %3190 = vmatprep.subr.mxu0 0.0
        %3191 = vmatpush1.msra.mxu0 0.0
        %3192 = vmatprep.subr.mxu0 0.0
        %3193 = vmatpush1.msra.mxu0 0.0
        %3194 = vmatprep.subr.mxu0 0.0
        %3195 = vmatpush1.msra.mxu0 0.0
        %3196 = vmatprep.subr.mxu0 0.0
        %3197 = vmatpush1.msra.mxu0 0.0
        %3198 = vmatprep.subr.mxu0 0.0
        %3199 = vmatpush1.msra.mxu0 0.0
        %3200 = vmatprep.subr.mxu0 0.0
        %3201 = vmatpush1.msra.mxu0 0.0
        %3202 = vmatprep.subr.mxu0 0.0
        %3203 = vmatpush1.msra.mxu0 0.0
        %3204 = vmatprep.subr.mxu0 0.0
        %3205 = vmatpush1.msra.mxu0 0.0
        %3206 = vmatprep.subr.mxu0 0.0
        %3207 = vmatpush1.msra.mxu0 0.0
        %3208 = vmatprep.subr.mxu0 0.0
        %3209 = vmatpush1.msra.mxu0 0.0
        %3210 = vmatprep.subr.mxu0 0.0
        %3211 = vmatpush1.msra.mxu0 0.0
        %3212 = vmatprep.subr.mxu0 0.0
        %3213 = vmatpush1.msra.mxu0 0.0
        %3214 = vmatprep.subr.mxu0 0.0
        %3215 = vmatpush1.msra.mxu0 0.0
        %3216 = vmatprep.subr.mxu0 0.0
        %3217 = vmatpush1.msra.mxu0 0.0
        %3218 = vmatprep.subr.mxu0 0.0
        %3219 = vmatpush1.msra.mxu0 0.0
        %3220 = vmatprep.subr.mxu0 0.0
        %3221 = vmatpush1.msra.mxu0 0.0
        %3222 = vmatprep.subr.mxu0 0.0
        %3223 = vmatpush1.msra.mxu0 0.0
        %3224 = vmatprep.subr.mxu0 0.0
        %3225 = vmatpush1.msra.mxu0 0.0
        %3226 = vmatprep.subr.mxu0 0.0
        %3227 = vmatpush1.msra.mxu0 0.0
        %3228 = vmatprep.subr.mxu0 0.0
        %3229 = vmatpush1.msra.mxu0 0.0
        %3230 = vmatprep.subr.mxu0 0.0
        %3231 = vmatpush1.msra.mxu0 0.0
        %3232 = vmatprep.subr.mxu0 0.0
        %3233 = vmatpush1.msra.mxu0 0.0
        %3234 = vmatprep.subr.mxu0 0.0
        %3235 = vmatpush1.msra.mxu0 0.0
        %3236 = vmatprep.subr.mxu0 0.0
        %3237 = vmatpush1.msra.mxu0 0.0
        %3238 = vmatprep.subr.mxu0 0.0
        %3239 = vmatpush1.msra.mxu0 0.0
        %3240 = vmatprep.subr.mxu0 0.0
        %3241 = vmatpush1.msra.mxu0 0.0
        %3242 = vmatprep.mubr.f32.mxu0 0.0
        %3243 = vmatmul.mubr.f32.gmra.mrb[0].mxu0 %v2780
        %v3244 = vpop.f32.mrb[0].mxu0
        %v3245 = vadd.f32 %v3095, %v3244
        %v3246 = vpop.f32.mrb[0].mxu0
        %3247 = vdwg.mxu0
        %3248 = vmatprep.subr.mxu0 0.0
        %3249 = vmatpush1.msra.mxu0 %v3071
        %3250 = vmatprep.subr.mxu0 0.0
        %3251 = vmatpush1.msra.mxu0 %v3072
        %3252 = vmatprep.subr.mxu0 0.0
        %3253 = vmatpush1.msra.mxu0 %v3073
        %3254 = vmatprep.subr.mxu0 0.0
        %3255 = vmatpush1.msra.mxu0 %v3074
        %3256 = vmatprep.subr.mxu0 0.0
        %3257 = vmatpush1.msra.mxu0 0.0
        %3258 = vmatprep.subr.mxu0 0.0
        %3259 = vmatpush1.msra.mxu0 0.0
        %3260 = vmatprep.subr.mxu0 0.0
        %3261 = vmatpush1.msra.mxu0 0.0
        %3262 = vmatprep.subr.mxu0 0.0
        %3263 = vmatpush1.msra.mxu0 0.0
        %3264 = vmatprep.subr.mxu0 0.0
        %3265 = vmatpush1.msra.mxu0 0.0
        %3266 = vmatprep.subr.mxu0 0.0
        %3267 = vmatpush1.msra.mxu0 0.0
        %3268 = vmatprep.subr.mxu0 0.0
        %3269 = vmatpush1.msra.mxu0 0.0
        %3270 = vmatprep.subr.mxu0 0.0
        %3271 = vmatpush1.msra.mxu0 0.0
        %3272 = vmatprep.subr.mxu0 0.0
        %3273 = vmatpush1.msra.mxu0 0.0
        %3274 = vmatprep.subr.mxu0 0.0
        %3275 = vmatpush1.msra.mxu0 0.0
        %3276 = vmatprep.subr.mxu0 0.0
        %3277 = vmatpush1.msra.mxu0 0.0
        %3278 = vmatprep.subr.mxu0 0.0
        %3279 = vmatpush1.msra.mxu0 0.0
        %3280 = vmatprep.subr.mxu0 0.0
        %3281 = vmatpush1.msra.mxu0 0.0
        %3282 = vmatprep.subr.mxu0 0.0
        %3283 = vmatpush1.msra.mxu0 0.0
        %3284 = vmatprep.subr.mxu0 0.0
        %3285 = vmatpush1.msra.mxu0 0.0
        %3286 = vmatprep.subr.mxu0 0.0
        %3287 = vmatpush1.msra.mxu0 0.0
        %3288 = vmatprep.subr.mxu0 0.0
        %3289 = vmatpush1.msra.mxu0 0.0
        %3290 = vmatprep.subr.mxu0 0.0
        %3291 = vmatpush1.msra.mxu0 0.0
        %3292 = vmatprep.subr.mxu0 0.0
        %3293 = vmatpush1.msra.mxu0 0.0
        %3294 = vmatprep.subr.mxu0 0.0
        %3295 = vmatpush1.msra.mxu0 0.0
        %3296 = vmatprep.subr.mxu0 0.0
        %3297 = vmatpush1.msra.mxu0 0.0
        %3298 = vmatprep.subr.mxu0 0.0
        %3299 = vmatpush1.msra.mxu0 0.0
        %3300 = vmatprep.subr.mxu0 0.0
        %3301 = vmatpush1.msra.mxu0 0.0
        %3302 = vmatprep.subr.mxu0 0.0
        %3303 = vmatpush1.msra.mxu0 0.0
        %3304 = vmatprep.subr.mxu0 0.0
        %3305 = vmatpush1.msra.mxu0 0.0
        %3306 = vmatprep.subr.mxu0 0.0
        %3307 = vmatpush1.msra.mxu0 0.0
        %3308 = vmatprep.subr.mxu0 0.0
        %3309 = vmatpush1.msra.mxu0 0.0
        %3310 = vmatprep.subr.mxu0 0.0
        %3311 = vmatpush1.msra.mxu0 0.0
        %3312 = vmatprep.mubr.f32.mxu0 0.0
        %3313 = vmatmul.mubr.f32.gmra.mrb[0].mxu0 %v2780
        %v3314 = vpop.f32.mrb[0].mxu0
        %v3315 = vadd.f32 %v3099, %v3314
        %v3316 = vpop.f32.mrb[0].mxu0
        %3317 = vdwg.mxu0
        %3318 = vmatprep.subr.mxu0 0.0
        %3319 = vmatpush1.msra.mxu0 %v3075
        %3320 = vmatprep.subr.mxu0 0.0
        %3321 = vmatpush1.msra.mxu0 %v3076
        %3322 = vmatprep.subr.mxu0 0.0
        %3323 = vmatpush1.msra.mxu0 %v3077
        %3324 = vmatprep.subr.mxu0 0.0
        %3325 = vmatpush1.msra.mxu0 %v3078
        %3326 = vmatprep.subr.mxu0 0.0
        %3327 = vmatpush1.msra.mxu0 0.0
        %3328 = vmatprep.subr.mxu0 0.0
        %3329 = vmatpush1.msra.mxu0 0.0
        %3330 = vmatprep.subr.mxu0 0.0
        %3331 = vmatpush1.msra.mxu0 0.0
        %3332 = vmatprep.subr.mxu0 0.0
        %3333 = vmatpush1.msra.mxu0 0.0
        %3334 = vmatprep.subr.mxu0 0.0
        %3335 = vmatpush1.msra.mxu0 0.0
        %3336 = vmatprep.subr.mxu0 0.0
        %3337 = vmatpush1.msra.mxu0 0.0
        %3338 = vmatprep.subr.mxu0 0.0
        %3339 = vmatpush1.msra.mxu0 0.0
        %3340 = vmatprep.subr.mxu0 0.0
        %3341 = vmatpush1.msra.mxu0 0.0
        %3342 = vmatprep.subr.mxu0 0.0
        %3343 = vmatpush1.msra.mxu0 0.0
        %3344 = vmatprep.subr.mxu0 0.0
        %3345 = vmatpush1.msra.mxu0 0.0
        %3346 = vmatprep.subr.mxu0 0.0
        %3347 = vmatpush1.msra.mxu0 0.0
        %3348 = vmatprep.subr.mxu0 0.0
        %3349 = vmatpush1.msra.mxu0 0.0
        %3350 = vmatprep.subr.mxu0 0.0
        %3351 = vmatpush1.msra.mxu0 0.0
        %3352 = vmatprep.subr.mxu0 0.0
        %3353 = vmatpush1.msra.mxu0 0.0
        %3354 = vmatprep.subr.mxu0 0.0
        %3355 = vmatpush1.msra.mxu0 0.0
        %3356 = vmatprep.subr.mxu0 0.0
        %3357 = vmatpush1.msra.mxu0 0.0
        %3358 = vmatprep.subr.mxu0 0.0
        %3359 = vmatpush1.msra.mxu0 0.0
        %3360 = vmatprep.subr.mxu0 0.0
        %3361 = vmatpush1.msra.mxu0 0.0
        %3362 = vmatprep.subr.mxu0 0.0
        %3363 = vmatpush1.msra.mxu0 0.0
        %3364 = vmatprep.subr.mxu0 0.0
        %3365 = vmatpush1.msra.mxu0 0.0
        %3366 = vmatprep.subr.mxu0 0.0
        %3367 = vmatpush1.msra.mxu0 0.0
        %3368 = vmatprep.subr.mxu0 0.0
        %3369 = vmatpush1.msra.mxu0 0.0
        %3370 = vmatprep.subr.mxu0 0.0
        %3371 = vmatpush1.msra.mxu0 0.0
        %3372 = vmatprep.subr.mxu0 0.0
        %3373 = vmatpush1.msra.mxu0 0.0
        %3374 = vmatprep.subr.mxu0 0.0
        %3375 = vmatpush1.msra.mxu0 0.0
        %3376 = vmatprep.subr.mxu0 0.0
        %3377 = vmatpush1.msra.mxu0 0.0
        %3378 = vmatprep.subr.mxu0 0.0
        %3379 = vmatpush1.msra.mxu0 0.0
        %3380 = vmatprep.subr.mxu0 0.0
        %3381 = vmatpush1.msra.mxu0 0.0
        %3382 = vmatprep.mubr.f32.mxu0 0.0
        %3383 = vmatmul.mubr.f32.gmra.mrb[0].mxu0 %v2780
        %v3384 = vpop.f32.mrb[0].mxu0
        %v3385 = vadd.f32 %v3103, %v3384
        %v3386 = vpop.f32.mrb[0].mxu0
        %3387 = vdwg.mxu0
        %s3388 = scalar_lea.vmem %s3, 640
        %v3389 = vld [vmem:[%s3388] sm:$0xff]
        %v3390 = vld [vmem:[%s3388 + $0x8] sm:$0xff]
        %v3391 = vld [vmem:[%s3388 + $0x10] sm:$0xff]
        %v3392 = vld [vmem:[%s3388 + $0x18] sm:$0xff]
        %v3393 = vld [vmem:[%s3388 + $0x20] sm:$0xff]
        %v3394 = vld [vmem:[%s3388 + $0x28] sm:$0xff]
        %v3395 = vld [vmem:[%s3388 + $0x30] sm:$0xff]
        %v3396 = vld [vmem:[%s3388 + $0x38] sm:$0xff]
        %v3397 = vld [vmem:[%s3388 + $0x40] sm:$0xff]
        %v3398 = vld [vmem:[%s3388 + $0x48] sm:$0xff]
        %v3399 = vld [vmem:[%s3388 + $0x50] sm:$0xff]
        %v3400 = vld [vmem:[%s3388 + $0x58] sm:$0xff]
        %v3401 = vld [vmem:[%s3388 + $0x60] sm:$0xff]
        %v3402 = vld [vmem:[%s3388 + $0x68] sm:$0xff]
        %v3403 = vld [vmem:[%s3388 + $0x70] sm:$0xff]
        %v3404 = vld [vmem:[%s3388 + $0x78] sm:$0xff]
        %s3405 = scalar_lea.vmem %s4, 20
        %v3406 = vld [vmem:[%s3405] sm:$0x1]
        %v3407 = vld [vmem:[%s3405 + $0x1] sm:$0x1]
        %v3408 = vld [vmem:[%s3405 + $0x2] sm:$0x1]
        %v3409 = vld [vmem:[%s3405 + $0x3] sm:$0x1]
        %v3414 = vlaneseq
        %v3415 = vshrl.u32 %v3414, 7
        %v3416 = vsub.s32 0, %v3415
        %v3417 = vrot.slane %v3406, %v3416
        %v3418 = vlaneseq
        %v3419 = vshrl.u32 %v3418, 7
        %v3420 = vsub.s32 0, %v3419
        %v3421 = vrot.slane %v3407, %v3420
        %v3422 = vlaneseq
        %v3423 = vshrl.u32 %v3422, 7
        %v3424 = vsub.s32 0, %v3423
        %v3425 = vrot.slane %v3408, %v3424
        %v3426 = vlaneseq
        %v3427 = vshrl.u32 %v3426, 7
        %v3428 = vsub.s32 0, %v3427
        %v3429 = vrot.slane %v3409, %v3428
        %3434 = vmatprep.subr.mxu0 0.0
        %3435 = vmatpush1.msra.mxu0 %v3389
        %3436 = vmatprep.subr.mxu0 0.0
        %3437 = vmatpush1.msra.mxu0 %v3390
        %3438 = vmatprep.subr.mxu0 0.0
        %3439 = vmatpush1.msra.mxu0 %v3391
        %3440 = vmatprep.subr.mxu0 0.0
        %3441 = vmatpush1.msra.mxu0 %v3392
        %3442 = vmatprep.subr.mxu0 0.0
        %3443 = vmatpush1.msra.mxu0 0.0
        %3444 = vmatprep.subr.mxu0 0.0
        %3445 = vmatpush1.msra.mxu0 0.0
        %3446 = vmatprep.subr.mxu0 0.0
        %3447 = vmatpush1.msra.mxu0 0.0
        %3448 = vmatprep.subr.mxu0 0.0
        %3449 = vmatpush1.msra.mxu0 0.0
        %3450 = vmatprep.subr.mxu0 0.0
        %3451 = vmatpush1.msra.mxu0 0.0
        %3452 = vmatprep.subr.mxu0 0.0
        %3453 = vmatpush1.msra.mxu0 0.0
        %3454 = vmatprep.subr.mxu0 0.0
        %3455 = vmatpush1.msra.mxu0 0.0
        %3456 = vmatprep.subr.mxu0 0.0
        %3457 = vmatpush1.msra.mxu0 0.0
        %3458 = vmatprep.subr.mxu0 0.0
        %3459 = vmatpush1.msra.mxu0 0.0
        %3460 = vmatprep.subr.mxu0 0.0
        %3461 = vmatpush1.msra.mxu0 0.0
        %3462 = vmatprep.subr.mxu0 0.0
        %3463 = vmatpush1.msra.mxu0 0.0
        %3464 = vmatprep.subr.mxu0 0.0
        %3465 = vmatpush1.msra.mxu0 0.0
        %3466 = vmatprep.subr.mxu0 0.0
        %3467 = vmatpush1.msra.mxu0 0.0
        %3468 = vmatprep.subr.mxu0 0.0
        %3469 = vmatpush1.msra.mxu0 0.0
        %3470 = vmatprep.subr.mxu0 0.0
        %3471 = vmatpush1.msra.mxu0 0.0
        %3472 = vmatprep.subr.mxu0 0.0
        %3473 = vmatpush1.msra.mxu0 0.0
        %3474 = vmatprep.subr.mxu0 0.0
        %3475 = vmatpush1.msra.mxu0 0.0
        %3476 = vmatprep.subr.mxu0 0.0
        %3477 = vmatpush1.msra.mxu0 0.0
        %3478 = vmatprep.subr.mxu0 0.0
        %3479 = vmatpush1.msra.mxu0 0.0
        %3480 = vmatprep.subr.mxu0 0.0
        %3481 = vmatpush1.msra.mxu0 0.0
        %3482 = vmatprep.subr.mxu0 0.0
        %3483 = vmatpush1.msra.mxu0 0.0
        %3484 = vmatprep.subr.mxu0 0.0
        %3485 = vmatpush1.msra.mxu0 0.0
        %3486 = vmatprep.subr.mxu0 0.0
        %3487 = vmatpush1.msra.mxu0 0.0
        %3488 = vmatprep.subr.mxu0 0.0
        %3489 = vmatpush1.msra.mxu0 0.0
        %3490 = vmatprep.subr.mxu0 0.0
        %3491 = vmatpush1.msra.mxu0 0.0
        %3492 = vmatprep.subr.mxu0 0.0
        %3493 = vmatpush1.msra.mxu0 0.0
        %3494 = vmatprep.subr.mxu0 0.0
        %3495 = vmatpush1.msra.mxu0 0.0
        %3496 = vmatprep.subr.mxu0 0.0
        %3497 = vmatpush1.msra.mxu0 0.0
        %3498 = vmatprep.mubr.f32.mxu0 0.0
        %3499 = vmatmul.mubr.f32.gmra.mrb[0].mxu0 %v2780
        %v3500 = vpop.f32.mrb[0].mxu0
        %v3501 = vadd.f32 %v3417, %v3500
        %v3502 = vpop.f32.mrb[0].mxu0
        %3503 = vdwg.mxu0
        %3504 = vmatprep.subr.mxu0 0.0
        %3505 = vmatpush1.msra.mxu0 %v3393
        %3506 = vmatprep.subr.mxu0 0.0
        %3507 = vmatpush1.msra.mxu0 %v3394
        %3508 = vmatprep.subr.mxu0 0.0
        %3509 = vmatpush1.msra.mxu0 %v3395
        %3510 = vmatprep.subr.mxu0 0.0
        %3511 = vmatpush1.msra.mxu0 %v3396
        %3512 = vmatprep.subr.mxu0 0.0
        %3513 = vmatpush1.msra.mxu0 0.0
        %3514 = vmatprep.subr.mxu0 0.0
        %3515 = vmatpush1.msra.mxu0 0.0
        %3516 = vmatprep.subr.mxu0 0.0
        %3517 = vmatpush1.msra.mxu0 0.0
        %3518 = vmatprep.subr.mxu0 0.0
        %3519 = vmatpush1.msra.mxu0 0.0
        %3520 = vmatprep.subr.mxu0 0.0
        %3521 = vmatpush1.msra.mxu0 0.0
        %3522 = vmatprep.subr.mxu0 0.0
        %3523 = vmatpush1.msra.mxu0 0.0
        %3524 = vmatprep.subr.mxu0 0.0
        %3525 = vmatpush1.msra.mxu0 0.0
        %3526 = vmatprep.subr.mxu0 0.0
        %3527 = vmatpush1.msra.mxu0 0.0
        %3528 = vmatprep.subr.mxu0 0.0
        %3529 = vmatpush1.msra.mxu0 0.0
        %3530 = vmatprep.subr.mxu0 0.0
        %3531 = vmatpush1.msra.mxu0 0.0
        %3532 = vmatprep.subr.mxu0 0.0
        %3533 = vmatpush1.msra.mxu0 0.0
        %3534 = vmatprep.subr.mxu0 0.0
        %3535 = vmatpush1.msra.mxu0 0.0
        %3536 = vmatprep.subr.mxu0 0.0
        %3537 = vmatpush1.msra.mxu0 0.0
        %3538 = vmatprep.subr.mxu0 0.0
        %3539 = vmatpush1.msra.mxu0 0.0
        %3540 = vmatprep.subr.mxu0 0.0
        %3541 = vmatpush1.msra.mxu0 0.0
        %3542 = vmatprep.subr.mxu0 0.0
        %3543 = vmatpush1.msra.mxu0 0.0
        %3544 = vmatprep.subr.mxu0 0.0
        %3545 = vmatpush1.msra.mxu0 0.0
        %3546 = vmatprep.subr.mxu0 0.0
        %3547 = vmatpush1.msra.mxu0 0.0
        %3548 = vmatprep.subr.mxu0 0.0
        %3549 = vmatpush1.msra.mxu0 0.0
        %3550 = vmatprep.subr.mxu0 0.0
        %3551 = vmatpush1.msra.mxu0 0.0
        %3552 = vmatprep.subr.mxu0 0.0
        %3553 = vmatpush1.msra.mxu0 0.0
        %3554 = vmatprep.subr.mxu0 0.0
        %3555 = vmatpush1.msra.mxu0 0.0
        %3556 = vmatprep.subr.mxu0 0.0
        %3557 = vmatpush1.msra.mxu0 0.0
        %3558 = vmatprep.subr.mxu0 0.0
        %3559 = vmatpush1.msra.mxu0 0.0
        %3560 = vmatprep.subr.mxu0 0.0
        %3561 = vmatpush1.msra.mxu0 0.0
        %3562 = vmatprep.subr.mxu0 0.0
        %3563 = vmatpush1.msra.mxu0 0.0
        %3564 = vmatprep.subr.mxu0 0.0
        %3565 = vmatpush1.msra.mxu0 0.0
        %3566 = vmatprep.subr.mxu0 0.0
        %3567 = vmatpush1.msra.mxu0 0.0
        %3568 = vmatprep.mubr.f32.mxu0 0.0
        %3569 = vmatmul.mubr.f32.gmra.mrb[0].mxu0 %v2780
        %v3570 = vpop.f32.mrb[0].mxu0
        %v3571 = vadd.f32 %v3421, %v3570
        %v3572 = vpop.f32.mrb[0].mxu0
        %3573 = vdwg.mxu0
        %3574 = vmatprep.subr.mxu0 0.0
        %3575 = vmatpush1.msra.mxu0 %v3397
        %3576 = vmatprep.subr.mxu0 0.0
        %3577 = vmatpush1.msra.mxu0 %v3398
        %3578 = vmatprep.subr.mxu0 0.0
        %3579 = vmatpush1.msra.mxu0 %v3399
        %3580 = vmatprep.subr.mxu0 0.0
        %3581 = vmatpush1.msra.mxu0 %v3400
        %3582 = vmatprep.subr.mxu0 0.0
        %3583 = vmatpush1.msra.mxu0 0.0
        %3584 = vmatprep.subr.mxu0 0.0
        %3585 = vmatpush1.msra.mxu0 0.0
        %3586 = vmatprep.subr.mxu0 0.0
        %3587 = vmatpush1.msra.mxu0 0.0
        %3588 = vmatprep.subr.mxu0 0.0
        %3589 = vmatpush1.msra.mxu0 0.0
        %3590 = vmatprep.subr.mxu0 0.0
        %3591 = vmatpush1.msra.mxu0 0.0
        %3592 = vmatprep.subr.mxu0 0.0
        %3593 = vmatpush1.msra.mxu0 0.0
        %3594 = vmatprep.subr.mxu0 0.0
        %3595 = vmatpush1.msra.mxu0 0.0
        %3596 = vmatprep.subr.mxu0 0.0
        %3597 = vmatpush1.msra.mxu0 0.0
        %3598 = vmatprep.subr.mxu0 0.0
        %3599 = vmatpush1.msra.mxu0 0.0
        %3600 = vmatprep.subr.mxu0 0.0
        %3601 = vmatpush1.msra.mxu0 0.0
        %3602 = vmatprep.subr.mxu0 0.0
        %3603 = vmatpush1.msra.mxu0 0.0
        %3604 = vmatprep.subr.mxu0 0.0
        %3605 = vmatpush1.msra.mxu0 0.0
        %3606 = vmatprep.subr.mxu0 0.0
        %3607 = vmatpush1.msra.mxu0 0.0
        %3608 = vmatprep.subr.mxu0 0.0
        %3609 = vmatpush1.msra.mxu0 0.0
        %3610 = vmatprep.subr.mxu0 0.0
        %3611 = vmatpush1.msra.mxu0 0.0
        %3612 = vmatprep.subr.mxu0 0.0
        %3613 = vmatpush1.msra.mxu0 0.0
        %3614 = vmatprep.subr.mxu0 0.0
        %3615 = vmatpush1.msra.mxu0 0.0
        %3616 = vmatprep.subr.mxu0 0.0
        %3617 = vmatpush1.msra.mxu0 0.0
        %3618 = vmatprep.subr.mxu0 0.0
        %3619 = vmatpush1.msra.mxu0 0.0
        %3620 = vmatprep.subr.mxu0 0.0
        %3621 = vmatpush1.msra.mxu0 0.0
        %3622 = vmatprep.subr.mxu0 0.0
        %3623 = vmatpush1.msra.mxu0 0.0
        %3624 = vmatprep.subr.mxu0 0.0
        %3625 = vmatpush1.msra.mxu0 0.0
        %3626 = vmatprep.subr.mxu0 0.0
        %3627 = vmatpush1.msra.mxu0 0.0
        %3628 = vmatprep.subr.mxu0 0.0
        %3629 = vmatpush1.msra.mxu0 0.0
        %3630 = vmatprep.subr.mxu0 0.0
        %3631 = vmatpush1.msra.mxu0 0.0
        %3632 = vmatprep.subr.mxu0 0.0
        %3633 = vmatpush1.msra.mxu0 0.0
        %3634 = vmatprep.subr.mxu0 0.0
        %3635 = vmatpush1.msra.mxu0 0.0
        %3636 = vmatprep.subr.mxu0 0.0
        %3637 = vmatpush1.msra.mxu0 0.0
        %3638 = vmatprep.mubr.f32.mxu0 0.0
        %3639 = vmatmul.mubr.f32.gmra.mrb[0].mxu0 %v2780
        %v3640 = vpop.f32.mrb[0].mxu0
        %v3641 = vadd.f32 %v3425, %v3640
        %v3642 = vpop.f32.mrb[0].mxu0
        %3643 = vdwg.mxu0
        %3644 = vmatprep.subr.mxu0 0.0
        %3645 = vmatpush1.msra.mxu0 %v3401
        %3646 = vmatprep.subr.mxu0 0.0
        %3647 = vmatpush1.msra.mxu0 %v3402
        %3648 = vmatprep.subr.mxu0 0.0
        %3649 = vmatpush1.msra.mxu0 %v3403
        %3650 = vmatprep.subr.mxu0 0.0
        %3651 = vmatpush1.msra.mxu0 %v3404
        %3652 = vmatprep.subr.mxu0 0.0
        %3653 = vmatpush1.msra.mxu0 0.0
        %3654 = vmatprep.subr.mxu0 0.0
        %3655 = vmatpush1.msra.mxu0 0.0
        %3656 = vmatprep.subr.mxu0 0.0
        %3657 = vmatpush1.msra.mxu0 0.0
        %3658 = vmatprep.subr.mxu0 0.0
        %3659 = vmatpush1.msra.mxu0 0.0
        %3660 = vmatprep.subr.mxu0 0.0
        %3661 = vmatpush1.msra.mxu0 0.0
        %3662 = vmatprep.subr.mxu0 0.0
        %3663 = vmatpush1.msra.mxu0 0.0
        %3664 = vmatprep.subr.mxu0 0.0
        %3665 = vmatpush1.msra.mxu0 0.0
        %3666 = vmatprep.subr.mxu0 0.0
        %3667 = vmatpush1.msra.mxu0 0.0
        %3668 = vmatprep.subr.mxu0 0.0
        %3669 = vmatpush1.msra.mxu0 0.0
        %3670 = vmatprep.subr.mxu0 0.0
        %3671 = vmatpush1.msra.mxu0 0.0
        %3672 = vmatprep.subr.mxu0 0.0
        %3673 = vmatpush1.msra.mxu0 0.0
        %3674 = vmatprep.subr.mxu0 0.0
        %3675 = vmatpush1.msra.mxu0 0.0
        %3676 = vmatprep.subr.mxu0 0.0
        %3677 = vmatpush1.msra.mxu0 0.0
        %3678 = vmatprep.subr.mxu0 0.0
        %3679 = vmatpush1.msra.mxu0 0.0
        %3680 = vmatprep.subr.mxu0 0.0
        %3681 = vmatpush1.msra.mxu0 0.0
        %3682 = vmatprep.subr.mxu0 0.0
        %3683 = vmatpush1.msra.mxu0 0.0
        %3684 = vmatprep.subr.mxu0 0.0
        %3685 = vmatpush1.msra.mxu0 0.0
        %3686 = vmatprep.subr.mxu0 0.0
        %3687 = vmatpush1.msra.mxu0 0.0
        %3688 = vmatprep.subr.mxu0 0.0
        %3689 = vmatpush1.msra.mxu0 0.0
        %3690 = vmatprep.subr.mxu0 0.0
        %3691 = vmatpush1.msra.mxu0 0.0
        %3692 = vmatprep.subr.mxu0 0.0
        %3693 = vmatpush1.msra.mxu0 0.0
        %3694 = vmatprep.subr.mxu0 0.0
        %3695 = vmatpush1.msra.mxu0 0.0
        %3696 = vmatprep.subr.mxu0 0.0
        %3697 = vmatpush1.msra.mxu0 0.0
        %3698 = vmatprep.subr.mxu0 0.0
        %3699 = vmatpush1.msra.mxu0 0.0
        %3700 = vmatprep.subr.mxu0 0.0
        %3701 = vmatpush1.msra.mxu0 0.0
        %3702 = vmatprep.subr.mxu0 0.0
        %3703 = vmatpush1.msra.mxu0 0.0
        %3704 = vmatprep.subr.mxu0 0.0
        %3705 = vmatpush1.msra.mxu0 0.0
        %3706 = vmatprep.subr.mxu0 0.0
        %3707 = vmatpush1.msra.mxu0 0.0
        %3708 = vmatprep.mubr.f32.mxu0 0.0
        %3709 = vmatmul.mubr.f32.gmra.mrb[0].mxu0 %v2780
        %v3710 = vpop.f32.mrb[0].mxu0
        %v3711 = vadd.f32 %v3429, %v3710
        %v3712 = vpop.f32.mrb[0].mxu0
        %3713 = vdwg.mxu0
        %v3715 = vsel %vm1522, %v2849, 0
        %v3718 = vsel %vm1522, %v3175, 0
        %3720 = vmatprep.subr.mxu0 0.0
        %3721 = vmatpush1.xpose.msra.mxu0 %v3718
        %3722 = vmatprep.subr.mxu0 0.0
        %3723 = vmatpush1.xpose.msra.mxu0 0.0
        %3724 = vmatprep.subr.mxu0 0.0
        %3725 = vmatpush1.xpose.msra.mxu0 0.0
        %3726 = vmatprep.subr.mxu0 0.0
        %3727 = vmatpush1.xpose.msra.mxu0 0.0
        %3728 = vmatprep.subr.mxu0 0.0
        %3729 = vmatpush1.xpose.msra.mxu0 0.0
        %3730 = vmatprep.subr.mxu0 0.0
        %3731 = vmatpush1.xpose.msra.mxu0 0.0
        %3732 = vmatprep.subr.mxu0 0.0
        %3733 = vmatpush1.xpose.msra.mxu0 0.0
        %3734 = vmatprep.subr.mxu0 0.0
        %3735 = vmatpush1.xpose.msra.mxu0 0.0
        %3736 = vmatprep.subr.mxu0 0.0
        %3737 = vmatpush1.xpose.msra.mxu0 0.0
        %3738 = vmatprep.subr.mxu0 0.0
        %3739 = vmatpush1.xpose.msra.mxu0 0.0
        %3740 = vmatprep.subr.mxu0 0.0
        %3741 = vmatpush1.xpose.msra.mxu0 0.0
        %3742 = vmatprep.subr.mxu0 0.0
        %3743 = vmatpush1.xpose.msra.mxu0 0.0
        %3744 = vmatprep.subr.mxu0 0.0
        %3745 = vmatpush1.xpose.msra.mxu0 0.0
        %3746 = vmatprep.subr.mxu0 0.0
        %3747 = vmatpush1.xpose.msra.mxu0 0.0
        %3748 = vmatprep.subr.mxu0 0.0
        %3749 = vmatpush1.xpose.msra.mxu0 0.0
        %3750 = vmatprep.subr.mxu0 0.0
        %3751 = vmatpush1.xpose.msra.mxu0 0.0
        %3752 = vmatprep.subr.mxu0 0.0
        %3753 = vmatpush1.xpose.msra.mxu0 0.0
        %3754 = vmatprep.subr.mxu0 0.0
        %3755 = vmatpush1.xpose.msra.mxu0 0.0
        %3756 = vmatprep.subr.mxu0 0.0
        %3757 = vmatpush1.xpose.msra.mxu0 0.0
        %3758 = vmatprep.subr.mxu0 0.0
        %3759 = vmatpush1.xpose.msra.mxu0 0.0
        %3760 = vmatprep.subr.mxu0 0.0
        %3761 = vmatpush1.xpose.msra.mxu0 0.0
        %3762 = vmatprep.subr.mxu0 0.0
        %3763 = vmatpush1.xpose.msra.mxu0 0.0
        %3764 = vmatprep.subr.mxu0 0.0
        %3765 = vmatpush1.xpose.msra.mxu0 0.0
        %3766 = vmatprep.subr.mxu0 0.0
        %3767 = vmatpush1.xpose.msra.mxu0 0.0
        %3768 = vmatprep.subr.mxu0 0.0
        %3769 = vmatpush1.xpose.msra.mxu0 0.0
        %3770 = vmatprep.subr.mxu0 0.0
        %3771 = vmatpush1.xpose.msra.mxu0 0.0
        %3772 = vmatprep.subr.mxu0 0.0
        %3773 = vmatpush1.xpose.msra.mxu0 0.0
        %3774 = vmatprep.subr.mxu0 0.0
        %3775 = vmatpush1.xpose.msra.mxu0 0.0
        %3776 = vmatprep.subr.mxu0 0.0
        %3777 = vmatpush1.xpose.msra.mxu0 0.0
        %3778 = vmatprep.subr.mxu0 0.0
        %3779 = vmatpush1.xpose.msra.mxu0 0.0
        %3780 = vmatprep.subr.mxu0 0.0
        %3781 = vmatpush1.xpose.msra.mxu0 0.0
        %3782 = vmatprep.subr.mxu0 0.0
        %3783 = vmatpush1.xpose.msra.mxu0 0.0
        %3784 = vmatprep.mubr.f32.mxu0 0.0
        %3785 = vmatmul.mubr.f32.gmra.mrb[0].mxu0 %v3715
        %v3786 = vpop.f32.mrb[0].mxu0
        %v3787 = vadd.f32 0.0, %v3786
        %v3788 = vpop.f32.mrb[0].mxu0
        %3789 = vdwg.mxu0
        %v3791 = vsel %vm1522, %v2919, 0
        %v3794 = vsel %vm1522, %v3245, 0
        %3796 = vmatprep.subr.mxu0 0.0
        %3797 = vmatpush1.xpose.msra.mxu0 %v3794
        %3798 = vmatprep.subr.mxu0 0.0
        %3799 = vmatpush1.xpose.msra.mxu0 0.0
        %3800 = vmatprep.subr.mxu0 0.0
        %3801 = vmatpush1.xpose.msra.mxu0 0.0
        %3802 = vmatprep.subr.mxu0 0.0
        %3803 = vmatpush1.xpose.msra.mxu0 0.0
        %3804 = vmatprep.subr.mxu0 0.0
        %3805 = vmatpush1.xpose.msra.mxu0 0.0
        %3806 = vmatprep.subr.mxu0 0.0
        %3807 = vmatpush1.xpose.msra.mxu0 0.0
        %3808 = vmatprep.subr.mxu0 0.0
        %3809 = vmatpush1.xpose.msra.mxu0 0.0
        %3810 = vmatprep.subr.mxu0 0.0
        %3811 = vmatpush1.xpose.msra.mxu0 0.0
        %3812 = vmatprep.subr.mxu0 0.0
        %3813 = vmatpush1.xpose.msra.mxu0 0.0
        %3814 = vmatprep.subr.mxu0 0.0
        %3815 = vmatpush1.xpose.msra.mxu0 0.0
        %3816 = vmatprep.subr.mxu0 0.0
        %3817 = vmatpush1.xpose.msra.mxu0 0.0
        %3818 = vmatprep.subr.mxu0 0.0
        %3819 = vmatpush1.xpose.msra.mxu0 0.0
        %3820 = vmatprep.subr.mxu0 0.0
        %3821 = vmatpush1.xpose.msra.mxu0 0.0
        %3822 = vmatprep.subr.mxu0 0.0
        %3823 = vmatpush1.xpose.msra.mxu0 0.0
        %3824 = vmatprep.subr.mxu0 0.0
        %3825 = vmatpush1.xpose.msra.mxu0 0.0
        %3826 = vmatprep.subr.mxu0 0.0
        %3827 = vmatpush1.xpose.msra.mxu0 0.0
        %3828 = vmatprep.subr.mxu0 0.0
        %3829 = vmatpush1.xpose.msra.mxu0 0.0
        %3830 = vmatprep.subr.mxu0 0.0
        %3831 = vmatpush1.xpose.msra.mxu0 0.0
        %3832 = vmatprep.subr.mxu0 0.0
        %3833 = vmatpush1.xpose.msra.mxu0 0.0
        %3834 = vmatprep.subr.mxu0 0.0
        %3835 = vmatpush1.xpose.msra.mxu0 0.0
        %3836 = vmatprep.subr.mxu0 0.0
        %3837 = vmatpush1.xpose.msra.mxu0 0.0
        %3838 = vmatprep.subr.mxu0 0.0
        %3839 = vmatpush1.xpose.msra.mxu0 0.0
        %3840 = vmatprep.subr.mxu0 0.0
        %3841 = vmatpush1.xpose.msra.mxu0 0.0
        %3842 = vmatprep.subr.mxu0 0.0
        %3843 = vmatpush1.xpose.msra.mxu0 0.0
        %3844 = vmatprep.subr.mxu0 0.0
        %3845 = vmatpush1.xpose.msra.mxu0 0.0
        %3846 = vmatprep.subr.mxu0 0.0
        %3847 = vmatpush1.xpose.msra.mxu0 0.0
        %3848 = vmatprep.subr.mxu0 0.0
        %3849 = vmatpush1.xpose.msra.mxu0 0.0
        %3850 = vmatprep.subr.mxu0 0.0
        %3851 = vmatpush1.xpose.msra.mxu0 0.0
        %3852 = vmatprep.subr.mxu0 0.0
        %3853 = vmatpush1.xpose.msra.mxu0 0.0
        %3854 = vmatprep.subr.mxu0 0.0
        %3855 = vmatpush1.xpose.msra.mxu0 0.0
        %3856 = vmatprep.subr.mxu0 0.0
        %3857 = vmatpush1.xpose.msra.mxu0 0.0
        %3858 = vmatprep.subr.mxu0 0.0
        %3859 = vmatpush1.xpose.msra.mxu0 0.0
        %3860 = vmatprep.mubr.f32.mxu0 0.0
        %3861 = vmatmul.mubr.f32.gmra.mrb[0].mxu0 %v3791
        %v3862 = vpop.f32.mrb[0].mxu0
        %v3863 = vadd.f32 0.0, %v3862
        %v3864 = vpop.f32.mrb[0].mxu0
        %3865 = vdwg.mxu0
        %v3867 = vsel %vm1522, %v2989, 0
        %v3870 = vsel %vm1522, %v3315, 0
        %3872 = vmatprep.subr.mxu0 0.0
        %3873 = vmatpush1.xpose.msra.mxu0 %v3870
        %3874 = vmatprep.subr.mxu0 0.0
        %3875 = vmatpush1.xpose.msra.mxu0 0.0
        %3876 = vmatprep.subr.mxu0 0.0
        %3877 = vmatpush1.xpose.msra.mxu0 0.0
        %3878 = vmatprep.subr.mxu0 0.0
        %3879 = vmatpush1.xpose.msra.mxu0 0.0
        %3880 = vmatprep.subr.mxu0 0.0
        %3881 = vmatpush1.xpose.msra.mxu0 0.0
        %3882 = vmatprep.subr.mxu0 0.0
        %3883 = vmatpush1.xpose.msra.mxu0 0.0
        %3884 = vmatprep.subr.mxu0 0.0
        %3885 = vmatpush1.xpose.msra.mxu0 0.0
        %3886 = vmatprep.subr.mxu0 0.0
        %3887 = vmatpush1.xpose.msra.mxu0 0.0
        %3888 = vmatprep.subr.mxu0 0.0
        %3889 = vmatpush1.xpose.msra.mxu0 0.0
        %3890 = vmatprep.subr.mxu0 0.0
        %3891 = vmatpush1.xpose.msra.mxu0 0.0
        %3892 = vmatprep.subr.mxu0 0.0
        %3893 = vmatpush1.xpose.msra.mxu0 0.0
        %3894 = vmatprep.subr.mxu0 0.0
        %3895 = vmatpush1.xpose.msra.mxu0 0.0
        %3896 = vmatprep.subr.mxu0 0.0
        %3897 = vmatpush1.xpose.msra.mxu0 0.0
        %3898 = vmatprep.subr.mxu0 0.0
        %3899 = vmatpush1.xpose.msra.mxu0 0.0
        %3900 = vmatprep.subr.mxu0 0.0
        %3901 = vmatpush1.xpose.msra.mxu0 0.0
        %3902 = vmatprep.subr.mxu0 0.0
        %3903 = vmatpush1.xpose.msra.mxu0 0.0
        %3904 = vmatprep.subr.mxu0 0.0
        %3905 = vmatpush1.xpose.msra.mxu0 0.0
        %3906 = vmatprep.subr.mxu0 0.0
        %3907 = vmatpush1.xpose.msra.mxu0 0.0
        %3908 = vmatprep.subr.mxu0 0.0
        %3909 = vmatpush1.xpose.msra.mxu0 0.0
        %3910 = vmatprep.subr.mxu0 0.0
        %3911 = vmatpush1.xpose.msra.mxu0 0.0
        %3912 = vmatprep.subr.mxu0 0.0
        %3913 = vmatpush1.xpose.msra.mxu0 0.0
        %3914 = vmatprep.subr.mxu0 0.0
        %3915 = vmatpush1.xpose.msra.mxu0 0.0
        %3916 = vmatprep.subr.mxu0 0.0
        %3917 = vmatpush1.xpose.msra.mxu0 0.0
        %3918 = vmatprep.subr.mxu0 0.0
        %3919 = vmatpush1.xpose.msra.mxu0 0.0
        %3920 = vmatprep.subr.mxu0 0.0
        %3921 = vmatpush1.xpose.msra.mxu0 0.0
        %3922 = vmatprep.subr.mxu0 0.0
        %3923 = vmatpush1.xpose.msra.mxu0 0.0
        %3924 = vmatprep.subr.mxu0 0.0
        %3925 = vmatpush1.xpose.msra.mxu0 0.0
        %3926 = vmatprep.subr.mxu0 0.0
        %3927 = vmatpush1.xpose.msra.mxu0 0.0
        %3928 = vmatprep.subr.mxu0 0.0
        %3929 = vmatpush1.xpose.msra.mxu0 0.0
        %3930 = vmatprep.subr.mxu0 0.0
        %3931 = vmatpush1.xpose.msra.mxu0 0.0
        %3932 = vmatprep.subr.mxu0 0.0
        %3933 = vmatpush1.xpose.msra.mxu0 0.0
        %3934 = vmatprep.subr.mxu0 0.0
        %3935 = vmatpush1.xpose.msra.mxu0 0.0
        %3936 = vmatprep.mubr.f32.mxu0 0.0
        %3937 = vmatmul.mubr.f32.gmra.mrb[0].mxu0 %v3867
        %v3938 = vpop.f32.mrb[0].mxu0
        %v3939 = vadd.f32 0.0, %v3938
        %v3940 = vpop.f32.mrb[0].mxu0
        %3941 = vdwg.mxu0
        %v3943 = vsel %vm1522, %v3059, 0
        %v3946 = vsel %vm1522, %v3385, 0
        %3948 = vmatprep.subr.mxu0 0.0
        %3949 = vmatpush1.xpose.msra.mxu0 %v3946
        %3950 = vmatprep.subr.mxu0 0.0
        %3951 = vmatpush1.xpose.msra.mxu0 0.0
        %3952 = vmatprep.subr.mxu0 0.0
        %3953 = vmatpush1.xpose.msra.mxu0 0.0
        %3954 = vmatprep.subr.mxu0 0.0
        %3955 = vmatpush1.xpose.msra.mxu0 0.0
        %3956 = vmatprep.subr.mxu0 0.0
        %3957 = vmatpush1.xpose.msra.mxu0 0.0
        %3958 = vmatprep.subr.mxu0 0.0
        %3959 = vmatpush1.xpose.msra.mxu0 0.0
        %3960 = vmatprep.subr.mxu0 0.0
        %3961 = vmatpush1.xpose.msra.mxu0 0.0
        %3962 = vmatprep.subr.mxu0 0.0
        %3963 = vmatpush1.xpose.msra.mxu0 0.0
        %3964 = vmatprep.subr.mxu0 0.0
        %3965 = vmatpush1.xpose.msra.mxu0 0.0
        %3966 = vmatprep.subr.mxu0 0.0
        %3967 = vmatpush1.xpose.msra.mxu0 0.0
        %3968 = vmatprep.subr.mxu0 0.0
        %3969 = vmatpush1.xpose.msra.mxu0 0.0
        %3970 = vmatprep.subr.mxu0 0.0
        %3971 = vmatpush1.xpose.msra.mxu0 0.0
        %3972 = vmatprep.subr.mxu0 0.0
        %3973 = vmatpush1.xpose.msra.mxu0 0.0
        %3974 = vmatprep.subr.mxu0 0.0
        %3975 = vmatpush1.xpose.msra.mxu0 0.0
        %3976 = vmatprep.subr.mxu0 0.0
        %3977 = vmatpush1.xpose.msra.mxu0 0.0
        %3978 = vmatprep.subr.mxu0 0.0
        %3979 = vmatpush1.xpose.msra.mxu0 0.0
        %3980 = vmatprep.subr.mxu0 0.0
        %3981 = vmatpush1.xpose.msra.mxu0 0.0
        %3982 = vmatprep.subr.mxu0 0.0
        %3983 = vmatpush1.xpose.msra.mxu0 0.0
        %3984 = vmatprep.subr.mxu0 0.0
        %3985 = vmatpush1.xpose.msra.mxu0 0.0
        %3986 = vmatprep.subr.mxu0 0.0
        %3987 = vmatpush1.xpose.msra.mxu0 0.0
        %3988 = vmatprep.subr.mxu0 0.0
        %3989 = vmatpush1.xpose.msra.mxu0 0.0
        %3990 = vmatprep.subr.mxu0 0.0
        %3991 = vmatpush1.xpose.msra.mxu0 0.0
        %3992 = vmatprep.subr.mxu0 0.0
        %3993 = vmatpush1.xpose.msra.mxu0 0.0
        %3994 = vmatprep.subr.mxu0 0.0
        %3995 = vmatpush1.xpose.msra.mxu0 0.0
        %3996 = vmatprep.subr.mxu0 0.0
        %3997 = vmatpush1.xpose.msra.mxu0 0.0
        %3998 = vmatprep.subr.mxu0 0.0
        %3999 = vmatpush1.xpose.msra.mxu0 0.0
        %4000 = vmatprep.subr.mxu0 0.0
        %4001 = vmatpush1.xpose.msra.mxu0 0.0
        %4002 = vmatprep.subr.mxu0 0.0
        %4003 = vmatpush1.xpose.msra.mxu0 0.0
        %4004 = vmatprep.subr.mxu0 0.0
        %4005 = vmatpush1.xpose.msra.mxu0 0.0
        %4006 = vmatprep.subr.mxu0 0.0
        %4007 = vmatpush1.xpose.msra.mxu0 0.0
        %4008 = vmatprep.subr.mxu0 0.0
        %4009 = vmatpush1.xpose.msra.mxu0 0.0
        %4010 = vmatprep.subr.mxu0 0.0
        %4011 = vmatpush1.xpose.msra.mxu0 0.0
        %4012 = vmatprep.mubr.f32.mxu0 0.0
        %4013 = vmatmul.mubr.f32.gmra.mrb[0].mxu0 %v3943
        %v4014 = vpop.f32.mrb[0].mxu0
        %v4015 = vadd.f32 0.0, %v4014
        %v4016 = vpop.f32.mrb[0].mxu0
        %4017 = vdwg.mxu0
        %v4018 = vmul.f32 %v3787, 0.35355338
        %v4019 = vmul.f32 %v3863, 0.35355338
        %v4020 = vmul.f32 %v3939, 0.35355338
        %v4021 = vmul.f32 %v4015, 0.35355338
        %v4022 = vsel %vm1831, %v4018, -inf
        %4023 = vmax.xlane.f32.xlu0 %v4022
        %v4024 = vpop.xlane.xlu0 %4023
        %v4025 = vsel %vm1831, %v4019, -inf
        %4026 = vmax.xlane.f32.xlu0 %v4025
        %v4027 = vpop.xlane.xlu0 %4026
        %v4028 = vsel %vm1831, %v4020, -inf
        %4029 = vmax.xlane.f32.xlu0 %v4028
        %v4030 = vpop.xlane.xlu0 %4029
        %v4031 = vsel %vm1831, %v4021, -inf
        %4032 = vmax.xlane.f32.xlu0 %v4031
        %v4033 = vpop.xlane.xlu0 %4032
        %v4034 = vsub.f32 %v4018, %v4024
        %v4035 = vsub.f32 %v4019, %v4027
        %v4036 = vsub.f32 %v4020, %v4030
        %v4037 = vsub.f32 %v4021, %v4033
        %v4038 = vmul.f32 %v4034, 1.442695
        %v4039 = vpow.pop %v4038
        %v4040 = vmul.f32 %v4035, 1.442695
        %v4041 = vpow.pop %v4040
        %v4042 = vmul.f32 %v4036, 1.442695
        %v4043 = vpow.pop %v4042
        %v4044 = vmul.f32 %v4037, 1.442695
        %v4045 = vpow.pop %v4044
        %v4046 = vsel %vm1831, %v4039, 0.0
        %4047 = vadd.xlane.f32.xlu0 %v4046
        %v4048 = vpop.xlane.xlu0 %4047
        %v4049 = vsel %vm1831, %v4041, 0.0
        %4050 = vadd.xlane.f32.xlu0 %v4049
        %v4051 = vpop.xlane.xlu0 %4050
        %v4052 = vsel %vm1831, %v4043, 0.0
        %4053 = vadd.xlane.f32.xlu0 %v4052
        %v4054 = vpop.xlane.xlu0 %4053
        %v4055 = vsel %vm1831, %v4045, 0.0
        %4056 = vadd.xlane.f32.xlu0 %v4055
        %v4057 = vpop.xlane.xlu0 %4056
        %v4058 = vrcp.pop %v4048
        %v4059 = vrcp.pop %v4051
        %v4060 = vrcp.pop %v4054
        %v4061 = vrcp.pop %v4057
        %v4062 = vmul.f32 %v4039, %v4058
        %v4063 = vmul.f32 %v4041, %v4059
        %v4064 = vmul.f32 %v4043, %v4060
        %v4065 = vmul.f32 %v4045, %v4061
        %v4067 = vsel %vm1876, %v4062, 0
        %v4070 = vsel %vm1880, %v3501, 0
        %4072 = vmatprep.subr.mxu0 0.0
        %4073 = vmatpush1.msra.mxu0 %v4070
        %4074 = vmatprep.subr.mxu0 0.0
        %4075 = vmatpush1.msra.mxu0 0.0
        %4076 = vmatprep.subr.mxu0 0.0
        %4077 = vmatpush1.msra.mxu0 0.0
        %4078 = vmatprep.subr.mxu0 0.0
        %4079 = vmatpush1.msra.mxu0 0.0
        %4080 = vmatprep.subr.mxu0 0.0
        %4081 = vmatpush1.msra.mxu0 0.0
        %4082 = vmatprep.subr.mxu0 0.0
        %4083 = vmatpush1.msra.mxu0 0.0
        %4084 = vmatprep.subr.mxu0 0.0
        %4085 = vmatpush1.msra.mxu0 0.0
        %4086 = vmatprep.subr.mxu0 0.0
        %4087 = vmatpush1.msra.mxu0 0.0
        %4088 = vmatprep.subr.mxu0 0.0
        %4089 = vmatpush1.msra.mxu0 0.0
        %4090 = vmatprep.subr.mxu0 0.0
        %4091 = vmatpush1.msra.mxu0 0.0
        %4092 = vmatprep.subr.mxu0 0.0
        %4093 = vmatpush1.msra.mxu0 0.0
        %4094 = vmatprep.subr.mxu0 0.0
        %4095 = vmatpush1.msra.mxu0 0.0
        %4096 = vmatprep.subr.mxu0 0.0
        %4097 = vmatpush1.msra.mxu0 0.0
        %4098 = vmatprep.subr.mxu0 0.0
        %4099 = vmatpush1.msra.mxu0 0.0
        %4100 = vmatprep.subr.mxu0 0.0
        %4101 = vmatpush1.msra.mxu0 0.0
        %4102 = vmatprep.subr.mxu0 0.0
        %4103 = vmatpush1.msra.mxu0 0.0
        %4104 = vmatprep.subr.mxu0 0.0
        %4105 = vmatpush1.msra.mxu0 0.0
        %4106 = vmatprep.subr.mxu0 0.0
        %4107 = vmatpush1.msra.mxu0 0.0
        %4108 = vmatprep.subr.mxu0 0.0
        %4109 = vmatpush1.msra.mxu0 0.0
        %4110 = vmatprep.subr.mxu0 0.0
        %4111 = vmatpush1.msra.mxu0 0.0
        %4112 = vmatprep.subr.mxu0 0.0
        %4113 = vmatpush1.msra.mxu0 0.0
        %4114 = vmatprep.subr.mxu0 0.0
        %4115 = vmatpush1.msra.mxu0 0.0
        %4116 = vmatprep.subr.mxu0 0.0
        %4117 = vmatpush1.msra.mxu0 0.0
        %4118 = vmatprep.subr.mxu0 0.0
        %4119 = vmatpush1.msra.mxu0 0.0
        %4120 = vmatprep.subr.mxu0 0.0
        %4121 = vmatpush1.msra.mxu0 0.0
        %4122 = vmatprep.subr.mxu0 0.0
        %4123 = vmatpush1.msra.mxu0 0.0
        %4124 = vmatprep.subr.mxu0 0.0
        %4125 = vmatpush1.msra.mxu0 0.0
        %4126 = vmatprep.subr.mxu0 0.0
        %4127 = vmatpush1.msra.mxu0 0.0
        %4128 = vmatprep.subr.mxu0 0.0
        %4129 = vmatpush1.msra.mxu0 0.0
        %4130 = vmatprep.subr.mxu0 0.0
        %4131 = vmatpush1.msra.mxu0 0.0
        %4132 = vmatprep.subr.mxu0 0.0
        %4133 = vmatpush1.msra.mxu0 0.0
        %4134 = vmatprep.subr.mxu0 0.0
        %4135 = vmatpush1.msra.mxu0 0.0
        %4136 = vmatprep.mubr.f32.mxu0 0.0
        %4137 = vmatmul.mubr.f32.gmra.mrb[0].mxu0 %v4067
        %v4138 = vpop.f32.mrb[0].mxu0
        %v4139 = vadd.f32 0.0, %v4138
        %v4140 = vpop.f32.mrb[0].mxu0
        %4141 = vdwg.mxu0
        %v4143 = vsel %vm1876, %v4063, 0
        %v4146 = vsel %vm1880, %v3571, 0
        %4148 = vmatprep.subr.mxu0 0.0
        %4149 = vmatpush1.msra.mxu0 %v4146
        %4150 = vmatprep.subr.mxu0 0.0
        %4151 = vmatpush1.msra.mxu0 0.0
        %4152 = vmatprep.subr.mxu0 0.0
        %4153 = vmatpush1.msra.mxu0 0.0
        %4154 = vmatprep.subr.mxu0 0.0
        %4155 = vmatpush1.msra.mxu0 0.0
        %4156 = vmatprep.subr.mxu0 0.0
        %4157 = vmatpush1.msra.mxu0 0.0
        %4158 = vmatprep.subr.mxu0 0.0
        %4159 = vmatpush1.msra.mxu0 0.0
        %4160 = vmatprep.subr.mxu0 0.0
        %4161 = vmatpush1.msra.mxu0 0.0
        %4162 = vmatprep.subr.mxu0 0.0
        %4163 = vmatpush1.msra.mxu0 0.0
        %4164 = vmatprep.subr.mxu0 0.0
        %4165 = vmatpush1.msra.mxu0 0.0
        %4166 = vmatprep.subr.mxu0 0.0
        %4167 = vmatpush1.msra.mxu0 0.0
        %4168 = vmatprep.subr.mxu0 0.0
        %4169 = vmatpush1.msra.mxu0 0.0
        %4170 = vmatprep.subr.mxu0 0.0
        %4171 = vmatpush1.msra.mxu0 0.0
        %4172 = vmatprep.subr.mxu0 0.0
        %4173 = vmatpush1.msra.mxu0 0.0
        %4174 = vmatprep.subr.mxu0 0.0
        %4175 = vmatpush1.msra.mxu0 0.0
        %4176 = vmatprep.subr.mxu0 0.0
        %4177 = vmatpush1.msra.mxu0 0.0
        %4178 = vmatprep.subr.mxu0 0.0
        %4179 = vmatpush1.msra.mxu0 0.0
        %4180 = vmatprep.subr.mxu0 0.0
        %4181 = vmatpush1.msra.mxu0 0.0
        %4182 = vmatprep.subr.mxu0 0.0
        %4183 = vmatpush1.msra.mxu0 0.0
        %4184 = vmatprep.subr.mxu0 0.0
        %4185 = vmatpush1.msra.mxu0 0.0
        %4186 = vmatprep.subr.mxu0 0.0
        %4187 = vmatpush1.msra.mxu0 0.0
        %4188 = vmatprep.subr.mxu0 0.0
        %4189 = vmatpush1.msra.mxu0 0.0
        %4190 = vmatprep.subr.mxu0 0.0
        %4191 = vmatpush1.msra.mxu0 0.0
        %4192 = vmatprep.subr.mxu0 0.0
        %4193 = vmatpush1.msra.mxu0 0.0
        %4194 = vmatprep.subr.mxu0 0.0
        %4195 = vmatpush1.msra.mxu0 0.0
        %4196 = vmatprep.subr.mxu0 0.0
        %4197 = vmatpush1.msra.mxu0 0.0
        %4198 = vmatprep.subr.mxu0 0.0
        %4199 = vmatpush1.msra.mxu0 0.0
        %4200 = vmatprep.subr.mxu0 0.0
        %4201 = vmatpush1.msra.mxu0 0.0
        %4202 = vmatprep.subr.mxu0 0.0
        %4203 = vmatpush1.msra.mxu0 0.0
        %4204 = vmatprep.subr.mxu0 0.0
        %4205 = vmatpush1.msra.mxu0 0.0
        %4206 = vmatprep.subr.mxu0 0.0
        %4207 = vmatpush1.msra.mxu0 0.0
        %4208 = vmatprep.subr.mxu0 0.0
        %4209 = vmatpush1.msra.mxu0 0.0
        %4210 = vmatprep.subr.mxu0 0.0
        %4211 = vmatpush1.msra.mxu0 0.0
        %4212 = vmatprep.mubr.f32.mxu0 0.0
        %4213 = vmatmul.mubr.f32.gmra.mrb[0].mxu0 %v4143
        %v4214 = vpop.f32.mrb[0].mxu0
        %v4215 = vadd.f32 0.0, %v4214
        %v4216 = vpop.f32.mrb[0].mxu0
        %4217 = vdwg.mxu0
        %v4219 = vsel %vm1876, %v4064, 0
        %v4222 = vsel %vm1880, %v3641, 0
        %4224 = vmatprep.subr.mxu0 0.0
        %4225 = vmatpush1.msra.mxu0 %v4222
        %4226 = vmatprep.subr.mxu0 0.0
        %4227 = vmatpush1.msra.mxu0 0.0
        %4228 = vmatprep.subr.mxu0 0.0
        %4229 = vmatpush1.msra.mxu0 0.0
        %4230 = vmatprep.subr.mxu0 0.0
        %4231 = vmatpush1.msra.mxu0 0.0
        %4232 = vmatprep.subr.mxu0 0.0
        %4233 = vmatpush1.msra.mxu0 0.0
        %4234 = vmatprep.subr.mxu0 0.0
        %4235 = vmatpush1.msra.mxu0 0.0
        %4236 = vmatprep.subr.mxu0 0.0
        %4237 = vmatpush1.msra.mxu0 0.0
        %4238 = vmatprep.subr.mxu0 0.0
        %4239 = vmatpush1.msra.mxu0 0.0
        %4240 = vmatprep.subr.mxu0 0.0
        %4241 = vmatpush1.msra.mxu0 0.0
        %4242 = vmatprep.subr.mxu0 0.0
        %4243 = vmatpush1.msra.mxu0 0.0
        %4244 = vmatprep.subr.mxu0 0.0
        %4245 = vmatpush1.msra.mxu0 0.0
        %4246 = vmatprep.subr.mxu0 0.0
        %4247 = vmatpush1.msra.mxu0 0.0
        %4248 = vmatprep.subr.mxu0 0.0
        %4249 = vmatpush1.msra.mxu0 0.0
        %4250 = vmatprep.subr.mxu0 0.0
        %4251 = vmatpush1.msra.mxu0 0.0
        %4252 = vmatprep.subr.mxu0 0.0
        %4253 = vmatpush1.msra.mxu0 0.0
        %4254 = vmatprep.subr.mxu0 0.0
        %4255 = vmatpush1.msra.mxu0 0.0
        %4256 = vmatprep.subr.mxu0 0.0
        %4257 = vmatpush1.msra.mxu0 0.0
        %4258 = vmatprep.subr.mxu0 0.0
        %4259 = vmatpush1.msra.mxu0 0.0
        %4260 = vmatprep.subr.mxu0 0.0
        %4261 = vmatpush1.msra.mxu0 0.0
        %4262 = vmatprep.subr.mxu0 0.0
        %4263 = vmatpush1.msra.mxu0 0.0
        %4264 = vmatprep.subr.mxu0 0.0
        %4265 = vmatpush1.msra.mxu0 0.0
        %4266 = vmatprep.subr.mxu0 0.0
        %4267 = vmatpush1.msra.mxu0 0.0
        %4268 = vmatprep.subr.mxu0 0.0
        %4269 = vmatpush1.msra.mxu0 0.0
        %4270 = vmatprep.subr.mxu0 0.0
        %4271 = vmatpush1.msra.mxu0 0.0
        %4272 = vmatprep.subr.mxu0 0.0
        %4273 = vmatpush1.msra.mxu0 0.0
        %4274 = vmatprep.subr.mxu0 0.0
        %4275 = vmatpush1.msra.mxu0 0.0
        %4276 = vmatprep.subr.mxu0 0.0
        %4277 = vmatpush1.msra.mxu0 0.0
        %4278 = vmatprep.subr.mxu0 0.0
        %4279 = vmatpush1.msra.mxu0 0.0
        %4280 = vmatprep.subr.mxu0 0.0
        %4281 = vmatpush1.msra.mxu0 0.0
        %4282 = vmatprep.subr.mxu0 0.0
        %4283 = vmatpush1.msra.mxu0 0.0
        %4284 = vmatprep.subr.mxu0 0.0
        %4285 = vmatpush1.msra.mxu0 0.0
        %4286 = vmatprep.subr.mxu0 0.0
        %4287 = vmatpush1.msra.mxu0 0.0
        %4288 = vmatprep.mubr.f32.mxu0 0.0
        %4289 = vmatmul.mubr.f32.gmra.mrb[0].mxu0 %v4219
        %v4290 = vpop.f32.mrb[0].mxu0
        %v4291 = vadd.f32 0.0, %v4290
        %v4292 = vpop.f32.mrb[0].mxu0
        %4293 = vdwg.mxu0
        %v4295 = vsel %vm1876, %v4065, 0
        %v4298 = vsel %vm1880, %v3711, 0
        %4300 = vmatprep.subr.mxu0 0.0
        %4301 = vmatpush1.msra.mxu0 %v4298
        %4302 = vmatprep.subr.mxu0 0.0
        %4303 = vmatpush1.msra.mxu0 0.0
        %4304 = vmatprep.subr.mxu0 0.0
        %4305 = vmatpush1.msra.mxu0 0.0
        %4306 = vmatprep.subr.mxu0 0.0
        %4307 = vmatpush1.msra.mxu0 0.0
        %4308 = vmatprep.subr.mxu0 0.0
        %4309 = vmatpush1.msra.mxu0 0.0
        %4310 = vmatprep.subr.mxu0 0.0
        %4311 = vmatpush1.msra.mxu0 0.0
        %4312 = vmatprep.subr.mxu0 0.0
        %4313 = vmatpush1.msra.mxu0 0.0
        %4314 = vmatprep.subr.mxu0 0.0
        %4315 = vmatpush1.msra.mxu0 0.0
        %4316 = vmatprep.subr.mxu0 0.0
        %4317 = vmatpush1.msra.mxu0 0.0
        %4318 = vmatprep.subr.mxu0 0.0
        %4319 = vmatpush1.msra.mxu0 0.0
        %4320 = vmatprep.subr.mxu0 0.0
        %4321 = vmatpush1.msra.mxu0 0.0
        %4322 = vmatprep.subr.mxu0 0.0
        %4323 = vmatpush1.msra.mxu0 0.0
        %4324 = vmatprep.subr.mxu0 0.0
        %4325 = vmatpush1.msra.mxu0 0.0
        %4326 = vmatprep.subr.mxu0 0.0
        %4327 = vmatpush1.msra.mxu0 0.0
        %4328 = vmatprep.subr.mxu0 0.0
        %4329 = vmatpush1.msra.mxu0 0.0
        %4330 = vmatprep.subr.mxu0 0.0
        %4331 = vmatpush1.msra.mxu0 0.0
        %4332 = vmatprep.subr.mxu0 0.0
        %4333 = vmatpush1.msra.mxu0 0.0
        %4334 = vmatprep.subr.mxu0 0.0
        %4335 = vmatpush1.msra.mxu0 0.0
        %4336 = vmatprep.subr.mxu0 0.0
        %4337 = vmatpush1.msra.mxu0 0.0
        %4338 = vmatprep.subr.mxu0 0.0
        %4339 = vmatpush1.msra.mxu0 0.0
        %4340 = vmatprep.subr.mxu0 0.0
        %4341 = vmatpush1.msra.mxu0 0.0
        %4342 = vmatprep.subr.mxu0 0.0
        %4343 = vmatpush1.msra.mxu0 0.0
        %4344 = vmatprep.subr.mxu0 0.0
        %4345 = vmatpush1.msra.mxu0 0.0
        %4346 = vmatprep.subr.mxu0 0.0
        %4347 = vmatpush1.msra.mxu0 0.0
        %4348 = vmatprep.subr.mxu0 0.0
        %4349 = vmatpush1.msra.mxu0 0.0
        %4350 = vmatprep.subr.mxu0 0.0
        %4351 = vmatpush1.msra.mxu0 0.0
        %4352 = vmatprep.subr.mxu0 0.0
        %4353 = vmatpush1.msra.mxu0 0.0
        %4354 = vmatprep.subr.mxu0 0.0
        %4355 = vmatpush1.msra.mxu0 0.0
        %4356 = vmatprep.subr.mxu0 0.0
        %4357 = vmatpush1.msra.mxu0 0.0
        %4358 = vmatprep.subr.mxu0 0.0
        %4359 = vmatpush1.msra.mxu0 0.0
        %4360 = vmatprep.subr.mxu0 0.0
        %4361 = vmatpush1.msra.mxu0 0.0
        %4362 = vmatprep.subr.mxu0 0.0
        %4363 = vmatpush1.msra.mxu0 0.0
        %4364 = vmatprep.mubr.f32.mxu0 0.0
        %4365 = vmatmul.mubr.f32.gmra.mrb[0].mxu0 %v4295
        %v4366 = vpop.f32.mrb[0].mxu0
        %v4367 = vadd.f32 0.0, %v4366
        %v4368 = vpop.f32.mrb[0].mxu0
        %4369 = vdwg.mxu0
        %s4370 = scalar_lea.vmem %s5, 32
        %v4371 = vld [vmem:[%s4370] sm:$0xff]
        %v4372 = vld [vmem:[%s4370 + $0x8] sm:$0xff]
        %v4373 = vld [vmem:[%s4370 + $0x10] sm:$0xff]
        %v4374 = vld [vmem:[%s4370 + $0x18] sm:$0xff]
        %v4376 = vsel %vm1522, %v4139, 0
        %4378 = vmatprep.subr.mxu0 0.0
        %4379 = vmatpush1.msra.mxu0 %v4371
        %4380 = vmatprep.subr.mxu0 0.0
        %4381 = vmatpush1.msra.mxu0 0.0
        %4382 = vmatprep.subr.mxu0 0.0
        %4383 = vmatpush1.msra.mxu0 0.0
        %4384 = vmatprep.subr.mxu0 0.0
        %4385 = vmatpush1.msra.mxu0 0.0
        %4386 = vmatprep.subr.mxu0 0.0
        %4387 = vmatpush1.msra.mxu0 0.0
        %4388 = vmatprep.subr.mxu0 0.0
        %4389 = vmatpush1.msra.mxu0 0.0
        %4390 = vmatprep.subr.mxu0 0.0
        %4391 = vmatpush1.msra.mxu0 0.0
        %4392 = vmatprep.subr.mxu0 0.0
        %4393 = vmatpush1.msra.mxu0 0.0
        %4394 = vmatprep.subr.mxu0 0.0
        %4395 = vmatpush1.msra.mxu0 0.0
        %4396 = vmatprep.subr.mxu0 0.0
        %4397 = vmatpush1.msra.mxu0 0.0
        %4398 = vmatprep.subr.mxu0 0.0
        %4399 = vmatpush1.msra.mxu0 0.0
        %4400 = vmatprep.subr.mxu0 0.0
        %4401 = vmatpush1.msra.mxu0 0.0
        %4402 = vmatprep.subr.mxu0 0.0
        %4403 = vmatpush1.msra.mxu0 0.0
        %4404 = vmatprep.subr.mxu0 0.0
        %4405 = vmatpush1.msra.mxu0 0.0
        %4406 = vmatprep.subr.mxu0 0.0
        %4407 = vmatpush1.msra.mxu0 0.0
        %4408 = vmatprep.subr.mxu0 0.0
        %4409 = vmatpush1.msra.mxu0 0.0
        %4410 = vmatprep.subr.mxu0 0.0
        %4411 = vmatpush1.msra.mxu0 0.0
        %4412 = vmatprep.subr.mxu0 0.0
        %4413 = vmatpush1.msra.mxu0 0.0
        %4414 = vmatprep.subr.mxu0 0.0
        %4415 = vmatpush1.msra.mxu0 0.0
        %4416 = vmatprep.subr.mxu0 0.0
        %4417 = vmatpush1.msra.mxu0 0.0
        %4418 = vmatprep.subr.mxu0 0.0
        %4419 = vmatpush1.msra.mxu0 0.0
        %4420 = vmatprep.subr.mxu0 0.0
        %4421 = vmatpush1.msra.mxu0 0.0
        %4422 = vmatprep.subr.mxu0 0.0
        %4423 = vmatpush1.msra.mxu0 0.0
        %4424 = vmatprep.subr.mxu0 0.0
        %4425 = vmatpush1.msra.mxu0 0.0
        %4426 = vmatprep.subr.mxu0 0.0
        %4427 = vmatpush1.msra.mxu0 0.0
        %4428 = vmatprep.subr.mxu0 0.0
        %4429 = vmatpush1.msra.mxu0 0.0
        %4430 = vmatprep.subr.mxu0 0.0
        %4431 = vmatpush1.msra.mxu0 0.0
        %4432 = vmatprep.subr.mxu0 0.0
        %4433 = vmatpush1.msra.mxu0 0.0
        %4434 = vmatprep.subr.mxu0 0.0
        %4435 = vmatpush1.msra.mxu0 0.0
        %4436 = vmatprep.subr.mxu0 0.0
        %4437 = vmatpush1.msra.mxu0 0.0
        %4438 = vmatprep.subr.mxu0 0.0
        %4439 = vmatpush1.msra.mxu0 0.0
        %4440 = vmatprep.subr.mxu0 0.0
        %4441 = vmatpush1.msra.mxu0 0.0
        %4442 = vmatprep.mubr.f32.mxu0 0.0
        %4443 = vmatmul.mubr.f32.gmra.mrb[0].mxu0 %v4376
        %v4444 = vpop.f32.mrb[0].mxu0
        %v4445 = vadd.f32 0.0, %v4444
        %v4446 = vpop.f32.mrb[0].mxu0
        %4447 = vdwg.mxu0
        %v4449 = vsel %vm1522, %v4215, 0
        %4451 = vmatprep.subr.mxu0 0.0
        %4452 = vmatpush1.msra.mxu0 %v4372
        %4453 = vmatprep.subr.mxu0 0.0
        %4454 = vmatpush1.msra.mxu0 0.0
        %4455 = vmatprep.subr.mxu0 0.0
        %4456 = vmatpush1.msra.mxu0 0.0
        %4457 = vmatprep.subr.mxu0 0.0
        %4458 = vmatpush1.msra.mxu0 0.0
        %4459 = vmatprep.subr.mxu0 0.0
        %4460 = vmatpush1.msra.mxu0 0.0
        %4461 = vmatprep.subr.mxu0 0.0
        %4462 = vmatpush1.msra.mxu0 0.0
        %4463 = vmatprep.subr.mxu0 0.0
        %4464 = vmatpush1.msra.mxu0 0.0
        %4465 = vmatprep.subr.mxu0 0.0
        %4466 = vmatpush1.msra.mxu0 0.0
        %4467 = vmatprep.subr.mxu0 0.0
        %4468 = vmatpush1.msra.mxu0 0.0
        %4469 = vmatprep.subr.mxu0 0.0
        %4470 = vmatpush1.msra.mxu0 0.0
        %4471 = vmatprep.subr.mxu0 0.0
        %4472 = vmatpush1.msra.mxu0 0.0
        %4473 = vmatprep.subr.mxu0 0.0
        %4474 = vmatpush1.msra.mxu0 0.0
        %4475 = vmatprep.subr.mxu0 0.0
        %4476 = vmatpush1.msra.mxu0 0.0
        %4477 = vmatprep.subr.mxu0 0.0
        %4478 = vmatpush1.msra.mxu0 0.0
        %4479 = vmatprep.subr.mxu0 0.0
        %4480 = vmatpush1.msra.mxu0 0.0
        %4481 = vmatprep.subr.mxu0 0.0
        %4482 = vmatpush1.msra.mxu0 0.0
        %4483 = vmatprep.subr.mxu0 0.0
        %4484 = vmatpush1.msra.mxu0 0.0
        %4485 = vmatprep.subr.mxu0 0.0
        %4486 = vmatpush1.msra.mxu0 0.0
        %4487 = vmatprep.subr.mxu0 0.0
        %4488 = vmatpush1.msra.mxu0 0.0
        %4489 = vmatprep.subr.mxu0 0.0
        %4490 = vmatpush1.msra.mxu0 0.0
        %4491 = vmatprep.subr.mxu0 0.0
        %4492 = vmatpush1.msra.mxu0 0.0
        %4493 = vmatprep.subr.mxu0 0.0
        %4494 = vmatpush1.msra.mxu0 0.0
        %4495 = vmatprep.subr.mxu0 0.0
        %4496 = vmatpush1.msra.mxu0 0.0
        %4497 = vmatprep.subr.mxu0 0.0
        %4498 = vmatpush1.msra.mxu0 0.0
        %4499 = vmatprep.subr.mxu0 0.0
        %4500 = vmatpush1.msra.mxu0 0.0
        %4501 = vmatprep.subr.mxu0 0.0
        %4502 = vmatpush1.msra.mxu0 0.0
        %4503 = vmatprep.subr.mxu0 0.0
        %4504 = vmatpush1.msra.mxu0 0.0
        %4505 = vmatprep.subr.mxu0 0.0
        %4506 = vmatpush1.msra.mxu0 0.0
        %4507 = vmatprep.subr.mxu0 0.0
        %4508 = vmatpush1.msra.mxu0 0.0
        %4509 = vmatprep.subr.mxu0 0.0
        %4510 = vmatpush1.msra.mxu0 0.0
        %4511 = vmatprep.subr.mxu0 0.0
        %4512 = vmatpush1.msra.mxu0 0.0
        %4513 = vmatprep.subr.mxu0 0.0
        %4514 = vmatpush1.msra.mxu0 0.0
        %4515 = vmatprep.mubr.f32.mxu0 0.0
        %4516 = vmatmul.mubr.f32.gmra.mrb[0].mxu0 %v4449
        %v4517 = vpop.f32.mrb[0].mxu0
        %v4518 = vadd.f32 0.0, %v4517
        %v4519 = vpop.f32.mrb[0].mxu0
        %4520 = vdwg.mxu0
        %v4522 = vsel %vm1522, %v4291, 0
        %4524 = vmatprep.subr.mxu0 0.0
        %4525 = vmatpush1.msra.mxu0 %v4373
        %4526 = vmatprep.subr.mxu0 0.0
        %4527 = vmatpush1.msra.mxu0 0.0
        %4528 = vmatprep.subr.mxu0 0.0
        %4529 = vmatpush1.msra.mxu0 0.0
        %4530 = vmatprep.subr.mxu0 0.0
        %4531 = vmatpush1.msra.mxu0 0.0
        %4532 = vmatprep.subr.mxu0 0.0
        %4533 = vmatpush1.msra.mxu0 0.0
        %4534 = vmatprep.subr.mxu0 0.0
        %4535 = vmatpush1.msra.mxu0 0.0
        %4536 = vmatprep.subr.mxu0 0.0
        %4537 = vmatpush1.msra.mxu0 0.0
        %4538 = vmatprep.subr.mxu0 0.0
        %4539 = vmatpush1.msra.mxu0 0.0
        %4540 = vmatprep.subr.mxu0 0.0
        %4541 = vmatpush1.msra.mxu0 0.0
        %4542 = vmatprep.subr.mxu0 0.0
        %4543 = vmatpush1.msra.mxu0 0.0
        %4544 = vmatprep.subr.mxu0 0.0
        %4545 = vmatpush1.msra.mxu0 0.0
        %4546 = vmatprep.subr.mxu0 0.0
        %4547 = vmatpush1.msra.mxu0 0.0
        %4548 = vmatprep.subr.mxu0 0.0
        %4549 = vmatpush1.msra.mxu0 0.0
        %4550 = vmatprep.subr.mxu0 0.0
        %4551 = vmatpush1.msra.mxu0 0.0
        %4552 = vmatprep.subr.mxu0 0.0
        %4553 = vmatpush1.msra.mxu0 0.0
        %4554 = vmatprep.subr.mxu0 0.0
        %4555 = vmatpush1.msra.mxu0 0.0
        %4556 = vmatprep.subr.mxu0 0.0
        %4557 = vmatpush1.msra.mxu0 0.0
        %4558 = vmatprep.subr.mxu0 0.0
        %4559 = vmatpush1.msra.mxu0 0.0
        %4560 = vmatprep.subr.mxu0 0.0
        %4561 = vmatpush1.msra.mxu0 0.0
        %4562 = vmatprep.subr.mxu0 0.0
        %4563 = vmatpush1.msra.mxu0 0.0
        %4564 = vmatprep.subr.mxu0 0.0
        %4565 = vmatpush1.msra.mxu0 0.0
        %4566 = vmatprep.subr.mxu0 0.0
        %4567 = vmatpush1.msra.mxu0 0.0
        %4568 = vmatprep.subr.mxu0 0.0
        %4569 = vmatpush1.msra.mxu0 0.0
        %4570 = vmatprep.subr.mxu0 0.0
        %4571 = vmatpush1.msra.mxu0 0.0
        %4572 = vmatprep.subr.mxu0 0.0
        %4573 = vmatpush1.msra.mxu0 0.0
        %4574 = vmatprep.subr.mxu0 0.0
        %4575 = vmatpush1.msra.mxu0 0.0
        %4576 = vmatprep.subr.mxu0 0.0
        %4577 = vmatpush1.msra.mxu0 0.0
        %4578 = vmatprep.subr.mxu0 0.0
        %4579 = vmatpush1.msra.mxu0 0.0
        %4580 = vmatprep.subr.mxu0 0.0
        %4581 = vmatpush1.msra.mxu0 0.0
        %4582 = vmatprep.subr.mxu0 0.0
        %4583 = vmatpush1.msra.mxu0 0.0
        %4584 = vmatprep.subr.mxu0 0.0
        %4585 = vmatpush1.msra.mxu0 0.0
        %4586 = vmatprep.subr.mxu0 0.0
        %4587 = vmatpush1.msra.mxu0 0.0
        %4588 = vmatprep.mubr.f32.mxu0 0.0
        %4589 = vmatmul.mubr.f32.gmra.mrb[0].mxu0 %v4522
        %v4590 = vpop.f32.mrb[0].mxu0
        %v4591 = vadd.f32 0.0, %v4590
        %v4592 = vpop.f32.mrb[0].mxu0
        %4593 = vdwg.mxu0
        %v4595 = vsel %vm1522, %v4367, 0
        %4597 = vmatprep.subr.mxu0 0.0
        %4598 = vmatpush1.msra.mxu0 %v4374
        %4599 = vmatprep.subr.mxu0 0.0
        %4600 = vmatpush1.msra.mxu0 0.0
        %4601 = vmatprep.subr.mxu0 0.0
        %4602 = vmatpush1.msra.mxu0 0.0
        %4603 = vmatprep.subr.mxu0 0.0
        %4604 = vmatpush1.msra.mxu0 0.0
        %4605 = vmatprep.subr.mxu0 0.0
        %4606 = vmatpush1.msra.mxu0 0.0
        %4607 = vmatprep.subr.mxu0 0.0
        %4608 = vmatpush1.msra.mxu0 0.0
        %4609 = vmatprep.subr.mxu0 0.0
        %4610 = vmatpush1.msra.mxu0 0.0
        %4611 = vmatprep.subr.mxu0 0.0
        %4612 = vmatpush1.msra.mxu0 0.0
        %4613 = vmatprep.subr.mxu0 0.0
        %4614 = vmatpush1.msra.mxu0 0.0
        %4615 = vmatprep.subr.mxu0 0.0
        %4616 = vmatpush1.msra.mxu0 0.0
        %4617 = vmatprep.subr.mxu0 0.0
        %4618 = vmatpush1.msra.mxu0 0.0
        %4619 = vmatprep.subr.mxu0 0.0
        %4620 = vmatpush1.msra.mxu0 0.0
        %4621 = vmatprep.subr.mxu0 0.0
        %4622 = vmatpush1.msra.mxu0 0.0
        %4623 = vmatprep.subr.mxu0 0.0
        %4624 = vmatpush1.msra.mxu0 0.0
        %4625 = vmatprep.subr.mxu0 0.0
        %4626 = vmatpush1.msra.mxu0 0.0
        %4627 = vmatprep.subr.mxu0 0.0
        %4628 = vmatpush1.msra.mxu0 0.0
        %4629 = vmatprep.subr.mxu0 0.0
        %4630 = vmatpush1.msra.mxu0 0.0
        %4631 = vmatprep.subr.mxu0 0.0
        %4632 = vmatpush1.msra.mxu0 0.0
        %4633 = vmatprep.subr.mxu0 0.0
        %4634 = vmatpush1.msra.mxu0 0.0
        %4635 = vmatprep.subr.mxu0 0.0
        %4636 = vmatpush1.msra.mxu0 0.0
        %4637 = vmatprep.subr.mxu0 0.0
        %4638 = vmatpush1.msra.mxu0 0.0
        %4639 = vmatprep.subr.mxu0 0.0
        %4640 = vmatpush1.msra.mxu0 0.0
        %4641 = vmatprep.subr.mxu0 0.0
        %4642 = vmatpush1.msra.mxu0 0.0
        %4643 = vmatprep.subr.mxu0 0.0
        %4644 = vmatpush1.msra.mxu0 0.0
        %4645 = vmatprep.subr.mxu0 0.0
        %4646 = vmatpush1.msra.mxu0 0.0
        %4647 = vmatprep.subr.mxu0 0.0
        %4648 = vmatpush1.msra.mxu0 0.0
        %4649 = vmatprep.subr.mxu0 0.0
        %4650 = vmatpush1.msra.mxu0 0.0
        %4651 = vmatprep.subr.mxu0 0.0
        %4652 = vmatpush1.msra.mxu0 0.0
        %4653 = vmatprep.subr.mxu0 0.0
        %4654 = vmatpush1.msra.mxu0 0.0
        %4655 = vmatprep.subr.mxu0 0.0
        %4656 = vmatpush1.msra.mxu0 0.0
        %4657 = vmatprep.subr.mxu0 0.0
        %4658 = vmatpush1.msra.mxu0 0.0
        %4659 = vmatprep.subr.mxu0 0.0
        %4660 = vmatpush1.msra.mxu0 0.0
        %4661 = vmatprep.mubr.f32.mxu0 0.0
        %4662 = vmatmul.mubr.f32.gmra.mrb[0].mxu0 %v4595
        %v4663 = vpop.f32.mrb[0].mxu0
        %v4664 = vadd.f32 0.0, %v4663
        %v4665 = vpop.f32.mrb[0].mxu0
        %4666 = vdwg.mxu0
        %v4667 = vadd.f32 %v4445, %v4518
        %v4668 = vadd.f32 %v4667, %v4591
        %v4669 = vadd.f32 %v4668, %v4664
        %v4670 = vadd.f32 %v2707, %v4669
        %v4671 = vlaneseq
        %v4672 = vshrl.u32 %v4671, 7
        %v4673 = vsub.s32 2, %v4672
        %v4674 = vrot.slane %v2709, %v4673
        %v4675 = vadd.f32 %v4670, %v4674
        %v4676 = vsel %vm517, %v4675, 0.0
        %4677 = vadd.xlane.f32.xlu0 %v4676
        %v4678 = vpop.xlane.xlu0 %4677
        %v4679 = vmul.f32 %v4678, %v521
        %v4680 = vsub.f32 %v4675, %v4679
        %v4681 = vmul.f32 %v4680, %v4680
        %v4682 = vsel %vm517, %v4681, 0.0
        %4683 = vadd.xlane.f32.xlu0 %v4682
        %v4684 = vpop.xlane.xlu0 %4683
        %v4685 = vmul.f32 %v4684, %v521
        %v4686 = vadd.f32 %v4685, 1e-05
        %v4687 = vrsqrt.pop %v4686
        %v4688 = vmul.f32 %v4680, %v4687
        %v4689 = vlaneseq
        %v4690 = vshrl.u32 %v4689, 7
        %v4691 = vsub.s32 3, %v4690
        %v4692 = vrot.slane %v2709, %v4691
        %v4693 = vmul.f32 %v4688, %v4692
        %v4694 = vlaneseq
        %v4695 = vshrl.u32 %v4694, 7
        %v4696 = vsub.s32 4, %v4695
        %v4697 = vrot.slane %v2709, %v4696
        %v4698 = vadd.f32 %v4693, %v4697
        %s4699 = scalar_lea.vmem %s7, 32
        %v4700 = vld [vmem:[%s4699] sm:$0xff]
        %v4701 = vld [vmem:[%s4699 + $0x8] sm:$0xff]
        %v4702 = vld [vmem:[%s4699 + $0x10] sm:$0xff]
        %v4703 = vld [vmem:[%s4699 + $0x18] sm:$0xff]
        %s4704 = scalar_lea.vmem %s8, 1
        %v4705 = vld [vmem:[%s4704] sm:$0x1]
        %v4707 = vlaneseq
        %v4708 = vshrl.u32 %v4707, 7
        %v4709 = vsub.s32 0, %v4708
        %v4710 = vrot.slane %v4705, %v4709
        %v4713 = vsel %vm586, %v4698, 0
        %4715 = vmatprep.subr.mxu0 0.0
        %4716 = vmatpush1.msra.mxu0 %v4700
        %4717 = vmatprep.subr.mxu0 0.0
        %4718 = vmatpush1.msra.mxu0 %v4701
        %4719 = vmatprep.subr.mxu0 0.0
        %4720 = vmatpush1.msra.mxu0 %v4702
        %4721 = vmatprep.subr.mxu0 0.0
        %4722 = vmatpush1.msra.mxu0 %v4703
        %4723 = vmatprep.subr.mxu0 0.0
        %4724 = vmatpush1.msra.mxu0 0.0
        %4725 = vmatprep.subr.mxu0 0.0
        %4726 = vmatpush1.msra.mxu0 0.0
        %4727 = vmatprep.subr.mxu0 0.0
        %4728 = vmatpush1.msra.mxu0 0.0
        %4729 = vmatprep.subr.mxu0 0.0
        %4730 = vmatpush1.msra.mxu0 0.0
        %4731 = vmatprep.subr.mxu0 0.0
        %4732 = vmatpush1.msra.mxu0 0.0
        %4733 = vmatprep.subr.mxu0 0.0
        %4734 = vmatpush1.msra.mxu0 0.0
        %4735 = vmatprep.subr.mxu0 0.0
        %4736 = vmatpush1.msra.mxu0 0.0
        %4737 = vmatprep.subr.mxu0 0.0
        %4738 = vmatpush1.msra.mxu0 0.0
        %4739 = vmatprep.subr.mxu0 0.0
        %4740 = vmatpush1.msra.mxu0 0.0
        %4741 = vmatprep.subr.mxu0 0.0
        %4742 = vmatpush1.msra.mxu0 0.0
        %4743 = vmatprep.subr.mxu0 0.0
        %4744 = vmatpush1.msra.mxu0 0.0
        %4745 = vmatprep.subr.mxu0 0.0
        %4746 = vmatpush1.msra.mxu0 0.0
        %4747 = vmatprep.subr.mxu0 0.0
        %4748 = vmatpush1.msra.mxu0 0.0
        %4749 = vmatprep.subr.mxu0 0.0
        %4750 = vmatpush1.msra.mxu0 0.0
        %4751 = vmatprep.subr.mxu0 0.0
        %4752 = vmatpush1.msra.mxu0 0.0
        %4753 = vmatprep.subr.mxu0 0.0
        %4754 = vmatpush1.msra.mxu0 0.0
        %4755 = vmatprep.subr.mxu0 0.0
        %4756 = vmatpush1.msra.mxu0 0.0
        %4757 = vmatprep.subr.mxu0 0.0
        %4758 = vmatpush1.msra.mxu0 0.0
        %4759 = vmatprep.subr.mxu0 0.0
        %4760 = vmatpush1.msra.mxu0 0.0
        %4761 = vmatprep.subr.mxu0 0.0
        %4762 = vmatpush1.msra.mxu0 0.0
        %4763 = vmatprep.subr.mxu0 0.0
        %4764 = vmatpush1.msra.mxu0 0.0
        %4765 = vmatprep.subr.mxu0 0.0
        %4766 = vmatpush1.msra.mxu0 0.0
        %4767 = vmatprep.subr.mxu0 0.0
        %4768 = vmatpush1.msra.mxu0 0.0
        %4769 = vmatprep.subr.mxu0 0.0
        %4770 = vmatpush1.msra.mxu0 0.0
        %4771 = vmatprep.subr.mxu0 0.0
        %4772 = vmatpush1.msra.mxu0 0.0
        %4773 = vmatprep.subr.mxu0 0.0
        %4774 = vmatpush1.msra.mxu0 0.0
        %4775 = vmatprep.subr.mxu0 0.0
        %4776 = vmatpush1.msra.mxu0 0.0
        %4777 = vmatprep.subr.mxu0 0.0
        %4778 = vmatpush1.msra.mxu0 0.0
        %4779 = vmatprep.mubr.f32.mxu0 0.0
        %4780 = vmatmul.mubr.f32.gmra.mrb[0].mxu0 %v4713
        %v4781 = vpop.f32.mrb[0].mxu0
        %v4782 = vadd.f32 %v4710, %v4781
        %v4783 = vpop.f32.mrb[0].mxu0
        %4784 = vdwg.mxu0
        %v4785 = vmul.f32 %v4782, 0.5
        %v4786 = vmul.f32 %v4782, 0.70710677
        %vm4787 = vcmp.ge.f32.partialorder %v4786, 0.0
        %v4788 = vsel %vm4787, 1.0, -1.0
        %v4789 = vand.u32 2147483647, %v4786
        %v4790 = vmul.f32 %v4789, 0.3275911
        %v4791 = vadd.f32 %v4790, 1.0
        %v4792 = vrcp.pop %v4791
        %v4793 = vmul.f32 1.0, %v4792
        %v4794 = vmul.f32 %v4793, 1.0614054
        %v4795 = vadd.f32 %v4794, -1.4531521
        %v4796 = vmul.f32 %v4795, %v4793
        %v4797 = vadd.f32 %v4796, 1.4214138
        %v4798 = vmul.f32 %v4797, %v4793
        %v4799 = vadd.f32 %v4798, -0.28449672
        %v4800 = vmul.f32 %v4799, %v4793
        %v4801 = vadd.f32 %v4800, 0.2548296
        %v4802 = vmul.f32 %v4801, %v4793
        %v4803 = vsub.f32 0.0, %v4789
        %v4804 = vmul.f32 %v4803, %v4789
        %v4805 = vmul.f32 %v4804, 1.442695
        %v4806 = vpow.pop %v4805
        %v4807 = vmul.f32 %v4802, %v4806
        %v4808 = vsub.f32 1.0, %v4807
        %v4809 = vmul.f32 %v4788, %v4808
        %v4810 = vadd.f32 %v4809, 1.0
        %v4811 = vmul.f32 %v4785, %v4810
        %s4812 = scalar_lea.vmem %s9, 64
        %v4813 = vld [vmem:[%s4812] sm:$0xff]
        %v4814 = vld [vmem:[%s4812 + $0x8] sm:$0xff]
        %v4815 = vld [vmem:[%s4812 + $0x10] sm:$0xff]
        %v4816 = vld [vmem:[%s4812 + $0x18] sm:$0xff]
        %v4817 = vld [vmem:[%s4812 + $0x20] sm:$0xff]
        %v4818 = vld [vmem:[%s4812 + $0x28] sm:$0xff]
        %v4819 = vld [vmem:[%s4812 + $0x30] sm:$0xff]
        %v4820 = vld [vmem:[%s4812 + $0x38] sm:$0xff]
        %v4821 = vlaneseq
        %v4822 = vshrl.u32 %v4821, 7
        %v4823 = vsub.s32 5, %v4822
        %v4824 = vrot.slane %v2709, %v4823
        %v4826 = vsel %vm2633, %v4811, 0
        %4828 = vmatprep.subr.mxu0 0.0
        %4829 = vmatpush1.msra.mxu0 %v4813
        %4830 = vmatprep.subr.mxu0 0.0
        %4831 = vmatpush1.msra.mxu0 %v4814
        %4832 = vmatprep.subr.mxu0 0.0
        %4833 = vmatpush1.msra.mxu0 %v4815
        %4834 = vmatprep.subr.mxu0 0.0
        %4835 = vmatpush1.msra.mxu0 %v4816
        %4836 = vmatprep.subr.mxu0 0.0
        %4837 = vmatpush1.msra.mxu0 %v4817
        %4838 = vmatprep.subr.mxu0 0.0
        %4839 = vmatpush1.msra.mxu0 %v4818
        %4840 = vmatprep.subr.mxu0 0.0
        %4841 = vmatpush1.msra.mxu0 %v4819
        %4842 = vmatprep.subr.mxu0 0.0
        %4843 = vmatpush1.msra.mxu0 %v4820
        %4844 = vmatprep.subr.mxu0 0.0
        %4845 = vmatpush1.msra.mxu0 0.0
        %4846 = vmatprep.subr.mxu0 0.0
        %4847 = vmatpush1.msra.mxu0 0.0
        %4848 = vmatprep.subr.mxu0 0.0
        %4849 = vmatpush1.msra.mxu0 0.0
        %4850 = vmatprep.subr.mxu0 0.0
        %4851 = vmatpush1.msra.mxu0 0.0
        %4852 = vmatprep.subr.mxu0 0.0
        %4853 = vmatpush1.msra.mxu0 0.0
        %4854 = vmatprep.subr.mxu0 0.0
        %4855 = vmatpush1.msra.mxu0 0.0
        %4856 = vmatprep.subr.mxu0 0.0
        %4857 = vmatpush1.msra.mxu0 0.0
        %4858 = vmatprep.subr.mxu0 0.0
        %4859 = vmatpush1.msra.mxu0 0.0
        %4860 = vmatprep.subr.mxu0 0.0
        %4861 = vmatpush1.msra.mxu0 0.0
        %4862 = vmatprep.subr.mxu0 0.0
        %4863 = vmatpush1.msra.mxu0 0.0
        %4864 = vmatprep.subr.mxu0 0.0
        %4865 = vmatpush1.msra.mxu0 0.0
        %4866 = vmatprep.subr.mxu0 0.0
        %4867 = vmatpush1.msra.mxu0 0.0
        %4868 = vmatprep.subr.mxu0 0.0
        %4869 = vmatpush1.msra.mxu0 0.0
        %4870 = vmatprep.subr.mxu0 0.0
        %4871 = vmatpush1.msra.mxu0 0.0
        %4872 = vmatprep.subr.mxu0 0.0
        %4873 = vmatpush1.msra.mxu0 0.0
        %4874 = vmatprep.subr.mxu0 0.0
        %4875 = vmatpush1.msra.mxu0 0.0
        %4876 = vmatprep.subr.mxu0 0.0
        %4877 = vmatpush1.msra.mxu0 0.0
        %4878 = vmatprep.subr.mxu0 0.0
        %4879 = vmatpush1.msra.mxu0 0.0
        %4880 = vmatprep.subr.mxu0 0.0
        %4881 = vmatpush1.msra.mxu0 0.0
        %4882 = vmatprep.subr.mxu0 0.0
        %4883 = vmatpush1.msra.mxu0 0.0
        %4884 = vmatprep.subr.mxu0 0.0
        %4885 = vmatpush1.msra.mxu0 0.0
        %4886 = vmatprep.subr.mxu0 0.0
        %4887 = vmatpush1.msra.mxu0 0.0
        %4888 = vmatprep.subr.mxu0 0.0
        %4889 = vmatpush1.msra.mxu0 0.0
        %4890 = vmatprep.subr.mxu0 0.0
        %4891 = vmatpush1.msra.mxu0 0.0
        %4892 = vmatprep.mubr.f32.mxu0 0.0
        %4893 = vmatmul.mubr.f32.gmra.mrb[0].mxu0 %v4826
        %v4894 = vpop.f32.mrb[0].mxu0
        %v4895 = vadd.f32 %v4824, %v4894
        %v4896 = vpop.f32.mrb[0].mxu0
        %4897 = vdwg.mxu0
        %v4898 = vadd.f32 %v4675, %v4895
        %v4899 = vld [vmem:[%s10] sm:$0x1]
        %v4900 = vld [vmem:[%s10 + $0x1] sm:$0x1]
        %vm4901 = vcmask 253952
        %v4902 = vsel %vm4901, %v4898, 0.0
        %4903 = vadd.xlane.f32.xlu0 %v4902
        %v4904 = vpop.xlane.xlu0 %4903
        %v4905 = vmul.f32 %v4904, %v521
        %v4906 = vsub.f32 %v4898, %v4905
        %v4907 = vmul.f32 %v4906, %v4906
        %v4908 = vsel %vm4901, %v4907, 0.0
        %4909 = vadd.xlane.f32.xlu0 %v4908
        %v4910 = vpop.xlane.xlu0 %4909
        %v4911 = vmul.f32 %v4910, %v521
        %v4912 = vadd.f32 %v4911, 1e-05
        %v4913 = vrsqrt.pop %v4912
        %v4914 = vmul.f32 %v4906, %v4913
        %v4915 = vmul.f32 %v4914, %v4899
        %v4916 = vadd.f32 %v4915, %v4900
        %v4917 = vld [vmem:[%s11] sm:$0xff]
        %v4918 = vld [vmem:[%s11 + $0x8] sm:$0xff]
        %v4919 = vld [vmem:[%s11 + $0x10] sm:$0xff]
        %v4920 = vld [vmem:[%s11 + $0x18] sm:$0xff]
        %v4921 = vld [vmem:[%s11 + $0x20] sm:$0x1]
        %v4923 = vsel %vm586, %v4916, 0
        %4925 = vmatprep.subr.mxu0 0.0
        %4926 = vmatpush1.msra.mxu0 %v4917
        %4927 = vmatprep.subr.mxu0 0.0
        %4928 = vmatpush1.msra.mxu0 %v4918
        %4929 = vmatprep.subr.mxu0 0.0
        %4930 = vmatpush1.msra.mxu0 %v4919
        %4931 = vmatprep.subr.mxu0 0.0
        %4932 = vmatpush1.msra.mxu0 %v4920
        %4933 = vmatprep.subr.mxu0 0.0
        %4934 = vmatpush1.msra.mxu0 0.0
        %4935 = vmatprep.subr.mxu0 0.0
        %4936 = vmatpush1.msra.mxu0 0.0
        %4937 = vmatprep.subr.mxu0 0.0
        %4938 = vmatpush1.msra.mxu0 0.0
        %4939 = vmatprep.subr.mxu0 0.0
        %4940 = vmatpush1.msra.mxu0 0.0
        %4941 = vmatprep.subr.mxu0 0.0
        %4942 = vmatpush1.msra.mxu0 0.0
        %4943 = vmatprep.subr.mxu0 0.0
        %4944 = vmatpush1.msra.mxu0 0.0
        %4945 = vmatprep.subr.mxu0 0.0
        %4946 = vmatpush1.msra.mxu0 0.0
        %4947 = vmatprep.subr.mxu0 0.0
        %4948 = vmatpush1.msra.mxu0 0.0
        %4949 = vmatprep.subr.mxu0 0.0
        %4950 = vmatpush1.msra.mxu0 0.0
        %4951 = vmatprep.subr.mxu0 0.0
        %4952 = vmatpush1.msra.mxu0 0.0
        %4953 = vmatprep.subr.mxu0 0.0
        %4954 = vmatpush1.msra.mxu0 0.0
        %4955 = vmatprep.subr.mxu0 0.0
        %4956 = vmatpush1.msra.mxu0 0.0
        %4957 = vmatprep.subr.mxu0 0.0
        %4958 = vmatpush1.msra.mxu0 0.0
        %4959 = vmatprep.subr.mxu0 0.0
        %4960 = vmatpush1.msra.mxu0 0.0
        %4961 = vmatprep.subr.mxu0 0.0
        %4962 = vmatpush1.msra.mxu0 0.0
        %4963 = vmatprep.subr.mxu0 0.0
        %4964 = vmatpush1.msra.mxu0 0.0
        %4965 = vmatprep.subr.mxu0 0.0
        %4966 = vmatpush1.msra.mxu0 0.0
        %4967 = vmatprep.subr.mxu0 0.0
        %4968 = vmatpush1.msra.mxu0 0.0
        %4969 = vmatprep.subr.mxu0 0.0
        %4970 = vmatpush1.msra.mxu0 0.0
        %4971 = vmatprep.subr.mxu0 0.0
        %4972 = vmatpush1.msra.mxu0 0.0
        %4973 = vmatprep.subr.mxu0 0.0
        %4974 = vmatpush1.msra.mxu0 0.0
        %4975 = vmatprep.subr.mxu0 0.0
        %4976 = vmatpush1.msra.mxu0 0.0
        %4977 = vmatprep.subr.mxu0 0.0
        %4978 = vmatpush1.msra.mxu0 0.0
        %4979 = vmatprep.subr.mxu0 0.0
        %4980 = vmatpush1.msra.mxu0 0.0
        %4981 = vmatprep.subr.mxu0 0.0
        %4982 = vmatpush1.msra.mxu0 0.0
        %4983 = vmatprep.subr.mxu0 0.0
        %4984 = vmatpush1.msra.mxu0 0.0
        %4985 = vmatprep.subr.mxu0 0.0
        %4986 = vmatpush1.msra.mxu0 0.0
        %4987 = vmatprep.subr.mxu0 0.0
        %4988 = vmatpush1.msra.mxu0 0.0
        %4989 = vmatprep.mubr.f32.mxu0 0.0
        %4990 = vmatmul.mubr.f32.gmra.mrb[0].mxu0 %v4923
        %v4991 = vpop.f32.mrb[0].mxu0
        %v4992 = vadd.f32 %v4921, %v4991
        %v4993 = vpop.f32.mrb[0].mxu0
        %4994 = vdwg.mxu0
        %vm4995 = vcmask 73728
        %4996 = vst.msk [vmem:[%s405] sm:$0x1] %vm4995, %v4992
        %s4997 = sand.u32 %s291, 1
        %s4998 = scalar_lea.sflag [#allocation3], %s4997
        %s4999 = sand.u32 %s291, 1
        %s5000 = scalar_lea.vmem [#allocation2], %s4999
        // Predicated region
        $region69: #{vit_forward.1} parent=67 // pred_check
          %p5001 = pneg %p301
        $region70: #{vit_forward.1} parent=67 // pred_check_branch
          %5003 = sbr.rel (%p5001) target = $region72
        $region71: #{vit_forward.1} parent=67 // pred_region
          %s5005 = ssub.s32 16, 16
          %5006 = vsyncadd %s4998, %s5005
          %s5007 = smul.addr %s26, 16
          %s5008 = scalar_lea.hbm %s12, %s5007
          %s5010 = sshll.u32 %s5000, 4
          %s5011 = int_to_ptr.vmem [resolvable:$true] %s5010
          %5013 = dma.vmem_to_hbm [thread:$0]  %s5011, 16, %s5008, %s4998
        $region72: #{vit_forward.1} parent=67 // pred_fallthru
          _
      $region68: #{vit_forward.1} parent=5 // pred_fallthru
        _
      %p5014 = scmp.le.s32.totalorder 2, %s21
      // Predicated region
      $region73: #{vit_forward.1} parent=5 // pred_check
        %p5015 = pneg %p5014
      $region74: #{vit_forward.1} parent=5 // pred_check_branch
        %5017 = sbr.rel (%p5015) target = $region76
      $region75: #{vit_forward.1} parent=5 // pred_region
        %s5018 = ssub.s32 %s21, 2
        // Predicated region
        $region77: #{vit_forward.1} parent=75 // pred_check
          %p5019 = pneg %p307
        $region78: #{vit_forward.1} parent=75 // pred_check_branch
          %5021 = sbr.rel (%p5019) target = $region80
        $region79: #{vit_forward.1} parent=75 // pred_region
          %s5022 = sand.u32 %s292, 1
          %s5023 = scalar_lea.sflag [#allocation3], %s5022
          %s5024 = sand.u32 %s292, 1
          %s5025 = scalar_lea.vmem [#allocation2], %s5024
          %5026 = dma.done %s5023, 16
        $region80: #{vit_forward.1} parent=75 // pred_fallthru
          _
      $region76: #{vit_forward.1} parent=5 // pred_fallthru
        _
    $region6: #{vit_forward.1} parent=1 // loop_footer
      %s25 = sadd.s32 1, %s21
    $region7: #{vit_forward.1} parent=1 // loop_footer_branch
      %20 = sbr.rel target = $region3
    $region8: #{vit_forward.1} parent=1 // loop_exit
      _
    %5027 = vsyncpa [#allocation3], 1
    %s5028 = scalar_lea.sflag [#allocation3], 1
    %5029 = vsyncpa %s5028, 1

</llo_original>
